<compile_context>
chip_gen: v7x
topology: tpu7x:2x2x1
jax: 0.10.0
libtpu: 0.0.40
codegen_flags: <defaults>
</compile_context>

<pallas_src>
import functools

import jax
import jax.numpy as jnp
from jax import lax
from jax.experimental import pallas as pl
from jax.experimental.pallas import tpu as pltpu


def _default_vmem_limit():
    try:
        cap = int(pltpu.get_tpu_info().vmem_capacity_bytes)
    except Exception:
        cap = 64 * 1024 * 1024
    # v5e/v6e (128 MiB VMEM): big scoped window; v7x (64 MiB/TC): stay <= ~48 MiB.
    return 96 * 1024 * 1024 if cap >= 128 * 1024 * 1024 else 48 * 1024 * 1024


VMEM_LIMIT = _default_vmem_limit()
COMPUTE_DTYPE = jnp.bfloat16

# matmul tile targets (adapt down when a dim is smaller / not divisible)
TM_T, TN_T, TK_T, TI_T = 512, 512, 512, 512


# ----------------------------------------------------------------------------- config
class Cfg:
    # vision (SigLIP)
    v_image_size = 16
    v_patch_size = 8
    v_channels = 3
    v_hidden = 32
    v_heads = 4
    v_layers = 1
    v_inter = 64
    v_ln_eps = 1e-6
    # text (Gemma)
    vocab_size = 128
    hidden = 32
    layers = 2
    heads = 4
    kv_heads = 2
    head_dim = 8
    inter = 64
    rms_eps = 1e-6
    rope_theta = 10000.0
    # paligemma
    projection_dim = 32
    image_token_index = 127
    pad_token_id = -1

    @property
    def num_image_tokens(self):
        return (self.v_image_size // self.v_patch_size) ** 2


CFG = Cfg()


# ----------------------------------------------------------------------------- tiling helper
def _choose_tile(dim, target, align):
    """Largest tile <= target that divides `dim`; prefer 2*align granularity (keeps the
    2x256x256 MXUs on v6e/v7x full), then align granularity; else the full dim (full
    dims are always legal block extents).
    TODO(synk): replace the full-dim fallback with pl.cdiv grids + padded/masked tail
    blocks for huge non-divisible dims (e.g. 257k vocab)."""
    if dim <= target:
        return dim
    for a in (2 * align, align):
        t = (target // a) * a
        while t >= a:
            if dim % t == 0:
                return t
            t -= a
    return dim


# ----------------------------------------------------------------------------- kernels
def _make_mm_kernel(has_bias, has_res):
    """Tiled matmul with f32 accumulator; optional bias and fused residual add."""

    def kernel(*refs):
        idx = 0
        x_ref = refs[idx]; idx += 1
        w_ref = refs[idx]; idx += 1
        b_ref = None
        r_ref = None
        if has_bias:
            b_ref = refs[idx]; idx += 1
        if has_res:
            r_ref = refs[idx]; idx += 1
        o_ref = refs[idx]; idx += 1
        acc_ref = refs[idx]

        k = pl.program_id(2)

        @pl.when(k == 0)
        def _():
            acc_ref[...] = jnp.zeros_like(acc_ref)

        acc_ref[...] += jnp.dot(x_ref[...], w_ref[...],
                                preferred_element_type=jnp.float32)

        @pl.when(k == pl.num_programs(2) - 1)
        def _():
            out = acc_ref[...]
            if has_bias:
                out = out + b_ref[...].astype(jnp.float32)
            if has_res:
                out = out + r_ref[...].astype(jnp.float32)
            o_ref[...] = out.astype(o_ref.dtype)

    return kernel


def _make_norm_mm_kernel(norm, has_bias, eps):
    """Fused (RMSNorm | LayerNorm) + matmul.  The normalized row tile is computed once
    (at the first N-tile) into a VMEM scratch and reused for every output column tile."""

    def kernel(*refs):
        idx = 0
        x_ref = refs[idx]; idx += 1
        g_ref = refs[idx]; idx += 1
        beta_ref = None
        if norm == "ln":
            beta_ref = refs[idx]; idx += 1
        w_ref = refs[idx]; idx += 1
        b_ref = None
        if has_bias:
            b_ref = refs[idx]; idx += 1
        o_ref = refs[idx]; idx += 1
        xn_ref = refs[idx]

        @pl.when(pl.program_id(1) == 0)
        def _():
            x = x_ref[...].astype(jnp.float32)
            if norm == "rms":
                var = jnp.mean(x * x, axis=-1, keepdims=True)
                xn = x * lax.rsqrt(var + eps) * (1.0 + g_ref[...].astype(jnp.float32))
            else:
                mu = jnp.mean(x, axis=-1, keepdims=True)
                var = jnp.mean((x - mu) ** 2, axis=-1, keepdims=True)
                xn = (x - mu) * lax.rsqrt(var + eps)
                xn = xn * g_ref[...].astype(jnp.float32) + beta_ref[...].astype(jnp.float32)
            xn_ref[...] = xn.astype(xn_ref.dtype)

        acc = jnp.dot(xn_ref[...], w_ref[...], preferred_element_type=jnp.float32)
        if has_bias:
            acc = acc + b_ref[...].astype(jnp.float32)
        o_ref[...] = acc.astype(o_ref.dtype)

    return kernel


def _flash_attn_kernel(q_ref, k_ref, v_ref, o_ref, m_ref, l_ref, acc_ref, *, scale):
    """Flash-style attention tile: online softmax over the KV grid axis.
    No mask: the PaliGemma prefill mask is all zeros (full attention)."""
    kv = pl.program_id(2)

    @pl.when(kv == 0)
    def _():
        m_ref[...] = jnp.full_like(m_ref, -jnp.inf)
        l_ref[...] = jnp.zeros_like(l_ref)
        acc_ref[...] = jnp.zeros_like(acc_ref)

    q = q_ref[0]                                 # (tq, D)  bf16
    k = k_ref[0]                                 # (tkv, D) bf16
    v = v_ref[0]                                 # (tkv, D) bf16
    # QK^T without an explicit transpose: contract the last dims of both operands.
    s = lax.dot_general(q, k, (((1,), (1,)), ((), ())),
                        preferred_element_type=jnp.float32) * scale   # (tq, tkv) f32

    m_prev = m_ref[...]
    m_new = jnp.maximum(m_prev, jnp.max(s, axis=-1, keepdims=True))
    alpha = jnp.exp(m_prev - m_new)
    p = jnp.exp(s - m_new)
    l_ref[...] = alpha * l_ref[...] + jnp.sum(p, axis=-1, keepdims=True)
    acc_ref[...] = alpha * acc_ref[...] + lax.dot_general(
        p.astype(v.dtype), v, (((1,), (0,)), ((), ())),
        preferred_element_type=jnp.float32)
    m_ref[...] = m_new

    @pl.when(kv == pl.num_programs(2) - 1)
    def _():
        o_ref[0] = (acc_ref[...] * pl.reciprocal(l_ref[...], approx=True)
                    ).astype(o_ref.dtype)


def _rms_gated_ffn_kernel(x_ref, g_ref, wg_ref, bg_ref, wu_ref, bu_ref,
                          wd_ref, bd_ref, o_ref, acc_ref, xn_ref, *, eps):
    """Fused RMSNorm + gated MLP + residual, tiled over the intermediate dim.
    The normalized row tile is computed once and cached in VMEM scratch."""
    j = pl.program_id(1)

    @pl.when(j == 0)
    def _():
        acc_ref[...] = jnp.zeros_like(acc_ref)
        x = x_ref[...].astype(jnp.float32)
        var = jnp.mean(x * x, axis=-1, keepdims=True)
        xn_ref[...] = (x * lax.rsqrt(var + eps)
                       * (1.0 + g_ref[...].astype(jnp.float32))).astype(xn_ref.dtype)

    xn = xn_ref[...]
    g = jnp.dot(xn, wg_ref[...], preferred_element_type=jnp.float32) \
        + bg_ref[...].astype(jnp.float32)
    u = jnp.dot(xn, wu_ref[...], preferred_element_type=jnp.float32) \
        + bu_ref[...].astype(jnp.float32)
    h = jax.nn.gelu(g, approximate=True) * u
    acc_ref[...] += jnp.dot(h.astype(xn.dtype), wd_ref[...],
                            preferred_element_type=jnp.float32)

    @pl.when(j == pl.num_programs(1) - 1)
    def _():
        o_ref[...] = (acc_ref[...] + bd_ref[...].astype(jnp.float32)
                      + x_ref[...].astype(jnp.float32)).astype(o_ref.dtype)


def _ln_ffn_kernel(x_ref, g_ref, b_ref, w1_ref, b1_ref, w2_ref, b2_ref,
                   o_ref, acc_ref, xn_ref, *, eps):
    """Fused LayerNorm + MLP (fc2(gelu(fc1(x)))) + residual, tiled over intermediate dim.
    The normalized row tile is computed once and cached in VMEM scratch."""
    j = pl.program_id(1)

    @pl.when(j == 0)
    def _():
        acc_ref[...] = jnp.zeros_like(acc_ref)
        x = x_ref[...].astype(jnp.float32)
        mu = jnp.mean(x, axis=-1, keepdims=True)
        var = jnp.mean((x - mu) ** 2, axis=-1, keepdims=True)
        xn_ref[...] = ((x - mu) * lax.rsqrt(var + eps)
                       * g_ref[...].astype(jnp.float32)
                       + b_ref[...].astype(jnp.float32)).astype(xn_ref.dtype)

    xn = xn_ref[...]
    h = jnp.dot(xn, w1_ref[...], preferred_element_type=jnp.float32) \
        + b1_ref[...].astype(jnp.float32)
    h = jax.nn.gelu(h, approximate=True)
    acc_ref[...] += jnp.dot(h.astype(xn.dtype), w2_ref[...],
                            preferred_element_type=jnp.float32)

    @pl.when(j == pl.num_programs(1) - 1)
    def _():
        o_ref[...] = (acc_ref[...] + b2_ref[...].astype(jnp.float32)
                      + x_ref[...].astype(jnp.float32)).astype(o_ref.dtype)


# ----------------------------------------------------------------------------- wrappers
def pallas_matmul(x, w, bias=None, residual=None, *, tm=TM_T, tn=TN_T, tk=TK_T):
    """x:[M,K] @ w:[K,N] (+ bias[N]) (+ residual[M,N]) — tiled, bf16 in / f32 acc."""
    M, K = x.shape
    N = w.shape[1]
    tm = _choose_tile(M, tm, 16)
    tn = _choose_tile(N, tn, 128)
    tk = _choose_tile(K, tk, 128)
    grid = (M // tm, N // tn, K // tk)

    in_specs = [pl.BlockSpec((tm, tk), lambda i, j, k: (i, k)),
                pl.BlockSpec((tk, tn), lambda i, j, k: (k, j))]
    args = [x, w]
    if bias is not None:
        in_specs.append(pl.BlockSpec((1, tn), lambda i, j, k: (0, j)))
        args.append(bias.reshape(1, N))
    if residual is not None:
        in_specs.append(pl.BlockSpec((tm, tn), lambda i, j, k: (i, j)))
        args.append(residual)

    kernel = _make_mm_kernel(bias is not None, residual is not None)
    return pl.pallas_call(
        kernel,
        out_shape=jax.ShapeDtypeStruct((M, N), x.dtype),
        grid=grid,
        in_specs=in_specs,
        out_specs=pl.BlockSpec((tm, tn), lambda i, j, k: (i, j)),
        scratch_shapes=[pltpu.VMEM((tm, tn), jnp.float32)],
        compiler_params=pltpu.CompilerParams(
            dimension_semantics=("parallel", "parallel", "arbitrary"),
            vmem_limit_bytes=VMEM_LIMIT),
    )(*args)


def pallas_norm_matmul(x, norm_gamma, w, *, eps, norm="rms", norm_beta=None,
                       bias=None, tm=TM_T, tn=TN_T, out_dtype=None):
    """Fused norm (RMS or LayerNorm) + projection; norm computed once per row tile and
    cached in VMEM scratch, reused across all N tiles (lm_head, QKV, projector)."""
    M, K = x.shape
    N = w.shape[1]
    tm = _choose_tile(M, tm, 16)
    tn = _choose_tile(N, tn, 128)
    grid = (M // tm, N // tn)
    out_dtype = x.dtype if out_dtype is None else out_dtype

    in_specs = [pl.BlockSpec((tm, K), lambda i, j: (i, 0)),
                pl.BlockSpec((1, K), lambda i, j: (0, 0))]
    args = [x, norm_gamma.reshape(1, K)]
    if norm == "ln":
        in_specs.append(pl.BlockSpec((1, K), lambda i, j: (0, 0)))
        args.append(norm_beta.reshape(1, K))
    in_specs.append(pl.BlockSpec((K, tn), lambda i, j: (0, j)))
    args.append(w)
    if bias is not None:
        in_specs.append(pl.BlockSpec((1, tn), lambda i, j: (0, j)))
        args.append(bias.reshape(1, N))

    kernel = _make_norm_mm_kernel(norm, bias is not None, eps)
    return pl.pallas_call(
        kernel,
        out_shape=jax.ShapeDtypeStruct((M, N), out_dtype),
        grid=grid,
        in_specs=in_specs,
        out_specs=pl.BlockSpec((tm, tn), lambda i, j: (i, j)),
        scratch_shapes=[pltpu.VMEM((tm, K), x.dtype)],
        compiler_params=pltpu.CompilerParams(
            dimension_semantics=("parallel", "arbitrary"),
            vmem_limit_bytes=VMEM_LIMIT),
    )(*args)


def pallas_flash_attention(q, k, v, scale, *, tq=256, tkv=256):
    """Flash attention.  q: [G, Mq, D]; k, v: [G, Sk, D] where G = batch * kv_heads and
    Mq packs the `rep` query heads sharing each KV head as extra rows (softmax is
    per-row, so this is exact GQA without jnp.repeat).  Full attention, no mask."""
    G, Mq, D = q.shape
    _, Sk, _ = k.shape
    tq = _choose_tile(Mq, tq, 16)
    tkv = _choose_tile(Sk, tkv, 16)
    grid = (G, Mq // tq, Sk // tkv)
    kern = functools.partial(_flash_attn_kernel, scale=scale)
    return pl.pallas_call(
        kern,
        out_shape=jax.ShapeDtypeStruct((G, Mq, D), q.dtype),
        grid=grid,
        in_specs=[
            pl.BlockSpec((1, tq, D), lambda g, i, j: (g, i, 0)),
            pl.BlockSpec((1, tkv, D), lambda g, i, j: (g, j, 0)),
            pl.BlockSpec((1, tkv, D), lambda g, i, j: (g, j, 0)),
        ],
        out_specs=pl.BlockSpec((1, tq, D), lambda g, i, j: (g, i, 0)),
        scratch_shapes=[pltpu.VMEM((tq, 1), jnp.float32),
                        pltpu.VMEM((tq, 1), jnp.float32),
                        pltpu.VMEM((tq, D), jnp.float32)],
        compiler_params=pltpu.CompilerParams(
            dimension_semantics=("parallel", "parallel", "arbitrary"),
            vmem_limit_bytes=VMEM_LIMIT),
    )(q, k, v)


def pallas_rms_gated_ffn(x, norm_gamma, wg, bg, wu, bu, wd, bd, *, eps,
                         tm=TM_T, ti=TI_T):
    M, H = x.shape
    I = wg.shape[1]
    tm = _choose_tile(M, tm, 16)
    ti = _choose_tile(I, ti, 128)
    grid = (M // tm, I // ti)
    kernel = functools.partial(_rms_gated_ffn_kernel, eps=eps)
    return pl.pallas_call(
        kernel,
        out_shape=jax.ShapeDtypeStruct((M, H), x.dtype),
        grid=grid,
        in_specs=[
            pl.BlockSpec((tm, H), lambda i, j: (i, 0)),   # x (also the residual)
            pl.BlockSpec((1, H), lambda i, j: (0, 0)),    # rms gamma
            pl.BlockSpec((H, ti), lambda i, j: (0, j)),   # gate w
            pl.BlockSpec((1, ti), lambda i, j: (0, j)),   # gate b
            pl.BlockSpec((H, ti), lambda i, j: (0, j)),   # up w
            pl.BlockSpec((1, ti), lambda i, j: (0, j)),   # up b
            pl.BlockSpec((ti, H), lambda i, j: (j, 0)),   # down w
            pl.BlockSpec((1, H), lambda i, j: (0, 0)),    # down b
        ],
        out_specs=pl.BlockSpec((tm, H), lambda i, j: (i, 0)),
        scratch_shapes=[pltpu.VMEM((tm, H), jnp.float32),   # down-proj accumulator
                        pltpu.VMEM((tm, H), x.dtype)],      # cached normalized rows
        compiler_params=pltpu.CompilerParams(
            dimension_semantics=("parallel", "arbitrary"),
            vmem_limit_bytes=VMEM_LIMIT),
    )(x, norm_gamma.reshape(1, H), wg, bg.reshape(1, I), wu, bu.reshape(1, I),
      wd, bd.reshape(1, H))


def pallas_ln_ffn(x, gamma, beta, w1, b1, w2, b2, *, eps, tm=TM_T, ti=TI_T):
    M, H = x.shape
    I = w1.shape[1]
    tm = _choose_tile(M, tm, 16)
    ti = _choose_tile(I, ti, 128)
    grid = (M // tm, I // ti)
    kernel = functools.partial(_ln_ffn_kernel, eps=eps)
    return pl.pallas_call(
        kernel,
        out_shape=jax.ShapeDtypeStruct((M, H), x.dtype),
        grid=grid,
        in_specs=[
            pl.BlockSpec((tm, H), lambda i, j: (i, 0)),   # x (also the residual)
            pl.BlockSpec((1, H), lambda i, j: (0, 0)),    # ln gamma
            pl.BlockSpec((1, H), lambda i, j: (0, 0)),    # ln beta
            pl.BlockSpec((H, ti), lambda i, j: (0, j)),   # fc1 w
            pl.BlockSpec((1, ti), lambda i, j: (0, j)),   # fc1 b
            pl.BlockSpec((ti, H), lambda i, j: (j, 0)),   # fc2 w
            pl.BlockSpec((1, H), lambda i, j: (0, 0)),    # fc2 b
        ],
        out_specs=pl.BlockSpec((tm, H), lambda i, j: (i, 0)),
        scratch_shapes=[pltpu.VMEM((tm, H), jnp.float32),
                        pltpu.VMEM((tm, H), x.dtype)],
        compiler_params=pltpu.CompilerParams(
            dimension_semantics=("parallel", "arbitrary"),
            vmem_limit_bytes=VMEM_LIMIT),
    )(x, gamma.reshape(1, H), beta.reshape(1, H), w1, b1.reshape(1, I),
      w2, b2.reshape(1, H))


# ----------------------------------------------------------------------------- params
def init_params(key, cfg: Cfg):
    scale = 0.02
    keys = iter(jax.random.split(key, 128))

    def w(shape):
        return (scale * jax.random.normal(next(keys), shape)).astype(COMPUTE_DTYPE)

    p = {}
    # --- SigLIP vision tower ---
    patch_in = cfg.v_channels * cfg.v_patch_size * cfg.v_patch_size
    p["v_patch_w"] = w((patch_in, cfg.v_hidden))        # conv-as-matmul, (C,kh,kw) order
    p["v_patch_b"] = w((cfg.v_hidden,))
    p["v_pos_emb"] = w((cfg.num_image_tokens, cfg.v_hidden))
    p["v_layers"] = []
    for _ in range(cfg.v_layers):
        lp = {
            "ln1_g": w((cfg.v_hidden,)), "ln1_b": w((cfg.v_hidden,)),
            "qkv_w": w((cfg.v_hidden, 3 * cfg.v_hidden)),   # concatenated Q|K|V
            "qkv_b": w((3 * cfg.v_hidden,)),
            "o_w": w((cfg.v_hidden, cfg.v_hidden)), "o_b": w((cfg.v_hidden,)),
            "ln2_g": w((cfg.v_hidden,)), "ln2_b": w((cfg.v_hidden,)),
            "fc1_w": w((cfg.v_hidden, cfg.v_inter)), "fc1_b": w((cfg.v_inter,)),
            "fc2_w": w((cfg.v_inter, cfg.v_hidden)), "fc2_b": w((cfg.v_hidden,)),
        }
        p["v_layers"].append(lp)
    p["v_post_ln_g"] = w((cfg.v_hidden,))
    p["v_post_ln_b"] = w((cfg.v_hidden,))

    # --- multi-modal projector ---
    p["proj_w"] = w((cfg.v_hidden, cfg.projection_dim))
    p["proj_b"] = w((cfg.projection_dim,))

    # --- Gemma language model ---
    p["embed_tokens"] = w((cfg.vocab_size, cfg.hidden))
    p["layers"] = []
    nq = cfg.heads * cfg.head_dim
    nkv = cfg.kv_heads * cfg.head_dim
    for _ in range(cfg.layers):
        lp = {
            "in_ln": w((cfg.hidden,)),
            "qkv_w": w((cfg.hidden, nq + 2 * nkv)),          # concatenated Q|K|V, no bias
            "o_w": w((nq, cfg.hidden)),
            "post_ln": w((cfg.hidden,)),
            "gate_w": w((cfg.hidden, cfg.inter)), "gate_b": w((cfg.inter,)),
            "up_w": w((cfg.hidden, cfg.inter)), "up_b": w((cfg.inter,)),
            "down_w": w((cfg.inter, cfg.hidden)), "down_b": w((cfg.hidden,)),
        }
        p["layers"].append(lp)
    p["final_ln"] = w((cfg.hidden,))
    p["lm_head_w"] = w((cfg.hidden, cfg.vocab_size))
    return p


# ----------------------------------------------------------------------------- model glue
def rotate_half(x):
    d = x.shape[-1]
    x1, x2 = x[..., : d // 2], x[..., d // 2:]
    return jnp.concatenate([-x2, x1], axis=-1)


def rope_cos_sin(position_ids, head_dim, theta):
    inv_freq = 1.0 / (theta ** (jnp.arange(0, head_dim, 2, dtype=jnp.float32) / head_dim))
    freqs = position_ids[..., None] * inv_freq[None, None, :]           # [B, S, D/2]
    emb = jnp.concatenate([freqs, freqs], axis=-1)                      # [B, S, D]
    return jnp.cos(emb), jnp.sin(emb)


def apply_rotary(q, k, cos, sin):
    # q: [B, Hq, S, D], k: [B, Hk, S, D]; cos/sin: [B, S, D]
    # TODO(synk): fuse RoPE into the QKV-projection finalize / attention prologue using
    # pltpu.roll to avoid these extra HBM round trips over Q and K.
    cos = cos[:, None]
    sin = sin[:, None]
    return q * cos + rotate_half(q) * sin, k * cos + rotate_half(k) * sin


def siglip_vision_tower(params, pixel_values, cfg: Cfg):
    """Returns patch features [B*N, Dv] (post-LayerNorm is fused into the projector)."""
    B, C, H, W = pixel_values.shape
    P = cfg.v_patch_size
    nh, nw = H // P, W // P
    # im2col: non-overlapping patches, (C, kh, kw) flatten order (Conv2d weight order)
    patches = pixel_values.reshape(B, C, nh, P, nw, P)
    patches = jnp.transpose(patches, (0, 2, 4, 1, 3, 5)).reshape(B * nh * nw, C * P * P)
    x = pallas_matmul(patches, params["v_patch_w"], bias=params["v_patch_b"])  # [B*N, Dv]
    N = nh * nw
    x = (x.reshape(B, N, cfg.v_hidden) + params["v_pos_emb"][None]).reshape(B * N, cfg.v_hidden)

    Dv = cfg.v_hidden
    head_dim = Dv // cfg.v_heads
    scale = head_dim ** -0.5

    for lp in params["v_layers"]:
        # fused LayerNorm1 + concatenated QKV projection (+bias)
        qkv = pallas_norm_matmul(x, lp["ln1_g"], lp["qkv_w"], eps=cfg.v_ln_eps,
                                 norm="ln", norm_beta=lp["ln1_b"], bias=lp["qkv_b"])
        q, k, v = qkv[:, :Dv], qkv[:, Dv:2 * Dv], qkv[:, 2 * Dv:]

        def split_heads(t):
            return jnp.transpose(t.reshape(B, N, cfg.v_heads, head_dim),
                                 (0, 2, 1, 3)).reshape(B * cfg.v_heads, N, head_dim)

        attn = pallas_flash_attention(split_heads(q), split_heads(k), split_heads(v), scale)
        attn = jnp.transpose(attn.reshape(B, cfg.v_heads, N, head_dim),
                             (0, 2, 1, 3)).reshape(B * N, Dv)
        # fused out-proj + bias + residual add
        x = pallas_matmul(attn, lp["o_w"], bias=lp["o_b"], residual=x)
        # fused LayerNorm2 + MLP + residual add (tiled over intermediate dim)
        x = pallas_ln_ffn(x, lp["ln2_g"], lp["ln2_b"], lp["fc1_w"], lp["fc1_b"],
                          lp["fc2_w"], lp["fc2_b"], eps=cfg.v_ln_eps)
    return x


def merge_embeds_and_image_features(inputs_embeds, image_features, input_ids,
                                    attention_mask, cfg: Cfg):
    B, S, D = inputs_embeds.shape
    scaled_img = image_features * (D ** -0.5)                           # [B, Nimg, D]
    img_mask = input_ids == cfg.image_token_index                       # [B, S]
    pad_mask = input_ids == cfg.pad_token_id
    txt_mask = (~img_mask) & (~pad_mask)

    # masked_scatter semantics (row-major fill of image features per batch)
    idx = jnp.cumsum(img_mask.astype(jnp.int32), axis=-1) - 1
    idx = jnp.clip(idx, 0, image_features.shape[1] - 1)
    gathered = jnp.take_along_axis(scaled_img, idx[..., None], axis=1)  # [B, S, D]

    final = jnp.where(txt_mask[..., None], inputs_embeds, 0.0)
    final = jnp.where(img_mask[..., None], gathered, final)
    final = jnp.where(pad_mask[..., None], 0.0, final).astype(inputs_embeds.dtype)

    # prefill (kv_cache empty): the reference builds an all-zero additive mask, which is
    # exactly unmasked full attention -> no mask tensor is materialized / DMA'd at all.
    position_ids = jnp.cumsum(attention_mask, axis=-1)
    position_ids = jnp.where(attention_mask == 0, 1, position_ids).astype(jnp.float32)
    return final, position_ids


def gemma_decoder_layer(lp, hidden, position_ids, cfg: Cfg, B, S):
    # hidden: [B*S, H]
    nq = cfg.heads * cfg.head_dim
    nkv = cfg.kv_heads * cfg.head_dim
    rep = cfg.heads // cfg.kv_heads
    dtype = hidden.dtype

    # fused input RMSNorm + concatenated QKV projection (no bias)
    qkv = pallas_norm_matmul(hidden, lp["in_ln"], lp["qkv_w"], eps=cfg.rms_eps, norm="rms")
    # TODO(synk): emit head-major Q/K/V directly from the fused QKV kernel to remove
    # these slice + transpose HBM round trips.
    q = jnp.transpose(qkv[:, :nq].reshape(B, S, cfg.heads, cfg.head_dim), (0, 2, 1, 3))
    k = jnp.transpose(qkv[:, nq:nq + nkv].reshape(B, S, cfg.kv_heads, cfg.head_dim),
                      (0, 2, 1, 3))
    v = jnp.transpose(qkv[:, nq + nkv:].reshape(B, S, cfg.kv_heads, cfg.head_dim),
                      (0, 2, 1, 3))

    cos, sin = rope_cos_sin(position_ids, cfg.head_dim, cfg.rope_theta)
    q, k = apply_rotary(q, k, cos, sin)
    q = q.astype(dtype)
    k = k.astype(dtype)

    # GQA without jnp.repeat: the `rep` consecutive query heads sharing a KV head are
    # packed as extra rows of the flash-attention Q matrix (softmax is per-row).
    q_flat = q.reshape(B * cfg.kv_heads, rep * S, cfg.head_dim)
    k_flat = k.reshape(B * cfg.kv_heads, S, cfg.head_dim)
    v_flat = v.reshape(B * cfg.kv_heads, S, cfg.head_dim)
    attn = pallas_flash_attention(q_flat, k_flat, v_flat, cfg.head_dim ** -0.5)
    attn = jnp.transpose(attn.reshape(B, cfg.heads, S, cfg.head_dim),
                         (0, 2, 1, 3)).reshape(B * S, nq)

    # fused o_proj + residual add (no bias)
    hidden = pallas_matmul(attn, lp["o_w"], residual=hidden)

    # fused post-attention RMSNorm + gated MLP + residual add
    hidden = pallas_rms_gated_ffn(hidden, lp["post_ln"], lp["gate_w"], lp["gate_b"],
                                  lp["up_w"], lp["up_b"], lp["down_w"], lp["down_b"],
                                  eps=cfg.rms_eps)
    return hidden


def paligemma_forward(params, input_ids, pixel_values, attention_mask, cfg: Cfg):
    # kv_cache is None -> prefill-only forward
    B, S = input_ids.shape

    # 1. text embeddings (pad id -1 clipped to 0; pad positions zeroed in the merge)
    inputs_embeds = jnp.take(params["embed_tokens"],
                             jnp.clip(input_ids, 0, cfg.vocab_size - 1), axis=0)

    # 2. vision tower + (fused post-LN + multimodal projector)
    vision_2d = siglip_vision_tower(params, pixel_values.astype(inputs_embeds.dtype), cfg)
    Nimg = cfg.num_image_tokens
    image_features = pallas_norm_matmul(
        vision_2d, params["v_post_ln_g"], params["proj_w"], eps=cfg.v_ln_eps,
        norm="ln", norm_beta=params["v_post_ln_b"], bias=params["proj_b"],
    ).reshape(B, Nimg, cfg.projection_dim)

    # 3. merge text and image embeddings
    embeds, position_ids = merge_embeds_and_image_features(
        inputs_embeds, image_features, input_ids, attention_mask, cfg)

    # 4. Gemma model
    hidden = (embeds * (cfg.hidden ** 0.5)).reshape(B * S, cfg.hidden)
    for lp in params["layers"]:
        hidden = gemma_decoder_layer(lp, hidden, position_ids, cfg, B, S)

    # 5. fused final RMSNorm + lm_head (vocab axis tiled; normalized rows cached once)
    logits = pallas_norm_matmul(hidden, params["final_ln"], params["lm_head_w"],
                                eps=cfg.rms_eps, norm="rms", tn=1024,
                                out_dtype=jnp.float32)
    logits = logits.reshape(B, S, cfg.vocab_size)
    # TODO(synk): KVCache update path (stateful incremental decode) not represented; prefill only.
    return {"logits": logits}


# ----------------------------------------------------------------------------- main
if __name__ == "__main__":
    key = jax.random.PRNGKey(0)
    k_param, k_pix = jax.random.split(key)

    params = init_params(k_param, CFG)

    B, S = 1, 8
    n_img = CFG.num_image_tokens  # 4
    input_ids = jnp.array([[CFG.image_token_index] * n_img + [5, 17, 42, 99]],
                          dtype=jnp.int32)
    pixel_values = jax.random.normal(
        k_pix, (B, CFG.v_channels, CFG.v_image_size, CFG.v_image_size), dtype=jnp.float32)
    attention_mask = jnp.ones((B, S), dtype=jnp.int32)

    fwd = jax.jit(functools.partial(paligemma_forward, cfg=CFG))
    out = fwd(params, input_ids, pixel_values, attention_mask)
    logits = jax.block_until_ready(out["logits"])

    assert logits.shape == (B, S, CFG.vocab_size)
    assert bool(jnp.all(jnp.isfinite(logits)))
    print("KERNEL_OK")
</pallas_src>

<mosaic_0001>
module attributes {stable_mosaic.version = 11 : i64} {
  func.func @kernel(%arg0: i32, %arg1: i32, %arg2: i32, %arg3: memref<4x192xbf16, #tpu.memory_space<vmem>>, %arg4: memref<192x32xbf16, #tpu.memory_space<vmem>>, %arg5: memref<1x32xbf16, #tpu.memory_space<vmem>>, %arg6: memref<4x32xbf16, #tpu.memory_space<vmem>>, %arg7: memref<4x32xf32, #tpu.memory_space<vmem>>) attributes {dimension_semantics = [#tpu.dimension_semantics<parallel>, #tpu.dimension_semantics<parallel>, #tpu.dimension_semantics<arbitrary>], iteration_bounds = array<i64: 1, 1, 1>, scalar_prefetch = 0 : i64, scratch_operands = 1 : i64, tpu.core_type = #tpu.core_type<tc>, window_params = [{transform_indices = @transform_0, window_bounds = array<i64: 4, 192>}, {transform_indices = @transform_1, window_bounds = array<i64: 192, 32>}, {transform_indices = @transform_2, window_bounds = array<i64: 1, 32>}, {transform_indices = @transform_3, window_bounds = array<i64: 4, 32>}]} {
    %c0_i32 = arith.constant 0 : i32
    %0 = arith.cmpi eq, %arg2, %c0_i32 : i32
    %1 = arith.extui %0 : i1 to i32
    %c0_i32_0 = arith.constant 0 : i32
    %2 = arith.cmpi ne, %1, %c0_i32_0 : i32
    scf.if %2 {
      %cst_10 = arith.constant 0.000000e+00 : f32
      %12 = vector.broadcast %cst_10 : f32 to vector<4x32xf32>
      %c0_11 = arith.constant 0 : index
      %c0_12 = arith.constant 0 : index
      %13 = vector.load %arg7[%c0_11, %c0_12] : memref<4x32xf32, #tpu.memory_space<vmem>>, vector<4x32xf32>
      tpu.vector_store %arg7[%c0_11, %c0_12], %12 {strides = array<i32>} : memref<4x32xf32, #tpu.memory_space<vmem>>, vector<4x32xf32>,
    } else {
    }
    %c0 = arith.constant 0 : index
    %c0_1 = arith.constant 0 : index
    %3 = vector.load %arg7[%c0, %c0_1] : memref<4x32xf32, #tpu.memory_space<vmem>>, vector<4x32xf32>
    %c0_2 = arith.constant 0 : index
    %c0_3 = arith.constant 0 : index
    %4 = vector.load %arg3[%c0_2, %c0_3] : memref<4x192xbf16, #tpu.memory_space<vmem>>, vector<4x192xbf16>
    %c0_4 = arith.constant 0 : index
    %c0_5 = arith.constant 0 : index
    %5 = vector.load %arg4[%c0_4, %c0_5] : memref<192x32xbf16, #tpu.memory_space<vmem>>, vector<192x32xbf16>
    %cst = arith.constant dense<0.000000e+00> : vector<4x32xf32>
    %6 = tpu.matmul %4, %5, %cst {dimension_numbers = #tpu.dot_dimension_numbers<[1], [0], [0], [1], [0, 0, 1, 1], [], []>} : vector<4x192xbf16>, vector<192x32xbf16>, vector<4x32xf32> -> vector<4x32xf32>
    %7 = arith.addf %3, %6 : vector<4x32xf32>
    %c0_6 = arith.constant 0 : index
    %c0_7 = arith.constant 0 : index
    %8 = vector.load %arg7[%c0_6, %c0_7] : memref<4x32xf32, #tpu.memory_space<vmem>>, vector<4x32xf32>
    tpu.vector_store %arg7[%c0_6, %c0_7], %7 {strides = array<i32>} : memref<4x32xf32, #tpu.memory_space<vmem>>, vector<4x32xf32>,
    %c0_i32_8 = arith.constant 0 : i32
    %9 = arith.cmpi eq, %arg2, %c0_i32_8 : i32
    %10 = arith.extui %9 : i1 to i32
    %c0_i32_9 = arith.constant 0 : i32
    %11 = arith.cmpi ne, %10, %c0_i32_9 : i32
    scf.if %11 {
      %c0_10 = arith.constant 0 : index
      %c0_11 = arith.constant 0 : index
      %12 = vector.load %arg7[%c0_10, %c0_11] : memref<4x32xf32, #tpu.memory_space<vmem>>, vector<4x32xf32>
      %c0_12 = arith.constant 0 : index
      %c0_13 = arith.constant 0 : index
      %13 = vector.load %arg5[%c0_12, %c0_13] : memref<1x32xbf16, #tpu.memory_space<vmem>>, vector<1x32xbf16>
      %14 = arith.extf %13 : vector<1x32xbf16> to vector<1x32xf32>
      %15 = vector.broadcast %14 : vector<1x32xf32> to vector<4x32xf32>
      %16 = arith.addf %12, %15 : vector<4x32xf32>
      %17 = arith.truncf %16 : vector<4x32xf32> to vector<4x32xbf16>
      %c0_14 = arith.constant 0 : index
      %c0_15 = arith.constant 0 : index
      %18 = vector.load %arg6[%c0_14, %c0_15] : memref<4x32xbf16, #tpu.memory_space<vmem>>, vector<4x32xbf16>
      tpu.vector_store %arg6[%c0_14, %c0_15], %17 {strides = array<i32>} : memref<4x32xbf16, #tpu.memory_space<vmem>>, vector<4x32xbf16>,
    } else {
    }
    return
  }
  func.func @transform_0(%arg0: i32, %arg1: i32, %arg2: i32) -> (i32, i32) {
    %c0_i32 = arith.constant 0 : i32
    return %arg0, %arg2 : i32, i32
  }
  func.func @transform_1(%arg0: i32, %arg1: i32, %arg2: i32) -> (i32, i32) {
    %c0_i32 = arith.constant 0 : i32
    return %arg2, %arg1 : i32, i32
  }
  func.func @transform_2(%arg0: i32, %arg1: i32, %arg2: i32) -> (i32, i32) {
    %c0_i32 = arith.constant 0 : i32
    %c0_i32_0 = arith.constant 0 : i32
    return %c0_i32, %arg1 : i32, i32
  }
  func.func @transform_3(%arg0: i32, %arg1: i32, %arg2: i32) -> (i32, i32) {
    %c0_i32 = arith.constant 0 : i32
    return %arg0, %arg1 : i32, i32
  }
}

module attributes {stable_mosaic.version = 11 : i64} {
  func.func @kernel(%arg0: i32, %arg1: i32, %arg2: memref<4x32xbf16, #tpu.memory_space<vmem>>, %arg3: memref<1x32xbf16, #tpu.memory_space<vmem>>, %arg4: memref<1x32xbf16, #tpu.memory_space<vmem>>, %arg5: memref<32x96xbf16, #tpu.memory_space<vmem>>, %arg6: memref<1x96xbf16, #tpu.memory_space<vmem>>, %arg7: memref<4x96xbf16, #tpu.memory_space<vmem>>, %arg8: memref<4x32xbf16, #tpu.memory_space<vmem>>) attributes {dimension_semantics = [#tpu.dimension_semantics<parallel>, #tpu.dimension_semantics<arbitrary>], iteration_bounds = array<i64: 1, 1>, scalar_prefetch = 0 : i64, scratch_operands = 1 : i64, tpu.core_type = #tpu.core_type<tc>, window_params = [{transform_indices = @transform_0, window_bounds = array<i64: 4, 32>}, {pipeline_mode = #tpu.pipeline_mode<synchronous>, transform_indices = @transform_1, window_bounds = array<i64: 1, 32>}, {pipeline_mode = #tpu.pipeline_mode<synchronous>, transform_indices = @transform_2, window_bounds = array<i64: 1, 32>}, {transform_indices = @transform_3, window_bounds = array<i64: 32, 96>}, {transform_indices = @transform_4, window_bounds = array<i64: 1, 96>}, {transform_indices = @transform_5, window_bounds = array<i64: 4, 96>}]} {
    %c0_i32 = arith.constant 0 : i32
    %0 = arith.cmpi eq, %arg1, %c0_i32 : i32
    %1 = arith.extui %0 : i1 to i32
    %c0_i32_0 = arith.constant 0 : i32
    %2 = arith.cmpi ne, %1, %c0_i32_0 : i32
    scf.if %2 {
      %c0_8 = arith.constant 0 : index
      %c0_9 = arith.constant 0 : index
      %12 = vector.load %arg2[%c0_8, %c0_9] : memref<4x32xbf16, #tpu.memory_space<vmem>>, vector<4x32xbf16>
      %13 = arith.extf %12 : vector<4x32xbf16> to vector<4x32xf32>
      %cst_10 = arith.constant dense<0.000000e+00> : vector<4xf32>
      %14 = vector.multi_reduction <add>, %13, %cst_10 [1] : vector<4x32xf32> to vector<4xf32>
      %15 = vector.shape_cast %14 : vector<4xf32> to vector<4x1xf32>
      %cst_11 = arith.constant 3.200000e+01 : f32
      %16 = vector.broadcast %cst_11 : f32 to vector<4x1xf32>
      %17 = arith.divf %15, %16 : vector<4x1xf32>
      %18 = vector.broadcast %17 : vector<4x1xf32> to vector<4x32xf32>
      %19 = arith.subf %13, %18 : vector<4x32xf32>
      %20 = arith.mulf %19, %19 : vector<4x32xf32>
      %cst_12 = arith.constant dense<0.000000e+00> : vector<4xf32>
      %21 = vector.multi_reduction <add>, %20, %cst_12 [1] : vector<4x32xf32> to vector<4xf32>
      %22 = vector.shape_cast %21 : vector<4xf32> to vector<4x1xf32>
      %cst_13 = arith.constant 3.200000e+01 : f32
      %23 = vector.broadcast %cst_13 : f32 to vector<4x1xf32>
      %24 = arith.divf %22, %23 : vector<4x1xf32>
      %25 = vector.broadcast %17 : vector<4x1xf32> to vector<4x32xf32>
      %26 = arith.subf %13, %25 : vector<4x32xf32>
      %cst_14 = arith.constant 9.99999997E-7 : f32
      %27 = vector.broadcast %cst_14 : f32 to vector<4x1xf32>
      %28 = arith.addf %24, %27 : vector<4x1xf32>
      %29 = math.rsqrt %28 : vector<4x1xf32>
      %30 = vector.broadcast %29 : vector<4x1xf32> to vector<4x32xf32>
      %31 = arith.mulf %26, %30 : vector<4x32xf32>
      %c0_15 = arith.constant 0 : index
      %c0_16 = arith.constant 0 : index
      %32 = vector.load %arg3[%c0_15, %c0_16] : memref<1x32xbf16, #tpu.memory_space<vmem>>, vector<1x32xbf16>
      %33 = arith.extf %32 : vector<1x32xbf16> to vector<1x32xf32>
      %34 = vector.broadcast %33 : vector<1x32xf32> to vector<4x32xf32>
      %35 = arith.mulf %31, %34 : vector<4x32xf32>
      %c0_17 = arith.constant 0 : index
      %c0_18 = arith.constant 0 : index
      %36 = vector.load %arg4[%c0_17, %c0_18] : memref<1x32xbf16, #tpu.memory_space<vmem>>, vector<1x32xbf16>
      %37 = arith.extf %36 : vector<1x32xbf16> to vector<1x32xf32>
      %38 = vector.broadcast %37 : vector<1x32xf32> to vector<4x32xf32>
      %39 = arith.addf %35, %38 : vector<4x32xf32>
      %40 = arith.truncf %39 : vector<4x32xf32> to vector<4x32xbf16>
      %c0_19 = arith.constant 0 : index
      %c0_20 = arith.constant 0 : index
      %41 = vector.load %arg8[%c0_19, %c0_20] : memref<4x32xbf16, #tpu.memory_space<vmem>>, vector<4x32xbf16>
      tpu.vector_store %arg8[%c0_19, %c0_20], %40 {strides = array<i32>} : memref<4x32xbf16, #tpu.memory_space<vmem>>, vector<4x32xbf16>,
    } else {
    }
    %c0 = arith.constant 0 : index
    %c0_1 = arith.constant 0 : index
    %3 = vector.load %arg8[%c0, %c0_1] : memref<4x32xbf16, #tpu.memory_space<vmem>>, vector<4x32xbf16>
    %c0_2 = arith.constant 0 : index
    %c0_3 = arith.constant 0 : index
    %4 = vector.load %arg5[%c0_2, %c0_3] : memref<32x96xbf16, #tpu.memory_space<vmem>>, vector<32x96xbf16>
    %cst = arith.constant dense<0.000000e+00> : vector<4x96xf32>
    %5 = tpu.matmul %3, %4, %cst {dimension_numbers = #tpu.dot_dimension_numbers<[1], [0], [0], [1], [0, 0, 1, 1], [], []>} : vector<4x32xbf16>, vector<32x96xbf16>, vector<4x96xf32> -> vector<4x96xf32>
    %c0_4 = arith.constant 0 : index
    %c0_5 = arith.constant 0 : index
    %6 = vector.load %arg6[%c0_4, %c0_5] : memref<1x96xbf16, #tpu.memory_space<vmem>>, vector<1x96xbf16>
    %7 = arith.extf %6 : vector<1x96xbf16> to vector<1x96xf32>
    %8 = vector.broadcast %7 : vector<1x96xf32> to vector<4x96xf32>
    %9 = arith.addf %5, %8 : vector<4x96xf32>
    %10 = arith.truncf %9 : vector<4x96xf32> to vector<4x96xbf16>
    %c0_6 = arith.constant 0 : index
    %c0_7 = arith.constant 0 : index
    %11 = vector.load %arg7[%c0_6, %c0_7] : memref<4x96xbf16, #tpu.memory_space<vmem>>, vector<4x96xbf16>
    tpu.vector_store %arg7[%c0_6, %c0_7], %10 {strides = array<i32>} : memref<4x96xbf16, #tpu.memory_space<vmem>>, vector<4x96xbf16>,
    return
  }
  func.func @transform_0(%arg0: i32, %arg1: i32) -> (i32, i32) {
    %c0_i32 = arith.constant 0 : i32
    %c0_i32_0 = arith.constant 0 : i32
    return %arg0, %c0_i32 : i32, i32
  }
  func.func @transform_1(%arg0: i32, %arg1: i32) -> (i32, i32) {
    %c0_i32 = arith.constant 0 : i32
    %c0_i32_0 = arith.constant 0 : i32
    %c0_i32_1 = arith.constant 0 : i32
    return %c0_i32, %c0_i32_0 : i32, i32
  }
  func.func @transform_2(%arg0: i32, %arg1: i32) -> (i32, i32) {
    %c0_i32 = arith.constant 0 : i32
    %c0_i32_0 = arith.constant 0 : i32
    %c0_i32_1 = arith.constant 0 : i32
    return %c0_i32, %c0_i32_0 : i32, i32
  }
  func.func @transform_3(%arg0: i32, %arg1: i32) -> (i32, i32) {
    %c0_i32 = arith.constant 0 : i32
    %c0_i32_0 = arith.constant 0 : i32
    return %c0_i32, %arg1 : i32, i32
  }
  func.func @transform_4(%arg0: i32, %arg1: i32) -> (i32, i32) {
    %c0_i32 = arith.constant 0 : i32
    %c0_i32_0 = arith.constant 0 : i32
    return %c0_i32, %arg1 : i32, i32
  }
  func.func @transform_5(%arg0: i32, %arg1: i32) -> (i32, i32) {
    %c0_i32 = arith.constant 0 : i32
    return %arg0, %arg1 : i32, i32
  }
}

module attributes {stable_mosaic.version = 11 : i64} {
  func.func @_flash_attn_kernel(%arg0: i32, %arg1: i32, %arg2: i32, %arg3: memref<1x4x8xbf16, #tpu.memory_space<vmem>>, %arg4: memref<1x4x8xbf16, #tpu.memory_space<vmem>>, %arg5: memref<1x4x8xbf16, #tpu.memory_space<vmem>>, %arg6: memref<1x4x8xbf16, #tpu.memory_space<vmem>>, %arg7: memref<4x1xf32, #tpu.memory_space<vmem>>, %arg8: memref<4x1xf32, #tpu.memory_space<vmem>>, %arg9: memref<4x8xf32, #tpu.memory_space<vmem>>) attributes {dimension_semantics = [#tpu.dimension_semantics<parallel>, #tpu.dimension_semantics<parallel>, #tpu.dimension_semantics<arbitrary>], iteration_bounds = array<i64: 4, 1, 1>, scalar_prefetch = 0 : i64, scratch_operands = 3 : i64, tpu.core_type = #tpu.core_type<tc>, window_params = [{transform_indices = @transform_0, window_bounds = array<i64: 1, 4, 8>}, {transform_indices = @transform_1, window_bounds = array<i64: 1, 4, 8>}, {transform_indices = @transform_2, window_bounds = array<i64: 1, 4, 8>}, {transform_indices = @transform_3, window_bounds = array<i64: 1, 4, 8>}]} {
    %c0_i32 = arith.constant 0 : i32
    %0 = arith.cmpi eq, %arg2, %c0_i32 : i32
    %1 = arith.extui %0 : i1 to i32
    %c0_i32_0 = arith.constant 0 : i32
    %2 = arith.cmpi ne, %1, %c0_i32_0 : i32
    scf.if %2 {
      %cst_27 = arith.constant 0xFF800000 : f32
      %38 = vector.broadcast %cst_27 : f32 to vector<4x1xf32>
      %c0_28 = arith.constant 0 : index
      %c0_29 = arith.constant 0 : index
      %39 = vector.load %arg7[%c0_28, %c0_29] : memref<4x1xf32, #tpu.memory_space<vmem>>, vector<4x1xf32>
      tpu.vector_store %arg7[%c0_28, %c0_29], %38 {strides = array<i32>} : memref<4x1xf32, #tpu.memory_space<vmem>>, vector<4x1xf32>,
      %cst_30 = arith.constant 0.000000e+00 : f32
      %40 = vector.broadcast %cst_30 : f32 to vector<4x1xf32>
      %c0_31 = arith.constant 0 : index
      %c0_32 = arith.constant 0 : index
      %41 = vector.load %arg8[%c0_31, %c0_32] : memref<4x1xf32, #tpu.memory_space<vmem>>, vector<4x1xf32>
      tpu.vector_store %arg8[%c0_31, %c0_32], %40 {strides = array<i32>} : memref<4x1xf32, #tpu.memory_space<vmem>>, vector<4x1xf32>,
      %cst_33 = arith.constant 0.000000e+00 : f32
      %42 = vector.broadcast %cst_33 : f32 to vector<4x8xf32>
      %c0_34 = arith.constant 0 : index
      %c0_35 = arith.constant 0 : index
      %43 = vector.load %arg9[%c0_34, %c0_35] : memref<4x8xf32, #tpu.memory_space<vmem>>, vector<4x8xf32>
      tpu.vector_store %arg9[%c0_34, %c0_35], %42 {strides = array<i32>} : memref<4x8xf32, #tpu.memory_space<vmem>>, vector<4x8xf32>,
    } else {
    }
    %c0 = arith.constant 0 : index
    %c0_1 = arith.constant 0 : index
    %c0_2 = arith.constant 0 : index
    %3 = vector.load %arg3[%c0, %c0_1, %c0_2] : memref<1x4x8xbf16, #tpu.memory_space<vmem>>, vector<1x4x8xbf16>
    %4 = vector.shape_cast %3 : vector<1x4x8xbf16> to vector<4x8xbf16>
    %c0_3 = arith.constant 0 : index
    %c0_4 = arith.constant 0 : index
    %c0_5 = arith.constant 0 : index
    %5 = vector.load %arg4[%c0_3, %c0_4, %c0_5] : memref<1x4x8xbf16, #tpu.memory_space<vmem>>, vector<1x4x8xbf16>
    %6 = vector.shape_cast %5 : vector<1x4x8xbf16> to vector<4x8xbf16>
    %c0_6 = arith.constant 0 : index
    %c0_7 = arith.constant 0 : index
    %c0_8 = arith.constant 0 : index
    %7 = vector.load %arg5[%c0_6, %c0_7, %c0_8] : memref<1x4x8xbf16, #tpu.memory_space<vmem>>, vector<1x4x8xbf16>
    %8 = vector.shape_cast %7 : vector<1x4x8xbf16> to vector<4x8xbf16>
    %cst = arith.constant dense<0.000000e+00> : vector<4x4xf32>
    %9 = tpu.matmul %4, %6, %cst {dimension_numbers = #tpu.dot_dimension_numbers<[1], [1], [0], [0], [0, 0, 1, 0], [], []>} : vector<4x8xbf16>, vector<4x8xbf16>, vector<4x4xf32> -> vector<4x4xf32>
    %cst_9 = arith.constant 0.353553385 : f32
    %10 = vector.broadcast %cst_9 : f32 to vector<4x4xf32>
    %11 = arith.mulf %9, %10 : vector<4x4xf32>
    %c0_10 = arith.constant 0 : index
    %c0_11 = arith.constant 0 : index
    %12 = vector.load %arg7[%c0_10, %c0_11] : memref<4x1xf32, #tpu.memory_space<vmem>>, vector<4x1xf32>
    %cst_12 = arith.constant dense<0xFF800000> : vector<4xf32>
    %13 = vector.multi_reduction <maximumf>, %11, %cst_12 [1] : vector<4x4xf32> to vector<4xf32>
    %14 = vector.shape_cast %13 : vector<4xf32> to vector<4x1xf32>
    %15 = arith.maximumf %12, %14 : vector<4x1xf32>
    %16 = arith.subf %12, %15 : vector<4x1xf32>
    %17 = math.exp %16 : vector<4x1xf32>
    %18 = vector.broadcast %15 : vector<4x1xf32> to vector<4x4xf32>
    %19 = arith.subf %11, %18 : vector<4x4xf32>
    %20 = math.exp %19 : vector<4x4xf32>
    %c0_13 = arith.constant 0 : index
    %c0_14 = arith.constant 0 : index
    %21 = vector.load %arg8[%c0_13, %c0_14] : memref<4x1xf32, #tpu.memory_space<vmem>>, vector<4x1xf32>
    %22 = arith.mulf %17, %21 : vector<4x1xf32>
    %cst_15 = arith.constant dense<0.000000e+00> : vector<4xf32>
    %23 = vector.multi_reduction <add>, %20, %cst_15 [1] : vector<4x4xf32> to vector<4xf32>
    %24 = vector.shape_cast %23 : vector<4xf32> to vector<4x1xf32>
    %25 = arith.addf %22, %24 : vector<4x1xf32>
    %c0_16 = arith.constant 0 : index
    %c0_17 = arith.constant 0 : index
    %26 = vector.load %arg8[%c0_16, %c0_17] : memref<4x1xf32, #tpu.memory_space<vmem>>, vector<4x1xf32>
    tpu.vector_store %arg8[%c0_16, %c0_17], %25 {strides = array<i32>} : memref<4x1xf32, #tpu.memory_space<vmem>>, vector<4x1xf32>,
    %c0_18 = arith.constant 0 : index
    %c0_19 = arith.constant 0 : index
    %27 = vector.load %arg9[%c0_18, %c0_19] : memref<4x8xf32, #tpu.memory_space<vmem>>, vector<4x8xf32>
    %28 = vector.broadcast %17 : vector<4x1xf32> to vector<4x8xf32>
    %29 = arith.mulf %28, %27 : vector<4x8xf32>
    %30 = arith.truncf %20 : vector<4x4xf32> to vector<4x4xbf16>
    %cst_20 = arith.constant dense<0.000000e+00> : vector<4x8xf32>
    %31 = tpu.matmul %30, %8, %cst_20 {dimension_numbers = #tpu.dot_dimension_numbers<[1], [0], [0], [1], [0, 0, 1, 1], [], []>} : vector<4x4xbf16>, vector<4x8xbf16>, vector<4x8xf32> -> vector<4x8xf32>
    %32 = arith.addf %29, %31 : vector<4x8xf32>
    %c0_21 = arith.constant 0 : index
    %c0_22 = arith.constant 0 : index
    %33 = vector.load %arg9[%c0_21, %c0_22] : memref<4x8xf32, #tpu.memory_space<vmem>>, vector<4x8xf32>
    tpu.vector_store %arg9[%c0_21, %c0_22], %32 {strides = array<i32>} : memref<4x8xf32, #tpu.memory_space<vmem>>, vector<4x8xf32>,
    %c0_23 = arith.constant 0 : index
    %c0_24 = arith.constant 0 : index
    %34 = vector.load %arg7[%c0_23, %c0_24] : memref<4x1xf32, #tpu.memory_space<vmem>>, vector<4x1xf32>
    tpu.vector_store %arg7[%c0_23, %c0_24], %15 {strides = array<i32>} : memref<4x1xf32, #tpu.memory_space<vmem>>, vector<4x1xf32>,
    %c0_i32_25 = arith.constant 0 : i32
    %35 = arith.cmpi eq, %arg2, %c0_i32_25 : i32
    %36 = arith.extui %35 : i1 to i32
    %c0_i32_26 = arith.constant 0 : i32
    %37 = arith.cmpi ne, %36, %c0_i32_26 : i32
    scf.if %37 {
      %c0_27 = arith.constant 0 : index
      %c0_28 = arith.constant 0 : index
      %38 = vector.load %arg9[%c0_27, %c0_28] : memref<4x8xf32, #tpu.memory_space<vmem>>, vector<4x8xf32>
      %c0_29 = arith.constant 0 : index
      %c0_30 = arith.constant 0 : index
      %39 = vector.load %arg8[%c0_29, %c0_30] : memref<4x1xf32, #tpu.memory_space<vmem>>, vector<4x1xf32>
      %40 = tpu.reciprocal %39 {approx = true} : vector<4x1xf32> -> vector<4x1xf32>
      %41 = vector.broadcast %40 : vector<4x1xf32> to vector<4x8xf32>
      %42 = arith.mulf %38, %41 : vector<4x8xf32>
      %43 = arith.truncf %42 : vector<4x8xf32> to vector<4x8xbf16>
      %c0_31 = arith.constant 0 : index
      %c0_32 = arith.constant 0 : index
      %c0_33 = arith.constant 0 : index
      %44 = vector.load %arg6[%c0_31, %c0_32, %c0_33] : memref<1x4x8xbf16, #tpu.memory_space<vmem>>, vector<1x4x8xbf16>
      %45 = vector.shape_cast %44 : vector<1x4x8xbf16> to vector<4x8xbf16>
      %46 = vector.shape_cast %43 : vector<4x8xbf16> to vector<1x4x8xbf16>
      tpu.vector_store %arg6[%c0_31, %c0_32, %c0_33], %46 {strides = array<i32>} : memref<1x4x8xbf16, #tpu.memory_space<vmem>>, vector<1x4x8xbf16>,
    } else {
    }
    return
  }
  func.func @transform_0(%arg0: i32, %arg1: i32, %arg2: i32) -> (i32, i32, i32) {
    %c0_i32 = arith.constant 0 : i32
    %c0_i32_0 = arith.constant 0 : i32
    return %arg0, %arg1, %c0_i32 : i32, i32, i32
  }
  func.func @transform_1(%arg0: i32, %arg1: i32, %arg2: i32) -> (i32, i32, i32) {
    %c0_i32 = arith.constant 0 : i32
    %c0_i32_0 = arith.constant 0 : i32
    return %arg0, %arg2, %c0_i32 : i32, i32, i32
  }
  func.func @transform_2(%arg0: i32, %arg1: i32, %arg2: i32) -> (i32, i32, i32) {
    %c0_i32 = arith.constant 0 : i32
    %c0_i32_0 = arith.constant 0 : i32
    return %arg0, %arg2, %c0_i32 : i32, i32, i32
  }
  func.func @transform_3(%arg0: i32, %arg1: i32, %arg2: i32) -> (i32, i32, i32) {
    %c0_i32 = arith.constant 0 : i32
    %c0_i32_0 = arith.constant 0 : i32
    return %arg0, %arg1, %c0_i32 : i32, i32, i32
  }
}

module attributes {stable_mosaic.version = 11 : i64} {
  func.func @kernel(%arg0: i32, %arg1: i32, %arg2: i32, %arg3: memref<4x32xbf16, #tpu.memory_space<vmem>>, %arg4: memref<32x32xbf16, #tpu.memory_space<vmem>>, %arg5: memref<1x32xbf16, #tpu.memory_space<vmem>>, %arg6: memref<4x32xbf16, #tpu.memory_space<vmem>>, %arg7: memref<4x32xbf16, #tpu.memory_space<vmem>>, %arg8: memref<4x32xf32, #tpu.memory_space<vmem>>) attributes {dimension_semantics = [#tpu.dimension_semantics<parallel>, #tpu.dimension_semantics<parallel>, #tpu.dimension_semantics<arbitrary>], iteration_bounds = array<i64: 1, 1, 1>, scalar_prefetch = 0 : i64, scratch_operands = 1 : i64, tpu.core_type = #tpu.core_type<tc>, window_params = [{transform_indices = @transform_0, window_bounds = array<i64: 4, 32>}, {transform_indices = @transform_1, window_bounds = array<i64: 32, 32>}, {transform_indices = @transform_2, window_bounds = array<i64: 1, 32>}, {transform_indices = @transform_3, window_bounds = array<i64: 4, 32>}, {transform_indices = @transform_4, window_bounds = array<i64: 4, 32>}]} {
    %c0_i32 = arith.constant 0 : i32
    %0 = arith.cmpi eq, %arg2, %c0_i32 : i32
    %1 = arith.extui %0 : i1 to i32
    %c0_i32_0 = arith.constant 0 : i32
    %2 = arith.cmpi ne, %1, %c0_i32_0 : i32
    scf.if %2 {
      %cst_10 = arith.constant 0.000000e+00 : f32
      %12 = vector.broadcast %cst_10 : f32 to vector<4x32xf32>
      %c0_11 = arith.constant 0 : index
      %c0_12 = arith.constant 0 : index
      %13 = vector.load %arg8[%c0_11, %c0_12] : memref<4x32xf32, #tpu.memory_space<vmem>>, vector<4x32xf32>
      tpu.vector_store %arg8[%c0_11, %c0_12], %12 {strides = array<i32>} : memref<4x32xf32, #tpu.memory_space<vmem>>, vector<4x32xf32>,
    } else {
    }
    %c0 = arith.constant 0 : index
    %c0_1 = arith.constant 0 : index
    %3 = vector.load %arg8[%c0, %c0_1] : memref<4x32xf32, #tpu.memory_space<vmem>>, vector<4x32xf32>
    %c0_2 = arith.constant 0 : index
    %c0_3 = arith.constant 0 : index
    %4 = vector.load %arg3[%c0_2, %c0_3] : memref<4x32xbf16, #tpu.memory_space<vmem>>, vector<4x32xbf16>
    %c0_4 = arith.constant 0 : index
    %c0_5 = arith.constant 0 : index
    %5 = vector.load %arg4[%c0_4, %c0_5] : memref<32x32xbf16, #tpu.memory_space<vmem>>, vector<32x32xbf16>
    %cst = arith.constant dense<0.000000e+00> : vector<4x32xf32>
    %6 = tpu.matmul %4, %5, %cst {dimension_numbers = #tpu.dot_dimension_numbers<[1], [0], [0], [1], [0, 0, 1, 1], [], []>} : vector<4x32xbf16>, vector<32x32xbf16>, vector<4x32xf32> -> vector<4x32xf32>
    %7 = arith.addf %3, %6 : vector<4x32xf32>
    %c0_6 = arith.constant 0 : index
    %c0_7 = arith.constant 0 : index
    %8 = vector.load %arg8[%c0_6, %c0_7] : memref<4x32xf32, #tpu.memory_space<vmem>>, vector<4x32xf32>
    tpu.vector_store %arg8[%c0_6, %c0_7], %7 {strides = array<i32>} : memref<4x32xf32, #tpu.memory_space<vmem>>, vector<4x32xf32>,
    %c0_i32_8 = arith.constant 0 : i32
    %9 = arith.cmpi eq, %arg2, %c0_i32_8 : i32
    %10 = arith.extui %9 : i1 to i32
    %c0_i32_9 = arith.constant 0 : i32
    %11 = arith.cmpi ne, %10, %c0_i32_9 : i32
    scf.if %11 {
      %c0_10 = arith.constant 0 : index
      %c0_11 = arith.constant 0 : index
      %12 = vector.load %arg8[%c0_10, %c0_11] : memref<4x32xf32, #tpu.memory_space<vmem>>, vector<4x32xf32>
      %c0_12 = arith.constant 0 : index
      %c0_13 = arith.constant 0 : index
      %13 = vector.load %arg5[%c0_12, %c0_13] : memref<1x32xbf16, #tpu.memory_space<vmem>>, vector<1x32xbf16>
      %14 = arith.extf %13 : vector<1x32xbf16> to vector<1x32xf32>
      %15 = vector.broadcast %14 : vector<1x32xf32> to vector<4x32xf32>
      %16 = arith.addf %12, %15 : vector<4x32xf32>
      %c0_14 = arith.constant 0 : index
      %c0_15 = arith.constant 0 : index
      %17 = vector.load %arg6[%c0_14, %c0_15] : memref<4x32xbf16, #tpu.memory_space<vmem>>, vector<4x32xbf16>
      %18 = arith.extf %17 : vector<4x32xbf16> to vector<4x32xf32>
      %19 = arith.addf %16, %18 : vector<4x32xf32>
      %20 = arith.truncf %19 : vector<4x32xf32> to vector<4x32xbf16>
      %c0_16 = arith.constant 0 : index
      %c0_17 = arith.constant 0 : index
      %21 = vector.load %arg7[%c0_16, %c0_17] : memref<4x32xbf16, #tpu.memory_space<vmem>>, vector<4x32xbf16>
      tpu.vector_store %arg7[%c0_16, %c0_17], %20 {strides = array<i32>} : memref<4x32xbf16, #tpu.memory_space<vmem>>, vector<4x32xbf16>,
    } else {
    }
    return
  }
  func.func @transform_0(%arg0: i32, %arg1: i32, %arg2: i32) -> (i32, i32) {
    %c0_i32 = arith.constant 0 : i32
    return %arg0, %arg2 : i32, i32
  }
  func.func @transform_1(%arg0: i32, %arg1: i32, %arg2: i32) -> (i32, i32) {
    %c0_i32 = arith.constant 0 : i32
    return %arg2, %arg1 : i32, i32
  }
  func.func @transform_2(%arg0: i32, %arg1: i32, %arg2: i32) -> (i32, i32) {
    %c0_i32 = arith.constant 0 : i32
    %c0_i32_0 = arith.constant 0 : i32
    return %c0_i32, %arg1 : i32, i32
  }
  func.func @transform_3(%arg0: i32, %arg1: i32, %arg2: i32) -> (i32, i32) {
    %c0_i32 = arith.constant 0 : i32
    return %arg0, %arg1 : i32, i32
  }
  func.func @transform_4(%arg0: i32, %arg1: i32, %arg2: i32) -> (i32, i32) {
    %c0_i32 = arith.constant 0 : i32
    return %arg0, %arg1 : i32, i32
  }
}

module attributes {stable_mosaic.version = 11 : i64} {
  func.func @_ln_ffn_kernel(%arg0: i32, %arg1: i32, %arg2: memref<4x32xbf16, #tpu.memory_space<vmem>>, %arg3: memref<1x32xbf16, #tpu.memory_space<vmem>>, %arg4: memref<1x32xbf16, #tpu.memory_space<vmem>>, %arg5: memref<32x64xbf16, #tpu.memory_space<vmem>>, %arg6: memref<1x64xbf16, #tpu.memory_space<vmem>>, %arg7: memref<64x32xbf16, #tpu.memory_space<vmem>>, %arg8: memref<1x32xbf16, #tpu.memory_space<vmem>>, %arg9: memref<4x32xbf16, #tpu.memory_space<vmem>>, %arg10: memref<4x32xf32, #tpu.memory_space<vmem>>, %arg11: memref<4x32xbf16, #tpu.memory_space<vmem>>) attributes {dimension_semantics = [#tpu.dimension_semantics<parallel>, #tpu.dimension_semantics<arbitrary>], iteration_bounds = array<i64: 1, 1>, scalar_prefetch = 0 : i64, scratch_operands = 2 : i64, tpu.core_type = #tpu.core_type<tc>, window_params = [{transform_indices = @transform_0, window_bounds = array<i64: 4, 32>}, {pipeline_mode = #tpu.pipeline_mode<synchronous>, transform_indices = @transform_1, window_bounds = array<i64: 1, 32>}, {pipeline_mode = #tpu.pipeline_mode<synchronous>, transform_indices = @transform_2, window_bounds = array<i64: 1, 32>}, {transform_indices = @transform_3, window_bounds = array<i64: 32, 64>}, {transform_indices = @transform_4, window_bounds = array<i64: 1, 64>}, {transform_indices = @transform_5, window_bounds = array<i64: 64, 32>}, {pipeline_mode = #tpu.pipeline_mode<synchronous>, transform_indices = @transform_6, window_bounds = array<i64: 1, 32>}, {transform_indices = @transform_7, window_bounds = array<i64: 4, 32>}]} {
    %c0_i32 = arith.constant 0 : i32
    %0 = arith.cmpi eq, %arg1, %c0_i32 : i32
    %1 = arith.extui %0 : i1 to i32
    %c0_i32_0 = arith.constant 0 : i32
    %2 = arith.cmpi ne, %1, %c0_i32_0 : i32
    scf.if %2 {
      %cst_19 = arith.constant 0.000000e+00 : f32
      %32 = vector.broadcast %cst_19 : f32 to vector<4x32xf32>
      %c0_20 = arith.constant 0 : index
      %c0_21 = arith.constant 0 : index
      %33 = vector.load %arg10[%c0_20, %c0_21] : memref<4x32xf32, #tpu.memory_space<vmem>>, vector<4x32xf32>
      tpu.vector_store %arg10[%c0_20, %c0_21], %32 {strides = array<i32>} : memref<4x32xf32, #tpu.memory_space<vmem>>, vector<4x32xf32>,
      %c0_22 = arith.constant 0 : index
      %c0_23 = arith.constant 0 : index
      %34 = vector.load %arg2[%c0_22, %c0_23] : memref<4x32xbf16, #tpu.memory_space<vmem>>, vector<4x32xbf16>
      %35 = arith.extf %34 : vector<4x32xbf16> to vector<4x32xf32>
      %cst_24 = arith.constant dense<0.000000e+00> : vector<4xf32>
      %36 = vector.multi_reduction <add>, %35, %cst_24 [1] : vector<4x32xf32> to vector<4xf32>
      %37 = vector.shape_cast %36 : vector<4xf32> to vector<4x1xf32>
      %cst_25 = arith.constant 3.200000e+01 : f32
      %38 = vector.broadcast %cst_25 : f32 to vector<4x1xf32>
      %39 = arith.divf %37, %38 : vector<4x1xf32>
      %40 = vector.broadcast %39 : vector<4x1xf32> to vector<4x32xf32>
      %41 = arith.subf %35, %40 : vector<4x32xf32>
      %42 = arith.mulf %41, %41 : vector<4x32xf32>
      %cst_26 = arith.constant dense<0.000000e+00> : vector<4xf32>
      %43 = vector.multi_reduction <add>, %42, %cst_26 [1] : vector<4x32xf32> to vector<4xf32>
      %44 = vector.shape_cast %43 : vector<4xf32> to vector<4x1xf32>
      %cst_27 = arith.constant 3.200000e+01 : f32
      %45 = vector.broadcast %cst_27 : f32 to vector<4x1xf32>
      %46 = arith.divf %44, %45 : vector<4x1xf32>
      %47 = vector.broadcast %39 : vector<4x1xf32> to vector<4x32xf32>
      %48 = arith.subf %35, %47 : vector<4x32xf32>
      %cst_28 = arith.constant 9.99999997E-7 : f32
      %49 = vector.broadcast %cst_28 : f32 to vector<4x1xf32>
      %50 = arith.addf %46, %49 : vector<4x1xf32>
      %51 = math.rsqrt %50 : vector<4x1xf32>
      %52 = vector.broadcast %51 : vector<4x1xf32> to vector<4x32xf32>
      %53 = arith.mulf %48, %52 : vector<4x32xf32>
      %c0_29 = arith.constant 0 : index
      %c0_30 = arith.constant 0 : index
      %54 = vector.load %arg3[%c0_29, %c0_30] : memref<1x32xbf16, #tpu.memory_space<vmem>>, vector<1x32xbf16>
      %55 = arith.extf %54 : vector<1x32xbf16> to vector<1x32xf32>
      %56 = vector.broadcast %55 : vector<1x32xf32> to vector<4x32xf32>
      %57 = arith.mulf %53, %56 : vector<4x32xf32>
      %c0_31 = arith.constant 0 : index
      %c0_32 = arith.constant 0 : index
      %58 = vector.load %arg4[%c0_31, %c0_32] : memref<1x32xbf16, #tpu.memory_space<vmem>>, vector<1x32xbf16>
      %59 = arith.extf %58 : vector<1x32xbf16> to vector<1x32xf32>
      %60 = vector.broadcast %59 : vector<1x32xf32> to vector<4x32xf32>
      %61 = arith.addf %57, %60 : vector<4x32xf32>
      %62 = arith.truncf %61 : vector<4x32xf32> to vector<4x32xbf16>
      %c0_33 = arith.constant 0 : index
      %c0_34 = arith.constant 0 : index
      %63 = vector.load %arg11[%c0_33, %c0_34] : memref<4x32xbf16, #tpu.memory_space<vmem>>, vector<4x32xbf16>
      tpu.vector_store %arg11[%c0_33, %c0_34], %62 {strides = array<i32>} : memref<4x32xbf16, #tpu.memory_space<vmem>>, vector<4x32xbf16>,
    } else {
    }
    %c0 = arith.constant 0 : index
    %c0_1 = arith.constant 0 : index
    %3 = vector.load %arg11[%c0, %c0_1] : memref<4x32xbf16, #tpu.memory_space<vmem>>, vector<4x32xbf16>
    %c0_2 = arith.constant 0 : index
    %c0_3 = arith.constant 0 : index
    %4 = vector.load %arg5[%c0_2, %c0_3] : memref<32x64xbf16, #tpu.memory_space<vmem>>, vector<32x64xbf16>
    %cst = arith.constant dense<0.000000e+00> : vector<4x64xf32>
    %5 = tpu.matmul %3, %4, %cst {dimension_numbers = #tpu.dot_dimension_numbers<[1], [0], [0], [1], [0, 0, 1, 1], [], []>} : vector<4x32xbf16>, vector<32x64xbf16>, vector<4x64xf32> -> vector<4x64xf32>
    %c0_4 = arith.constant 0 : index
    %c0_5 = arith.constant 0 : index
    %6 = vector.load %arg6[%c0_4, %c0_5] : memref<1x64xbf16, #tpu.memory_space<vmem>>, vector<1x64xbf16>
    %7 = arith.extf %6 : vector<1x64xbf16> to vector<1x64xf32>
    %8 = vector.broadcast %7 : vector<1x64xf32> to vector<4x64xf32>
    %9 = arith.addf %5, %8 : vector<4x64xf32>
    %10 = arith.mulf %9, %9 : vector<4x64xf32>
    %11 = arith.mulf %9, %10 : vector<4x64xf32>
    %cst_6 = arith.constant 4.471500e-02 : f32
    %12 = vector.broadcast %cst_6 : f32 to vector<4x64xf32>
    %13 = arith.mulf %12, %11 : vector<4x64xf32>
    %14 = arith.addf %9, %13 : vector<4x64xf32>
    %cst_7 = arith.constant 0.797884583 : f32
    %15 = vector.broadcast %cst_7 : f32 to vector<4x64xf32>
    %16 = arith.mulf %15, %14 : vector<4x64xf32>
    %17 = math.tanh %16 : vector<4x64xf32>
    %cst_8 = arith.constant 1.000000e+00 : f32
    %18 = vector.broadcast %cst_8 : f32 to vector<4x64xf32>
    %19 = arith.addf %18, %17 : vector<4x64xf32>
    %cst_9 = arith.constant 5.000000e-01 : f32
    %20 = vector.broadcast %cst_9 : f32 to vector<4x64xf32>
    %21 = arith.mulf %20, %19 : vector<4x64xf32>
    %22 = arith.mulf %9, %21 : vector<4x64xf32>
    %c0_10 = arith.constant 0 : index
    %c0_11 = arith.constant 0 : index
    %23 = vector.load %arg10[%c0_10, %c0_11] : memref<4x32xf32, #tpu.memory_space<vmem>>, vector<4x32xf32>
    %24 = arith.truncf %22 : vector<4x64xf32> to vector<4x64xbf16>
    %c0_12 = arith.constant 0 : index
    %c0_13 = arith.constant 0 : index
    %25 = vector.load %arg7[%c0_12, %c0_13] : memref<64x32xbf16, #tpu.memory_space<vmem>>, vector<64x32xbf16>
    %cst_14 = arith.constant dense<0.000000e+00> : vector<4x32xf32>
    %26 = tpu.matmul %24, %25, %cst_14 {dimension_numbers = #tpu.dot_dimension_numbers<[1], [0], [0], [1], [0, 0, 1, 1], [], []>} : vector<4x64xbf16>, vector<64x32xbf16>, vector<4x32xf32> -> vector<4x32xf32>
    %27 = arith.addf %23, %26 : vector<4x32xf32>
    %c0_15 = arith.constant 0 : index
    %c0_16 = arith.constant 0 : index
    %28 = vector.load %arg10[%c0_15, %c0_16] : memref<4x32xf32, #tpu.memory_space<vmem>>, vector<4x32xf32>
    tpu.vector_store %arg10[%c0_15, %c0_16], %27 {strides = array<i32>} : memref<4x32xf32, #tpu.memory_space<vmem>>, vector<4x32xf32>,
    %c0_i32_17 = arith.constant 0 : i32
    %29 = arith.cmpi eq, %arg1, %c0_i32_17 : i32
    %30 = arith.extui %29 : i1 to i32
    %c0_i32_18 = arith.constant 0 : i32
    %31 = arith.cmpi ne, %30, %c0_i32_18 : i32
    scf.if %31 {
      %c0_19 = arith.constant 0 : index
      %c0_20 = arith.constant 0 : index
      %32 = vector.load %arg10[%c0_19, %c0_20] : memref<4x32xf32, #tpu.memory_space<vmem>>, vector<4x32xf32>
      %c0_21 = arith.constant 0 : index
      %c0_22 = arith.constant 0 : index
      %33 = vector.load %arg8[%c0_21, %c0_22] : memref<1x32xbf16, #tpu.memory_space<vmem>>, vector<1x32xbf16>
      %34 = arith.extf %33 : vector<1x32xbf16> to vector<1x32xf32>
      %35 = vector.broadcast %34 : vector<1x32xf32> to vector<4x32xf32>
      %36 = arith.addf %32, %35 : vector<4x32xf32>
      %c0_23 = arith.constant 0 : index
      %c0_24 = arith.constant 0 : index
      %37 = vector.load %arg2[%c0_23, %c0_24] : memref<4x32xbf16, #tpu.memory_space<vmem>>, vector<4x32xbf16>
      %38 = arith.extf %37 : vector<4x32xbf16> to vector<4x32xf32>
      %39 = arith.addf %36, %38 : vector<4x32xf32>
      %40 = arith.truncf %39 : vector<4x32xf32> to vector<4x32xbf16>
      %c0_25 = arith.constant 0 : index
      %c0_26 = arith.constant 0 : index
      %41 = vector.load %arg9[%c0_25, %c0_26] : memref<4x32xbf16, #tpu.memory_space<vmem>>, vector<4x32xbf16>
      tpu.vector_store %arg9[%c0_25, %c0_26], %40 {strides = array<i32>} : memref<4x32xbf16, #tpu.memory_space<vmem>>, vector<4x32xbf16>,
    } else {
    }
    return
  }
  func.func @transform_0(%arg0: i32, %arg1: i32) -> (i32, i32) {
    %c0_i32 = arith.constant 0 : i32
    %c0_i32_0 = arith.constant 0 : i32
    return %arg0, %c0_i32 : i32, i32
  }
  func.func @transform_1(%arg0: i32, %arg1: i32) -> (i32, i32) {
    %c0_i32 = arith.constant 0 : i32
    %c0_i32_0 = arith.constant 0 : i32
    %c0_i32_1 = arith.constant 0 : i32
    return %c0_i32, %c0_i32_0 : i32, i32
  }
  func.func @transform_2(%arg0: i32, %arg1: i32) -> (i32, i32) {
    %c0_i32 = arith.constant 0 : i32
    %c0_i32_0 = arith.constant 0 : i32
    %c0_i32_1 = arith.constant 0 : i32
    return %c0_i32, %c0_i32_0 : i32, i32
  }
  func.func @transform_3(%arg0: i32, %arg1: i32) -> (i32, i32) {
    %c0_i32 = arith.constant 0 : i32
    %c0_i32_0 = arith.constant 0 : i32
    return %c0_i32, %arg1 : i32, i32
  }
  func.func @transform_4(%arg0: i32, %arg1: i32) -> (i32, i32) {
    %c0_i32 = arith.constant 0 : i32
    %c0_i32_0 = arith.constant 0 : i32
    return %c0_i32, %arg1 : i32, i32
  }
  func.func @transform_5(%arg0: i32, %arg1: i32) -> (i32, i32) {
    %c0_i32 = arith.constant 0 : i32
    %c0_i32_0 = arith.constant 0 : i32
    return %arg1, %c0_i32 : i32, i32
  }
  func.func @transform_6(%arg0: i32, %arg1: i32) -> (i32, i32) {
    %c0_i32 = arith.constant 0 : i32
    %c0_i32_0 = arith.constant 0 : i32
    %c0_i32_1 = arith.constant 0 : i32
    return %c0_i32, %c0_i32_0 : i32, i32
  }
  func.func @transform_7(%arg0: i32, %arg1: i32) -> (i32, i32) {
    %c0_i32 = arith.constant 0 : i32
    %c0_i32_0 = arith.constant 0 : i32
    return %arg0, %c0_i32 : i32, i32
  }
}

module attributes {stable_mosaic.version = 11 : i64} {
  func.func @kernel(%arg0: i32, %arg1: i32, %arg2: memref<4x32xbf16, #tpu.memory_space<vmem>>, %arg3: memref<1x32xbf16, #tpu.memory_space<vmem>>, %arg4: memref<1x32xbf16, #tpu.memory_space<vmem>>, %arg5: memref<32x32xbf16, #tpu.memory_space<vmem>>, %arg6: memref<1x32xbf16, #tpu.memory_space<vmem>>, %arg7: memref<4x32xbf16, #tpu.memory_space<vmem>>, %arg8: memref<4x32xbf16, #tpu.memory_space<vmem>>) attributes {dimension_semantics = [#tpu.dimension_semantics<parallel>, #tpu.dimension_semantics<arbitrary>], iteration_bounds = array<i64: 1, 1>, scalar_prefetch = 0 : i64, scratch_operands = 1 : i64, tpu.core_type = #tpu.core_type<tc>, window_params = [{transform_indices = @transform_0, window_bounds = array<i64: 4, 32>}, {pipeline_mode = #tpu.pipeline_mode<synchronous>, transform_indices = @transform_1, window_bounds = array<i64: 1, 32>}, {pipeline_mode = #tpu.pipeline_mode<synchronous>, transform_indices = @transform_2, window_bounds = array<i64: 1, 32>}, {transform_indices = @transform_3, window_bounds = array<i64: 32, 32>}, {transform_indices = @transform_4, window_bounds = array<i64: 1, 32>}, {transform_indices = @transform_5, window_bounds = array<i64: 4, 32>}]} {
    %c0_i32 = arith.constant 0 : i32
    %0 = arith.cmpi eq, %arg1, %c0_i32 : i32
    %1 = arith.extui %0 : i1 to i32
    %c0_i32_0 = arith.constant 0 : i32
    %2 = arith.cmpi ne, %1, %c0_i32_0 : i32
    scf.if %2 {
      %c0_8 = arith.constant 0 : index
      %c0_9 = arith.constant 0 : index
      %12 = vector.load %arg2[%c0_8, %c0_9] : memref<4x32xbf16, #tpu.memory_space<vmem>>, vector<4x32xbf16>
      %13 = arith.extf %12 : vector<4x32xbf16> to vector<4x32xf32>
      %cst_10 = arith.constant dense<0.000000e+00> : vector<4xf32>
      %14 = vector.multi_reduction <add>, %13, %cst_10 [1] : vector<4x32xf32> to vector<4xf32>
      %15 = vector.shape_cast %14 : vector<4xf32> to vector<4x1xf32>
      %cst_11 = arith.constant 3.200000e+01 : f32
      %16 = vector.broadcast %cst_11 : f32 to vector<4x1xf32>
      %17 = arith.divf %15, %16 : vector<4x1xf32>
      %18 = vector.broadcast %17 : vector<4x1xf32> to vector<4x32xf32>
      %19 = arith.subf %13, %18 : vector<4x32xf32>
      %20 = arith.mulf %19, %19 : vector<4x32xf32>
      %cst_12 = arith.constant dense<0.000000e+00> : vector<4xf32>
      %21 = vector.multi_reduction <add>, %20, %cst_12 [1] : vector<4x32xf32> to vector<4xf32>
      %22 = vector.shape_cast %21 : vector<4xf32> to vector<4x1xf32>
      %cst_13 = arith.constant 3.200000e+01 : f32
      %23 = vector.broadcast %cst_13 : f32 to vector<4x1xf32>
      %24 = arith.divf %22, %23 : vector<4x1xf32>
      %25 = vector.broadcast %17 : vector<4x1xf32> to vector<4x32xf32>
      %26 = arith.subf %13, %25 : vector<4x32xf32>
      %cst_14 = arith.constant 9.99999997E-7 : f32
      %27 = vector.broadcast %cst_14 : f32 to vector<4x1xf32>
      %28 = arith.addf %24, %27 : vector<4x1xf32>
      %29 = math.rsqrt %28 : vector<4x1xf32>
      %30 = vector.broadcast %29 : vector<4x1xf32> to vector<4x32xf32>
      %31 = arith.mulf %26, %30 : vector<4x32xf32>
      %c0_15 = arith.constant 0 : index
      %c0_16 = arith.constant 0 : index
      %32 = vector.load %arg3[%c0_15, %c0_16] : memref<1x32xbf16, #tpu.memory_space<vmem>>, vector<1x32xbf16>
      %33 = arith.extf %32 : vector<1x32xbf16> to vector<1x32xf32>
      %34 = vector.broadcast %33 : vector<1x32xf32> to vector<4x32xf32>
      %35 = arith.mulf %31, %34 : vector<4x32xf32>
      %c0_17 = arith.constant 0 : index
      %c0_18 = arith.constant 0 : index
      %36 = vector.load %arg4[%c0_17, %c0_18] : memref<1x32xbf16, #tpu.memory_space<vmem>>, vector<1x32xbf16>
      %37 = arith.extf %36 : vector<1x32xbf16> to vector<1x32xf32>
      %38 = vector.broadcast %37 : vector<1x32xf32> to vector<4x32xf32>
      %39 = arith.addf %35, %38 : vector<4x32xf32>
      %40 = arith.truncf %39 : vector<4x32xf32> to vector<4x32xbf16>
      %c0_19 = arith.constant 0 : index
      %c0_20 = arith.constant 0 : index
      %41 = vector.load %arg8[%c0_19, %c0_20] : memref<4x32xbf16, #tpu.memory_space<vmem>>, vector<4x32xbf16>
      tpu.vector_store %arg8[%c0_19, %c0_20], %40 {strides = array<i32>} : memref<4x32xbf16, #tpu.memory_space<vmem>>, vector<4x32xbf16>,
    } else {
    }
    %c0 = arith.constant 0 : index
    %c0_1 = arith.constant 0 : index
    %3 = vector.load %arg8[%c0, %c0_1] : memref<4x32xbf16, #tpu.memory_space<vmem>>, vector<4x32xbf16>
    %c0_2 = arith.constant 0 : index
    %c0_3 = arith.constant 0 : index
    %4 = vector.load %arg5[%c0_2, %c0_3] : memref<32x32xbf16, #tpu.memory_space<vmem>>, vector<32x32xbf16>
    %cst = arith.constant dense<0.000000e+00> : vector<4x32xf32>
    %5 = tpu.matmul %3, %4, %cst {dimension_numbers = #tpu.dot_dimension_numbers<[1], [0], [0], [1], [0, 0, 1, 1], [], []>} : vector<4x32xbf16>, vector<32x32xbf16>, vector<4x32xf32> -> vector<4x32xf32>
    %c0_4 = arith.constant 0 : index
    %c0_5 = arith.constant 0 : index
    %6 = vector.load %arg6[%c0_4, %c0_5] : memref<1x32xbf16, #tpu.memory_space<vmem>>, vector<1x32xbf16>
    %7 = arith.extf %6 : vector<1x32xbf16> to vector<1x32xf32>
    %8 = vector.broadcast %7 : vector<1x32xf32> to vector<4x32xf32>
    %9 = arith.addf %5, %8 : vector<4x32xf32>
    %10 = arith.truncf %9 : vector<4x32xf32> to vector<4x32xbf16>
    %c0_6 = arith.constant 0 : index
    %c0_7 = arith.constant 0 : index
    %11 = vector.load %arg7[%c0_6, %c0_7] : memref<4x32xbf16, #tpu.memory_space<vmem>>, vector<4x32xbf16>
    tpu.vector_store %arg7[%c0_6, %c0_7], %10 {strides = array<i32>} : memref<4x32xbf16, #tpu.memory_space<vmem>>, vector<4x32xbf16>,
    return
  }
  func.func @transform_0(%arg0: i32, %arg1: i32) -> (i32, i32) {
    %c0_i32 = arith.constant 0 : i32
    %c0_i32_0 = arith.constant 0 : i32
    return %arg0, %c0_i32 : i32, i32
  }
  func.func @transform_1(%arg0: i32, %arg1: i32) -> (i32, i32) {
    %c0_i32 = arith.constant 0 : i32
    %c0_i32_0 = arith.constant 0 : i32
    %c0_i32_1 = arith.constant 0 : i32
    return %c0_i32, %c0_i32_0 : i32, i32
  }
  func.func @transform_2(%arg0: i32, %arg1: i32) -> (i32, i32) {
    %c0_i32 = arith.constant 0 : i32
    %c0_i32_0 = arith.constant 0 : i32
    %c0_i32_1 = arith.constant 0 : i32
    return %c0_i32, %c0_i32_0 : i32, i32
  }
  func.func @transform_3(%arg0: i32, %arg1: i32) -> (i32, i32) {
    %c0_i32 = arith.constant 0 : i32
    %c0_i32_0 = arith.constant 0 : i32
    return %c0_i32, %arg1 : i32, i32
  }
  func.func @transform_4(%arg0: i32, %arg1: i32) -> (i32, i32) {
    %c0_i32 = arith.constant 0 : i32
    %c0_i32_0 = arith.constant 0 : i32
    return %c0_i32, %arg1 : i32, i32
  }
  func.func @transform_5(%arg0: i32, %arg1: i32) -> (i32, i32) {
    %c0_i32 = arith.constant 0 : i32
    return %arg0, %arg1 : i32, i32
  }
}

module attributes {stable_mosaic.version = 11 : i64} {
  func.func @kernel(%arg0: i32, %arg1: i32, %arg2: memref<8x32xbf16, #tpu.memory_space<vmem>>, %arg3: memref<1x32xbf16, #tpu.memory_space<vmem>>, %arg4: memref<32x64xbf16, #tpu.memory_space<vmem>>, %arg5: memref<8x64xbf16, #tpu.memory_space<vmem>>, %arg6: memref<8x32xbf16, #tpu.memory_space<vmem>>) attributes {dimension_semantics = [#tpu.dimension_semantics<parallel>, #tpu.dimension_semantics<arbitrary>], iteration_bounds = array<i64: 1, 1>, scalar_prefetch = 0 : i64, scratch_operands = 1 : i64, tpu.core_type = #tpu.core_type<tc>, window_params = [{transform_indices = @transform_0, window_bounds = array<i64: 8, 32>}, {pipeline_mode = #tpu.pipeline_mode<synchronous>, transform_indices = @transform_1, window_bounds = array<i64: 1, 32>}, {transform_indices = @transform_2, window_bounds = array<i64: 32, 64>}, {transform_indices = @transform_3, window_bounds = array<i64: 8, 64>}]} {
    %c0_i32 = arith.constant 0 : i32
    %0 = arith.cmpi eq, %arg1, %c0_i32 : i32
    %1 = arith.extui %0 : i1 to i32
    %c0_i32_0 = arith.constant 0 : i32
    %2 = arith.cmpi ne, %1, %c0_i32_0 : i32
    scf.if %2 {
      %c0_6 = arith.constant 0 : index
      %c0_7 = arith.constant 0 : index
      %8 = vector.load %arg2[%c0_6, %c0_7] : memref<8x32xbf16, #tpu.memory_space<vmem>>, vector<8x32xbf16>
      %9 = arith.extf %8 : vector<8x32xbf16> to vector<8x32xf32>
      %10 = arith.mulf %9, %9 : vector<8x32xf32>
      %cst_8 = arith.constant dense<0.000000e+00> : vector<8xf32>
      %11 = vector.multi_reduction <add>, %10, %cst_8 [1] : vector<8x32xf32> to vector<8xf32>
      %12 = vector.shape_cast %11 : vector<8xf32> to vector<8x1xf32>
      %cst_9 = arith.constant 3.200000e+01 : f32
      %13 = vector.broadcast %cst_9 : f32 to vector<8x1xf32>
      %14 = arith.divf %12, %13 : vector<8x1xf32>
      %cst_10 = arith.constant 9.99999997E-7 : f32
      %15 = vector.broadcast %cst_10 : f32 to vector<8x1xf32>
      %16 = arith.addf %14, %15 : vector<8x1xf32>
      %17 = math.rsqrt %16 : vector<8x1xf32>
      %18 = vector.broadcast %17 : vector<8x1xf32> to vector<8x32xf32>
      %19 = arith.mulf %9, %18 : vector<8x32xf32>
      %c0_11 = arith.constant 0 : index
      %c0_12 = arith.constant 0 : index
      %20 = vector.load %arg3[%c0_11, %c0_12] : memref<1x32xbf16, #tpu.memory_space<vmem>>, vector<1x32xbf16>
      %21 = arith.extf %20 : vector<1x32xbf16> to vector<1x32xf32>
      %cst_13 = arith.constant 1.000000e+00 : f32
      %22 = vector.broadcast %cst_13 : f32 to vector<1x32xf32>
      %23 = arith.addf %22, %21 : vector<1x32xf32>
      %24 = vector.broadcast %23 : vector<1x32xf32> to vector<8x32xf32>
      %25 = arith.mulf %19, %24 : vector<8x32xf32>
      %26 = arith.truncf %25 : vector<8x32xf32> to vector<8x32xbf16>
      %c0_14 = arith.constant 0 : index
      %c0_15 = arith.constant 0 : index
      %27 = vector.load %arg6[%c0_14, %c0_15] : memref<8x32xbf16, #tpu.memory_space<vmem>>, vector<8x32xbf16>
      tpu.vector_store %arg6[%c0_14, %c0_15], %26 {strides = array<i32>} : memref<8x32xbf16, #tpu.memory_space<vmem>>, vector<8x32xbf16>,
    } else {
    }
    %c0 = arith.constant 0 : index
    %c0_1 = arith.constant 0 : index
    %3 = vector.load %arg6[%c0, %c0_1] : memref<8x32xbf16, #tpu.memory_space<vmem>>, vector<8x32xbf16>
    %c0_2 = arith.constant 0 : index
    %c0_3 = arith.constant 0 : index
    %4 = vector.load %arg4[%c0_2, %c0_3] : memref<32x64xbf16, #tpu.memory_space<vmem>>, vector<32x64xbf16>
    %cst = arith.constant dense<0.000000e+00> : vector<8x64xf32>
    %5 = tpu.matmul %3, %4, %cst {dimension_numbers = #tpu.dot_dimension_numbers<[1], [0], [0], [1], [0, 0, 1, 1], [], []>} : vector<8x32xbf16>, vector<32x64xbf16>, vector<8x64xf32> -> vector<8x64xf32>
    %6 = arith.truncf %5 : vector<8x64xf32> to vector<8x64xbf16>
    %c0_4 = arith.constant 0 : index
    %c0_5 = arith.constant 0 : index
    %7 = vector.load %arg5[%c0_4, %c0_5] : memref<8x64xbf16, #tpu.memory_space<vmem>>, vector<8x64xbf16>
    tpu.vector_store %arg5[%c0_4, %c0_5], %6 {strides = array<i32>} : memref<8x64xbf16, #tpu.memory_space<vmem>>, vector<8x64xbf16>,
    return
  }
  func.func @transform_0(%arg0: i32, %arg1: i32) -> (i32, i32) {
    %c0_i32 = arith.constant 0 : i32
    %c0_i32_0 = arith.constant 0 : i32
    return %arg0, %c0_i32 : i32, i32
  }
  func.func @transform_1(%arg0: i32, %arg1: i32) -> (i32, i32) {
    %c0_i32 = arith.constant 0 : i32
    %c0_i32_0 = arith.constant 0 : i32
    %c0_i32_1 = arith.constant 0 : i32
    return %c0_i32, %c0_i32_0 : i32, i32
  }
  func.func @transform_2(%arg0: i32, %arg1: i32) -> (i32, i32) {
    %c0_i32 = arith.constant 0 : i32
    %c0_i32_0 = arith.constant 0 : i32
    return %c0_i32, %arg1 : i32, i32
  }
  func.func @transform_3(%arg0: i32, %arg1: i32) -> (i32, i32) {
    %c0_i32 = arith.constant 0 : i32
    return %arg0, %arg1 : i32, i32
  }
}

module attributes {stable_mosaic.version = 11 : i64} {
  func.func @kernel(%arg0: i32, %arg1: i32, %arg2: i32, %arg3: memref<8x32xbf16, #tpu.memory_space<vmem>>, %arg4: memref<32x32xbf16, #tpu.memory_space<vmem>>, %arg5: memref<8x32xbf16, #tpu.memory_space<vmem>>, %arg6: memref<8x32xbf16, #tpu.memory_space<vmem>>, %arg7: memref<8x32xf32, #tpu.memory_space<vmem>>) attributes {dimension_semantics = [#tpu.dimension_semantics<parallel>, #tpu.dimension_semantics<parallel>, #tpu.dimension_semantics<arbitrary>], iteration_bounds = array<i64: 1, 1, 1>, scalar_prefetch = 0 : i64, scratch_operands = 1 : i64, tpu.core_type = #tpu.core_type<tc>, window_params = [{transform_indices = @transform_0, window_bounds = array<i64: 8, 32>}, {transform_indices = @transform_1, window_bounds = array<i64: 32, 32>}, {transform_indices = @transform_2, window_bounds = array<i64: 8, 32>}, {transform_indices = @transform_3, window_bounds = array<i64: 8, 32>}]} {
    %c0_i32 = arith.constant 0 : i32
    %0 = arith.cmpi eq, %arg2, %c0_i32 : i32
    %1 = arith.extui %0 : i1 to i32
    %c0_i32_0 = arith.constant 0 : i32
    %2 = arith.cmpi ne, %1, %c0_i32_0 : i32
    scf.if %2 {
      %cst_10 = arith.constant 0.000000e+00 : f32
      %12 = vector.broadcast %cst_10 : f32 to vector<8x32xf32>
      %c0_11 = arith.constant 0 : index
      %c0_12 = arith.constant 0 : index
      %13 = vector.load %arg7[%c0_11, %c0_12] : memref<8x32xf32, #tpu.memory_space<vmem>>, vector<8x32xf32>
      tpu.vector_store %arg7[%c0_11, %c0_12], %12 {strides = array<i32>} : memref<8x32xf32, #tpu.memory_space<vmem>>, vector<8x32xf32>,
    } else {
    }
    %c0 = arith.constant 0 : index
    %c0_1 = arith.constant 0 : index
    %3 = vector.load %arg7[%c0, %c0_1] : memref<8x32xf32, #tpu.memory_space<vmem>>, vector<8x32xf32>
    %c0_2 = arith.constant 0 : index
    %c0_3 = arith.constant 0 : index
    %4 = vector.load %arg3[%c0_2, %c0_3] : memref<8x32xbf16, #tpu.memory_space<vmem>>, vector<8x32xbf16>
    %c0_4 = arith.constant 0 : index
    %c0_5 = arith.constant 0 : index
    %5 = vector.load %arg4[%c0_4, %c0_5] : memref<32x32xbf16, #tpu.memory_space<vmem>>, vector<32x32xbf16>
    %cst = arith.constant dense<0.000000e+00> : vector<8x32xf32>
    %6 = tpu.matmul %4, %5, %cst {dimension_numbers = #tpu.dot_dimension_numbers<[1], [0], [0], [1], [0, 0, 1, 1], [], []>} : vector<8x32xbf16>, vector<32x32xbf16>, vector<8x32xf32> -> vector<8x32xf32>
    %7 = arith.addf %3, %6 : vector<8x32xf32>
    %c0_6 = arith.constant 0 : index
    %c0_7 = arith.constant 0 : index
    %8 = vector.load %arg7[%c0_6, %c0_7] : memref<8x32xf32, #tpu.memory_space<vmem>>, vector<8x32xf32>
    tpu.vector_store %arg7[%c0_6, %c0_7], %7 {strides = array<i32>} : memref<8x32xf32, #tpu.memory_space<vmem>>, vector<8x32xf32>,
    %c0_i32_8 = arith.constant 0 : i32
    %9 = arith.cmpi eq, %arg2, %c0_i32_8 : i32
    %10 = arith.extui %9 : i1 to i32
    %c0_i32_9 = arith.constant 0 : i32
    %11 = arith.cmpi ne, %10, %c0_i32_9 : i32
    scf.if %11 {
      %c0_10 = arith.constant 0 : index
      %c0_11 = arith.constant 0 : index
      %12 = vector.load %arg7[%c0_10, %c0_11] : memref<8x32xf32, #tpu.memory_space<vmem>>, vector<8x32xf32>
      %c0_12 = arith.constant 0 : index
      %c0_13 = arith.constant 0 : index
      %13 = vector.load %arg5[%c0_12, %c0_13] : memref<8x32xbf16, #tpu.memory_space<vmem>>, vector<8x32xbf16>
      %14 = arith.extf %13 : vector<8x32xbf16> to vector<8x32xf32>
      %15 = arith.addf %12, %14 : vector<8x32xf32>
      %16 = arith.truncf %15 : vector<8x32xf32> to vector<8x32xbf16>
      %c0_14 = arith.constant 0 : index
      %c0_15 = arith.constant 0 : index
      %17 = vector.load %arg6[%c0_14, %c0_15] : memref<8x32xbf16, #tpu.memory_space<vmem>>, vector<8x32xbf16>
      tpu.vector_store %arg6[%c0_14, %c0_15], %16 {strides = array<i32>} : memref<8x32xbf16, #tpu.memory_space<vmem>>, vector<8x32xbf16>,
    } else {
    }
    return
  }
  func.func @transform_0(%arg0: i32, %arg1: i32, %arg2: i32) -> (i32, i32) {
    %c0_i32 = arith.constant 0 : i32
    return %arg0, %arg2 : i32, i32
  }
  func.func @transform_1(%arg0: i32, %arg1: i32, %arg2: i32) -> (i32, i32) {
    %c0_i32 = arith.constant 0 : i32
    return %arg2, %arg1 : i32, i32
  }
  func.func @transform_2(%arg0: i32, %arg1: i32, %arg2: i32) -> (i32, i32) {
    %c0_i32 = arith.constant 0 : i32
    return %arg0, %arg1 : i32, i32
  }
  func.func @transform_3(%arg0: i32, %arg1: i32, %arg2: i32) -> (i32, i32) {
    %c0_i32 = arith.constant 0 : i32
    return %arg0, %arg1 : i32, i32
  }
}

module attributes {stable_mosaic.version = 11 : i64} {
  func.func @_flash_attn_kernel(%arg0: i32, %arg1: i32, %arg2: i32, %arg3: memref<1x16x8xbf16, #tpu.memory_space<vmem>>, %arg4: memref<1x8x8xbf16, #tpu.memory_space<vmem>>, %arg5: memref<1x8x8xbf16, #tpu.memory_space<vmem>>, %arg6: memref<1x16x8xbf16, #tpu.memory_space<vmem>>, %arg7: memref<16x1xf32, #tpu.memory_space<vmem>>, %arg8: memref<16x1xf32, #tpu.memory_space<vmem>>, %arg9: memref<16x8xf32, #tpu.memory_space<vmem>>) attributes {dimension_semantics = [#tpu.dimension_semantics<parallel>, #tpu.dimension_semantics<parallel>, #tpu.dimension_semantics<arbitrary>], iteration_bounds = array<i64: 2, 1, 1>, scalar_prefetch = 0 : i64, scratch_operands = 3 : i64, tpu.core_type = #tpu.core_type<tc>, window_params = [{transform_indices = @transform_0, window_bounds = array<i64: 1, 16, 8>}, {transform_indices = @transform_1, window_bounds = array<i64: 1, 8, 8>}, {transform_indices = @transform_2, window_bounds = array<i64: 1, 8, 8>}, {transform_indices = @transform_3, window_bounds = array<i64: 1, 16, 8>}]} {
    %c0_i32 = arith.constant 0 : i32
    %0 = arith.cmpi eq, %arg2, %c0_i32 : i32
    %1 = arith.extui %0 : i1 to i32
    %c0_i32_0 = arith.constant 0 : i32
    %2 = arith.cmpi ne, %1, %c0_i32_0 : i32
    scf.if %2 {
      %cst_27 = arith.constant 0xFF800000 : f32
      %38 = vector.broadcast %cst_27 : f32 to vector<16x1xf32>
      %c0_28 = arith.constant 0 : index
      %c0_29 = arith.constant 0 : index
      %39 = vector.load %arg7[%c0_28, %c0_29] : memref<16x1xf32, #tpu.memory_space<vmem>>, vector<16x1xf32>
      tpu.vector_store %arg7[%c0_28, %c0_29], %38 {strides = array<i32>} : memref<16x1xf32, #tpu.memory_space<vmem>>, vector<16x1xf32>,
      %cst_30 = arith.constant 0.000000e+00 : f32
      %40 = vector.broadcast %cst_30 : f32 to vector<16x1xf32>
      %c0_31 = arith.constant 0 : index
      %c0_32 = arith.constant 0 : index
      %41 = vector.load %arg8[%c0_31, %c0_32] : memref<16x1xf32, #tpu.memory_space<vmem>>, vector<16x1xf32>
      tpu.vector_store %arg8[%c0_31, %c0_32], %40 {strides = array<i32>} : memref<16x1xf32, #tpu.memory_space<vmem>>, vector<16x1xf32>,
      %cst_33 = arith.constant 0.000000e+00 : f32
      %42 = vector.broadcast %cst_33 : f32 to vector<16x8xf32>
      %c0_34 = arith.constant 0 : index
      %c0_35 = arith.constant 0 : index
      %43 = vector.load %arg9[%c0_34, %c0_35] : memref<16x8xf32, #tpu.memory_space<vmem>>, vector<16x8xf32>
      tpu.vector_store %arg9[%c0_34, %c0_35], %42 {strides = array<i32>} : memref<16x8xf32, #tpu.memory_space<vmem>>, vector<16x8xf32>,
    } else {
    }
    %c0 = arith.constant 0 : index
    %c0_1 = arith.constant 0 : index
    %c0_2 = arith.constant 0 : index
    %3 = vector.load %arg3[%c0, %c0_1, %c0_2] : memref<1x16x8xbf16, #tpu.memory_space<vmem>>, vector<1x16x8xbf16>
    %4 = vector.shape_cast %3 : vector<1x16x8xbf16> to vector<16x8xbf16>
    %c0_3 = arith.constant 0 : index
    %c0_4 = arith.constant 0 : index
    %c0_5 = arith.constant 0 : index
    %5 = vector.load %arg4[%c0_3, %c0_4, %c0_5] : memref<1x8x8xbf16, #tpu.memory_space<vmem>>, vector<1x8x8xbf16>
    %6 = vector.shape_cast %5 : vector<1x8x8xbf16> to vector<8x8xbf16>
    %c0_6 = arith.constant 0 : index
    %c0_7 = arith.constant 0 : index
    %c0_8 = arith.constant 0 : index
    %7 = vector.load %arg5[%c0_6, %c0_7, %c0_8] : memref<1x8x8xbf16, #tpu.memory_space<vmem>>, vector<1x8x8xbf16>
    %8 = vector.shape_cast %7 : vector<1x8x8xbf16> to vector<8x8xbf16>
    %cst = arith.constant dense<0.000000e+00> : vector<16x8xf32>
    %9 = tpu.matmul %4, %6, %cst {dimension_numbers = #tpu.dot_dimension_numbers<[1], [1], [0], [0], [0, 0, 1, 0], [], []>} : vector<16x8xbf16>, vector<8x8xbf16>, vector<16x8xf32> -> vector<16x8xf32>
    %cst_9 = arith.constant 0.353553385 : f32
    %10 = vector.broadcast %cst_9 : f32 to vector<16x8xf32>
    %11 = arith.mulf %9, %10 : vector<16x8xf32>
    %c0_10 = arith.constant 0 : index
    %c0_11 = arith.constant 0 : index
    %12 = vector.load %arg7[%c0_10, %c0_11] : memref<16x1xf32, #tpu.memory_space<vmem>>, vector<16x1xf32>
    %cst_12 = arith.constant dense<0xFF800000> : vector<16xf32>
    %13 = vector.multi_reduction <maximumf>, %11, %cst_12 [1] : vector<16x8xf32> to vector<16xf32>
    %14 = vector.shape_cast %13 : vector<16xf32> to vector<16x1xf32>
    %15 = arith.maximumf %12, %14 : vector<16x1xf32>
    %16 = arith.subf %12, %15 : vector<16x1xf32>
    %17 = math.exp %16 : vector<16x1xf32>
    %18 = vector.broadcast %15 : vector<16x1xf32> to vector<16x8xf32>
    %19 = arith.subf %11, %18 : vector<16x8xf32>
    %20 = math.exp %19 : vector<16x8xf32>
    %c0_13 = arith.constant 0 : index
    %c0_14 = arith.constant 0 : index
    %21 = vector.load %arg8[%c0_13, %c0_14] : memref<16x1xf32, #tpu.memory_space<vmem>>, vector<16x1xf32>
    %22 = arith.mulf %17, %21 : vector<16x1xf32>
    %cst_15 = arith.constant dense<0.000000e+00> : vector<16xf32>
    %23 = vector.multi_reduction <add>, %20, %cst_15 [1] : vector<16x8xf32> to vector<16xf32>
    %24 = vector.shape_cast %23 : vector<16xf32> to vector<16x1xf32>
    %25 = arith.addf %22, %24 : vector<16x1xf32>
    %c0_16 = arith.constant 0 : index
    %c0_17 = arith.constant 0 : index
    %26 = vector.load %arg8[%c0_16, %c0_17] : memref<16x1xf32, #tpu.memory_space<vmem>>, vector<16x1xf32>
    tpu.vector_store %arg8[%c0_16, %c0_17], %25 {strides = array<i32>} : memref<16x1xf32, #tpu.memory_space<vmem>>, vector<16x1xf32>,
    %c0_18 = arith.constant 0 : index
    %c0_19 = arith.constant 0 : index
    %27 = vector.load %arg9[%c0_18, %c0_19] : memref<16x8xf32, #tpu.memory_space<vmem>>, vector<16x8xf32>
    %28 = vector.broadcast %17 : vector<16x1xf32> to vector<16x8xf32>
    %29 = arith.mulf %28, %27 : vector<16x8xf32>
    %30 = arith.truncf %20 : vector<16x8xf32> to vector<16x8xbf16>
    %cst_20 = arith.constant dense<0.000000e+00> : vector<16x8xf32>
    %31 = tpu.matmul %30, %8, %cst_20 {dimension_numbers = #tpu.dot_dimension_numbers<[1], [0], [0], [1], [0, 0, 1, 1], [], []>} : vector<16x8xbf16>, vector<8x8xbf16>, vector<16x8xf32> -> vector<16x8xf32>
    %32 = arith.addf %29, %31 : vector<16x8xf32>
    %c0_21 = arith.constant 0 : index
    %c0_22 = arith.constant 0 : index
    %33 = vector.load %arg9[%c0_21, %c0_22] : memref<16x8xf32, #tpu.memory_space<vmem>>, vector<16x8xf32>
    tpu.vector_store %arg9[%c0_21, %c0_22], %32 {strides = array<i32>} : memref<16x8xf32, #tpu.memory_space<vmem>>, vector<16x8xf32>,
    %c0_23 = arith.constant 0 : index
    %c0_24 = arith.constant 0 : index
    %34 = vector.load %arg7[%c0_23, %c0_24] : memref<16x1xf32, #tpu.memory_space<vmem>>, vector<16x1xf32>
    tpu.vector_store %arg7[%c0_23, %c0_24], %15 {strides = array<i32>} : memref<16x1xf32, #tpu.memory_space<vmem>>, vector<16x1xf32>,
    %c0_i32_25 = arith.constant 0 : i32
    %35 = arith.cmpi eq, %arg2, %c0_i32_25 : i32
    %36 = arith.extui %35 : i1 to i32
    %c0_i32_26 = arith.constant 0 : i32
    %37 = arith.cmpi ne, %36, %c0_i32_26 : i32
    scf.if %37 {
      %c0_27 = arith.constant 0 : index
      %c0_28 = arith.constant 0 : index
      %38 = vector.load %arg9[%c0_27, %c0_28] : memref<16x8xf32, #tpu.memory_space<vmem>>, vector<16x8xf32>
      %c0_29 = arith.constant 0 : index
      %c0_30 = arith.constant 0 : index
      %39 = vector.load %arg8[%c0_29, %c0_30] : memref<16x1xf32, #tpu.memory_space<vmem>>, vector<16x1xf32>
      %40 = tpu.reciprocal %39 {approx = true} : vector<16x1xf32> -> vector<16x1xf32>
      %41 = vector.broadcast %40 : vector<16x1xf32> to vector<16x8xf32>
      %42 = arith.mulf %38, %41 : vector<16x8xf32>
      %43 = arith.truncf %42 : vector<16x8xf32> to vector<16x8xbf16>
      %c0_31 = arith.constant 0 : index
      %c0_32 = arith.constant 0 : index
      %c0_33 = arith.constant 0 : index
      %44 = vector.load %arg6[%c0_31, %c0_32, %c0_33] : memref<1x16x8xbf16, #tpu.memory_space<vmem>>, vector<1x16x8xbf16>
      %45 = vector.shape_cast %44 : vector<1x16x8xbf16> to vector<16x8xbf16>
      %46 = vector.shape_cast %43 : vector<16x8xbf16> to vector<1x16x8xbf16>
      tpu.vector_store %arg6[%c0_31, %c0_32, %c0_33], %46 {strides = array<i32>} : memref<1x16x8xbf16, #tpu.memory_space<vmem>>, vector<1x16x8xbf16>,
    } else {
    }
    return
  }
  func.func @transform_0(%arg0: i32, %arg1: i32, %arg2: i32) -> (i32, i32, i32) {
    %c0_i32 = arith.constant 0 : i32
    %c0_i32_0 = arith.constant 0 : i32
    return %arg0, %arg1, %c0_i32 : i32, i32, i32
  }
  func.func @transform_1(%arg0: i32, %arg1: i32, %arg2: i32) -> (i32, i32, i32) {
    %c0_i32 = arith.constant 0 : i32
    %c0_i32_0 = arith.constant 0 : i32
    return %arg0, %arg2, %c0_i32 : i32, i32, i32
  }
  func.func @transform_2(%arg0: i32, %arg1: i32, %arg2: i32) -> (i32, i32, i32) {
    %c0_i32 = arith.constant 0 : i32
    %c0_i32_0 = arith.constant 0 : i32
    return %arg0, %arg2, %c0_i32 : i32, i32, i32
  }
  func.func @transform_3(%arg0: i32, %arg1: i32, %arg2: i32) -> (i32, i32, i32) {
    %c0_i32 = arith.constant 0 : i32
    %c0_i32_0 = arith.constant 0 : i32
    return %arg0, %arg1, %c0_i32 : i32, i32, i32
  }
}

module attributes {stable_mosaic.version = 11 : i64} {
  func.func @_rms_gated_ffn_kernel(%arg0: i32, %arg1: i32, %arg2: memref<8x32xbf16, #tpu.memory_space<vmem>>, %arg3: memref<1x32xbf16, #tpu.memory_space<vmem>>, %arg4: memref<32x64xbf16, #tpu.memory_space<vmem>>, %arg5: memref<1x64xbf16, #tpu.memory_space<vmem>>, %arg6: memref<32x64xbf16, #tpu.memory_space<vmem>>, %arg7: memref<1x64xbf16, #tpu.memory_space<vmem>>, %arg8: memref<64x32xbf16, #tpu.memory_space<vmem>>, %arg9: memref<1x32xbf16, #tpu.memory_space<vmem>>, %arg10: memref<8x32xbf16, #tpu.memory_space<vmem>>, %arg11: memref<8x32xf32, #tpu.memory_space<vmem>>, %arg12: memref<8x32xbf16, #tpu.memory_space<vmem>>) attributes {dimension_semantics = [#tpu.dimension_semantics<parallel>, #tpu.dimension_semantics<arbitrary>], iteration_bounds = array<i64: 1, 1>, scalar_prefetch = 0 : i64, scratch_operands = 2 : i64, tpu.core_type = #tpu.core_type<tc>, window_params = [{transform_indices = @transform_0, window_bounds = array<i64: 8, 32>}, {pipeline_mode = #tpu.pipeline_mode<synchronous>, transform_indices = @transform_1, window_bounds = array<i64: 1, 32>}, {transform_indices = @transform_2, window_bounds = array<i64: 32, 64>}, {transform_indices = @transform_3, window_bounds = array<i64: 1, 64>}, {transform_indices = @transform_4, window_bounds = array<i64: 32, 64>}, {transform_indices = @transform_5, window_bounds = array<i64: 1, 64>}, {transform_indices = @transform_6, window_bounds = array<i64: 64, 32>}, {pipeline_mode = #tpu.pipeline_mode<synchronous>, transform_indices = @transform_7, window_bounds = array<i64: 1, 32>}, {transform_indices = @transform_8, window_bounds = array<i64: 8, 32>}]} {
    %c0_i32 = arith.constant 0 : i32
    %0 = arith.cmpi eq, %arg1, %c0_i32 : i32
    %1 = arith.extui %0 : i1 to i32
    %c0_i32_0 = arith.constant 0 : i32
    %2 = arith.cmpi ne, %1, %c0_i32_0 : i32
    scf.if %2 {
      %cst_24 = arith.constant 0.000000e+00 : f32
      %39 = vector.broadcast %cst_24 : f32 to vector<8x32xf32>
      %c0_25 = arith.constant 0 : index
      %c0_26 = arith.constant 0 : index
      %40 = vector.load %arg11[%c0_25, %c0_26] : memref<8x32xf32, #tpu.memory_space<vmem>>, vector<8x32xf32>
      tpu.vector_store %arg11[%c0_25, %c0_26], %39 {strides = array<i32>} : memref<8x32xf32, #tpu.memory_space<vmem>>, vector<8x32xf32>,
      %c0_27 = arith.constant 0 : index
      %c0_28 = arith.constant 0 : index
      %41 = vector.load %arg2[%c0_27, %c0_28] : memref<8x32xbf16, #tpu.memory_space<vmem>>, vector<8x32xbf16>
      %42 = arith.extf %41 : vector<8x32xbf16> to vector<8x32xf32>
      %43 = arith.mulf %42, %42 : vector<8x32xf32>
      %cst_29 = arith.constant dense<0.000000e+00> : vector<8xf32>
      %44 = vector.multi_reduction <add>, %43, %cst_29 [1] : vector<8x32xf32> to vector<8xf32>
      %45 = vector.shape_cast %44 : vector<8xf32> to vector<8x1xf32>
      %cst_30 = arith.constant 3.200000e+01 : f32
      %46 = vector.broadcast %cst_30 : f32 to vector<8x1xf32>
      %47 = arith.divf %45, %46 : vector<8x1xf32>
      %cst_31 = arith.constant 9.99999997E-7 : f32
      %48 = vector.broadcast %cst_31 : f32 to vector<8x1xf32>
      %49 = arith.addf %47, %48 : vector<8x1xf32>
      %50 = math.rsqrt %49 : vector<8x1xf32>
      %51 = vector.broadcast %50 : vector<8x1xf32> to vector<8x32xf32>
      %52 = arith.mulf %42, %51 : vector<8x32xf32>
      %c0_32 = arith.constant 0 : index
      %c0_33 = arith.constant 0 : index
      %53 = vector.load %arg3[%c0_32, %c0_33] : memref<1x32xbf16, #tpu.memory_space<vmem>>, vector<1x32xbf16>
      %54 = arith.extf %53 : vector<1x32xbf16> to vector<1x32xf32>
      %cst_34 = arith.constant 1.000000e+00 : f32
      %55 = vector.broadcast %cst_34 : f32 to vector<1x32xf32>
      %56 = arith.addf %55, %54 : vector<1x32xf32>
      %57 = vector.broadcast %56 : vector<1x32xf32> to vector<8x32xf32>
      %58 = arith.mulf %52, %57 : vector<8x32xf32>
      %59 = arith.truncf %58 : vector<8x32xf32> to vector<8x32xbf16>
      %c0_35 = arith.constant 0 : index
      %c0_36 = arith.constant 0 : index
      %60 = vector.load %arg12[%c0_35, %c0_36] : memref<8x32xbf16, #tpu.memory_space<vmem>>, vector<8x32xbf16>
      tpu.vector_store %arg12[%c0_35, %c0_36], %59 {strides = array<i32>} : memref<8x32xbf16, #tpu.memory_space<vmem>>, vector<8x32xbf16>,
    } else {
    }
    %c0 = arith.constant 0 : index
    %c0_1 = arith.constant 0 : index
    %3 = vector.load %arg12[%c0, %c0_1] : memref<8x32xbf16, #tpu.memory_space<vmem>>, vector<8x32xbf16>
    %c0_2 = arith.constant 0 : index
    %c0_3 = arith.constant 0 : index
    %4 = vector.load %arg4[%c0_2, %c0_3] : memref<32x64xbf16, #tpu.memory_space<vmem>>, vector<32x64xbf16>
    %cst = arith.constant dense<0.000000e+00> : vector<8x64xf32>
    %5 = tpu.matmul %3, %4, %cst {dimension_numbers = #tpu.dot_dimension_numbers<[1], [0], [0], [1], [0, 0, 1, 1], [], []>} : vector<8x32xbf16>, vector<32x64xbf16>, vector<8x64xf32> -> vector<8x64xf32>
    %c0_4 = arith.constant 0 : index
    %c0_5 = arith.constant 0 : index
    %6 = vector.load %arg5[%c0_4, %c0_5] : memref<1x64xbf16, #tpu.memory_space<vmem>>, vector<1x64xbf16>
    %7 = arith.extf %6 : vector<1x64xbf16> to vector<1x64xf32>
    %8 = vector.broadcast %7 : vector<1x64xf32> to vector<8x64xf32>
    %9 = arith.addf %5, %8 : vector<8x64xf32>
    %c0_6 = arith.constant 0 : index
    %c0_7 = arith.constant 0 : index
    %10 = vector.load %arg6[%c0_6, %c0_7] : memref<32x64xbf16, #tpu.memory_space<vmem>>, vector<32x64xbf16>
    %cst_8 = arith.constant dense<0.000000e+00> : vector<8x64xf32>
    %11 = tpu.matmul %3, %10, %cst_8 {dimension_numbers = #tpu.dot_dimension_numbers<[1], [0], [0], [1], [0, 0, 1, 1], [], []>} : vector<8x32xbf16>, vector<32x64xbf16>, vector<8x64xf32> -> vector<8x64xf32>
    %c0_9 = arith.constant 0 : index
    %c0_10 = arith.constant 0 : index
    %12 = vector.load %arg7[%c0_9, %c0_10] : memref<1x64xbf16, #tpu.memory_space<vmem>>, vector<1x64xbf16>
    %13 = arith.extf %12 : vector<1x64xbf16> to vector<1x64xf32>
    %14 = vector.broadcast %13 : vector<1x64xf32> to vector<8x64xf32>
    %15 = arith.addf %11, %14 : vector<8x64xf32>
    %16 = arith.mulf %9, %9 : vector<8x64xf32>
    %17 = arith.mulf %9, %16 : vector<8x64xf32>
    %cst_11 = arith.constant 4.471500e-02 : f32
    %18 = vector.broadcast %cst_11 : f32 to vector<8x64xf32>
    %19 = arith.mulf %18, %17 : vector<8x64xf32>
    %20 = arith.addf %9, %19 : vector<8x64xf32>
    %cst_12 = arith.constant 0.797884583 : f32
    %21 = vector.broadcast %cst_12 : f32 to vector<8x64xf32>
    %22 = arith.mulf %21, %20 : vector<8x64xf32>
    %23 = math.tanh %22 : vector<8x64xf32>
    %cst_13 = arith.constant 1.000000e+00 : f32
    %24 = vector.broadcast %cst_13 : f32 to vector<8x64xf32>
    %25 = arith.addf %24, %23 : vector<8x64xf32>
    %cst_14 = arith.constant 5.000000e-01 : f32
    %26 = vector.broadcast %cst_14 : f32 to vector<8x64xf32>
    %27 = arith.mulf %26, %25 : vector<8x64xf32>
    %28 = arith.mulf %9, %27 : vector<8x64xf32>
    %29 = arith.mulf %28, %15 : vector<8x64xf32>
    %c0_15 = arith.constant 0 : index
    %c0_16 = arith.constant 0 : index
    %30 = vector.load %arg11[%c0_15, %c0_16] : memref<8x32xf32, #tpu.memory_space<vmem>>, vector<8x32xf32>
    %31 = arith.truncf %29 : vector<8x64xf32> to vector<8x64xbf16>
    %c0_17 = arith.constant 0 : index
    %c0_18 = arith.constant 0 : index
    %32 = vector.load %arg8[%c0_17, %c0_18] : memref<64x32xbf16, #tpu.memory_space<vmem>>, vector<64x32xbf16>
    %cst_19 = arith.constant dense<0.000000e+00> : vector<8x32xf32>
    %33 = tpu.matmul %31, %32, %cst_19 {dimension_numbers = #tpu.dot_dimension_numbers<[1], [0], [0], [1], [0, 0, 1, 1], [], []>} : vector<8x64xbf16>, vector<64x32xbf16>, vector<8x32xf32> -> vector<8x32xf32>
    %34 = arith.addf %30, %33 : vector<8x32xf32>
    %c0_20 = arith.constant 0 : index
    %c0_21 = arith.constant 0 : index
    %35 = vector.load %arg11[%c0_20, %c0_21] : memref<8x32xf32, #tpu.memory_space<vmem>>, vector<8x32xf32>
    tpu.vector_store %arg11[%c0_20, %c0_21], %34 {strides = array<i32>} : memref<8x32xf32, #tpu.memory_space<vmem>>, vector<8x32xf32>,
    %c0_i32_22 = arith.constant 0 : i32
    %36 = arith.cmpi eq, %arg1, %c0_i32_22 : i32
    %37 = arith.extui %36 : i1 to i32
    %c0_i32_23 = arith.constant 0 : i32
    %38 = arith.cmpi ne, %37, %c0_i32_23 : i32
    scf.if %38 {
      %c0_24 = arith.constant 0 : index
      %c0_25 = arith.constant 0 : index
      %39 = vector.load %arg11[%c0_24, %c0_25] : memref<8x32xf32, #tpu.memory_space<vmem>>, vector<8x32xf32>
      %c0_26 = arith.constant 0 : index
      %c0_27 = arith.constant 0 : index
      %40 = vector.load %arg9[%c0_26, %c0_27] : memref<1x32xbf16, #tpu.memory_space<vmem>>, vector<1x32xbf16>
      %41 = arith.extf %40 : vector<1x32xbf16> to vector<1x32xf32>
      %42 = vector.broadcast %41 : vector<1x32xf32> to vector<8x32xf32>
      %43 = arith.addf %39, %42 : vector<8x32xf32>
      %c0_28 = arith.constant 0 : index
      %c0_29 = arith.constant 0 : index
      %44 = vector.load %arg2[%c0_28, %c0_29] : memref<8x32xbf16, #tpu.memory_space<vmem>>, vector<8x32xbf16>
      %45 = arith.extf %44 : vector<8x32xbf16> to vector<8x32xf32>
      %46 = arith.addf %43, %45 : vector<8x32xf32>
      %47 = arith.truncf %46 : vector<8x32xf32> to vector<8x32xbf16>
      %c0_30 = arith.constant 0 : index
      %c0_31 = arith.constant 0 : index
      %48 = vector.load %arg10[%c0_30, %c0_31] : memref<8x32xbf16, #tpu.memory_space<vmem>>, vector<8x32xbf16>
      tpu.vector_store %arg10[%c0_30, %c0_31], %47 {strides = array<i32>} : memref<8x32xbf16, #tpu.memory_space<vmem>>, vector<8x32xbf16>,
    } else {
    }
    return
  }
  func.func @transform_0(%arg0: i32, %arg1: i32) -> (i32, i32) {
    %c0_i32 = arith.constant 0 : i32
    %c0_i32_0 = arith.constant 0 : i32
    return %arg0, %c0_i32 : i32, i32
  }
  func.func @transform_1(%arg0: i32, %arg1: i32) -> (i32, i32) {
    %c0_i32 = arith.constant 0 : i32
    %c0_i32_0 = arith.constant 0 : i32
    %c0_i32_1 = arith.constant 0 : i32
    return %c0_i32, %c0_i32_0 : i32, i32
  }
  func.func @transform_2(%arg0: i32, %arg1: i32) -> (i32, i32) {
    %c0_i32 = arith.constant 0 : i32
    %c0_i32_0 = arith.constant 0 : i32
    return %c0_i32, %arg1 : i32, i32
  }
  func.func @transform_3(%arg0: i32, %arg1: i32) -> (i32, i32) {
    %c0_i32 = arith.constant 0 : i32
    %c0_i32_0 = arith.constant 0 : i32
    return %c0_i32, %arg1 : i32, i32
  }
  func.func @transform_4(%arg0: i32, %arg1: i32) -> (i32, i32) {
    %c0_i32 = arith.constant 0 : i32
    %c0_i32_0 = arith.constant 0 : i32
    return %c0_i32, %arg1 : i32, i32
  }
  func.func @transform_5(%arg0: i32, %arg1: i32) -> (i32, i32) {
    %c0_i32 = arith.constant 0 : i32
    %c0_i32_0 = arith.constant 0 : i32
    return %c0_i32, %arg1 : i32, i32
  }
  func.func @transform_6(%arg0: i32, %arg1: i32) -> (i32, i32) {
    %c0_i32 = arith.constant 0 : i32
    %c0_i32_0 = arith.constant 0 : i32
    return %arg1, %c0_i32 : i32, i32
  }
  func.func @transform_7(%arg0: i32, %arg1: i32) -> (i32, i32) {
    %c0_i32 = arith.constant 0 : i32
    %c0_i32_0 = arith.constant 0 : i32
    %c0_i32_1 = arith.constant 0 : i32
    return %c0_i32, %c0_i32_0 : i32, i32
  }
  func.func @transform_8(%arg0: i32, %arg1: i32) -> (i32, i32) {
    %c0_i32 = arith.constant 0 : i32
    %c0_i32_0 = arith.constant 0 : i32
    return %arg0, %c0_i32 : i32, i32
  }
}

module attributes {stable_mosaic.version = 11 : i64} {
  func.func @kernel(%arg0: i32, %arg1: i32, %arg2: memref<8x32xbf16, #tpu.memory_space<vmem>>, %arg3: memref<1x32xbf16, #tpu.memory_space<vmem>>, %arg4: memref<32x128xbf16, #tpu.memory_space<vmem>>, %arg5: memref<8x128xf32, #tpu.memory_space<vmem>>, %arg6: memref<8x32xbf16, #tpu.memory_space<vmem>>) attributes {dimension_semantics = [#tpu.dimension_semantics<parallel>, #tpu.dimension_semantics<arbitrary>], iteration_bounds = array<i64: 1, 1>, scalar_prefetch = 0 : i64, scratch_operands = 1 : i64, tpu.core_type = #tpu.core_type<tc>, window_params = [{transform_indices = @transform_0, window_bounds = array<i64: 8, 32>}, {pipeline_mode = #tpu.pipeline_mode<synchronous>, transform_indices = @transform_1, window_bounds = array<i64: 1, 32>}, {transform_indices = @transform_2, window_bounds = array<i64: 32, 128>}, {transform_indices = @transform_3, window_bounds = array<i64: 8, 128>}]} {
    %c0_i32 = arith.constant 0 : i32
    %0 = arith.cmpi eq, %arg1, %c0_i32 : i32
    %1 = arith.extui %0 : i1 to i32
    %c0_i32_0 = arith.constant 0 : i32
    %2 = arith.cmpi ne, %1, %c0_i32_0 : i32
    scf.if %2 {
      %c0_6 = arith.constant 0 : index
      %c0_7 = arith.constant 0 : index
      %7 = vector.load %arg2[%c0_6, %c0_7] : memref<8x32xbf16, #tpu.memory_space<vmem>>, vector<8x32xbf16>
      %8 = arith.extf %7 : vector<8x32xbf16> to vector<8x32xf32>
      %9 = arith.mulf %8, %8 : vector<8x32xf32>
      %cst_8 = arith.constant dense<0.000000e+00> : vector<8xf32>
      %10 = vector.multi_reduction <add>, %9, %cst_8 [1] : vector<8x32xf32> to vector<8xf32>
      %11 = vector.shape_cast %10 : vector<8xf32> to vector<8x1xf32>
      %cst_9 = arith.constant 3.200000e+01 : f32
      %12 = vector.broadcast %cst_9 : f32 to vector<8x1xf32>
      %13 = arith.divf %11, %12 : vector<8x1xf32>
      %cst_10 = arith.constant 9.99999997E-7 : f32
      %14 = vector.broadcast %cst_10 : f32 to vector<8x1xf32>
      %15 = arith.addf %13, %14 : vector<8x1xf32>
      %16 = math.rsqrt %15 : vector<8x1xf32>
      %17 = vector.broadcast %16 : vector<8x1xf32> to vector<8x32xf32>
      %18 = arith.mulf %8, %17 : vector<8x32xf32>
      %c0_11 = arith.constant 0 : index
      %c0_12 = arith.constant 0 : index
      %19 = vector.load %arg3[%c0_11, %c0_12] : memref<1x32xbf16, #tpu.memory_space<vmem>>, vector<1x32xbf16>
      %20 = arith.extf %19 : vector<1x32xbf16> to vector<1x32xf32>
      %cst_13 = arith.constant 1.000000e+00 : f32
      %21 = vector.broadcast %cst_13 : f32 to vector<1x32xf32>
      %22 = arith.addf %21, %20 : vector<1x32xf32>
      %23 = vector.broadcast %22 : vector<1x32xf32> to vector<8x32xf32>
      %24 = arith.mulf %18, %23 : vector<8x32xf32>
      %25 = arith.truncf %24 : vector<8x32xf32> to vector<8x32xbf16>
      %c0_14 = arith.constant 0 : index
      %c0_15 = arith.constant 0 : index
      %26 = vector.load %arg6[%c0_14, %c0_15] : memref<8x32xbf16, #tpu.memory_space<vmem>>, vector<8x32xbf16>
      tpu.vector_store %arg6[%c0_14, %c0_15], %25 {strides = array<i32>} : memref<8x32xbf16, #tpu.memory_space<vmem>>, vector<8x32xbf16>,
    } else {
    }
    %c0 = arith.constant 0 : index
    %c0_1 = arith.constant 0 : index
    %3 = vector.load %arg6[%c0, %c0_1] : memref<8x32xbf16, #tpu.memory_space<vmem>>, vector<8x32xbf16>
    %c0_2 = arith.constant 0 : index
    %c0_3 = arith.constant 0 : index
    %4 = vector.load %arg4[%c0_2, %c0_3] : memref<32x128xbf16, #tpu.memory_space<vmem>>, vector<32x128xbf16>
    %cst = arith.constant dense<0.000000e+00> : vector<8x128xf32>
    %5 = tpu.matmul %3, %4, %cst {dimension_numbers = #tpu.dot_dimension_numbers<[1], [0], [0], [1], [0, 0, 1, 1], [], []>} : vector<8x32xbf16>, vector<32x128xbf16>, vector<8x128xf32> -> vector<8x128xf32>
    %c0_4 = arith.constant 0 : index
    %c0_5 = arith.constant 0 : index
    %6 = vector.load %arg5[%c0_4, %c0_5] : memref<8x128xf32, #tpu.memory_space<vmem>>, vector<8x128xf32>
    tpu.vector_store %arg5[%c0_4, %c0_5], %5 {strides = array<i32>} : memref<8x128xf32, #tpu.memory_space<vmem>>, vector<8x128xf32>,
    return
  }
  func.func @transform_0(%arg0: i32, %arg1: i32) -> (i32, i32) {
    %c0_i32 = arith.constant 0 : i32
    %c0_i32_0 = arith.constant 0 : i32
    return %arg0, %c0_i32 : i32, i32
  }
  func.func @transform_1(%arg0: i32, %arg1: i32) -> (i32, i32) {
    %c0_i32 = arith.constant 0 : i32
    %c0_i32_0 = arith.constant 0 : i32
    %c0_i32_1 = arith.constant 0 : i32
    return %c0_i32, %c0_i32_0 : i32, i32
  }
  func.func @transform_2(%arg0: i32, %arg1: i32) -> (i32, i32) {
    %c0_i32 = arith.constant 0 : i32
    %c0_i32_0 = arith.constant 0 : i32
    return %c0_i32, %arg1 : i32, i32
  }
  func.func @transform_3(%arg0: i32, %arg1: i32) -> (i32, i32) {
    %c0_i32 = arith.constant 0 : i32
    return %arg0, %arg1 : i32, i32
  }
}

</mosaic_0001>

<llo_original>
// kernel: paligemma_forward.15
$region0: #{paligemma_forward.15}
  #allocation0 [shape = 'u32[]', space=smem, size = 0x4, offset = 0x4, fixed_abs, tag = 'smem constant byte address 0x4 - core index']
  #allocation1 [shape = 'u32[144,128]{1,0:T(1,128)}', space=vmem, size = 0x12000, scoped, tag = 'internal scratch']
  #allocation2 [shape = 'f32[4,32]{1,0:T(4,128)}', space=vmem, size = 0x800, scoped, tag = 'scratch operand']
  %s0 = inlined_call_operand.vmem [shape: bf16[4,192], index: 0, kind: input, shape index: {}]
  %s1 = inlined_call_operand.vmem [shape: bf16[192,32], index: 1, kind: input, shape index: {}]
  %s2 = inlined_call_operand.vmem [shape: bf16[1,32], index: 2, kind: input, shape index: {}]
  %s3 = inlined_call_operand.vmem [shape: bf16[4,32], index: 3, kind: output, shape index: {}]
  %s4 = sld [smem:[#allocation0]]
  $region30: #{paligemma_forward.15} parent=0
    _
  %s6 = ssub.s32 1, %s4
  %s7 = scalar_select 0, %s6, %s4
  // Predicated region
  $region2: #{paligemma_forward.15} parent=0 // pred_check
    _
  $region3: #{paligemma_forward.15} parent=0 // pred_check_branch
    %9 = sbr.rel (0) target = $region5
  $region4: #{paligemma_forward.15} parent=0 // pred_region
    _
  $region5: #{paligemma_forward.15} parent=0 // pred_fallthru
    _
  // Predicated region
  $region6: #{paligemma_forward.15} parent=0 // pred_check
    _
  $region7: #{paligemma_forward.15} parent=0 // pred_check_branch
    %11 = sbr.rel (0) target = $region9
  $region8: #{paligemma_forward.15} parent=0 // pred_region
    _
  $region9: #{paligemma_forward.15} parent=0 // pred_fallthru
    _
  // Predicated region
  $region10: #{paligemma_forward.15} parent=0 // pred_check
    _
  $region11: #{paligemma_forward.15} parent=0 // pred_check_branch
    %13 = sbr.rel (0) target = $region13
  $region12: #{paligemma_forward.15} parent=0 // pred_region
    _
  $region13: #{paligemma_forward.15} parent=0 // pred_fallthru
    _
  %p15 = scmp.eq.s32.totalorder 0, 0
  // Predicated region
  $region14: #{paligemma_forward.15} parent=0 // pred_check
    %p16 = pneg %p15
  $region15: #{paligemma_forward.15} parent=0 // pred_check_branch
    %18 = sbr.rel (%p16) target = $region17
  $region16: #{paligemma_forward.15} parent=0 // pred_region
    %vm19 = vcmask 257024
    %20 = vst.msk [vmem:[#allocation2] sm:$0xf] %vm19, 0.0
  $region17: #{paligemma_forward.15} parent=0 // pred_fallthru
    _
  %v21 = vld [vmem:[#allocation2] sm:$0xf]
  %v22 = vld [vmem:[%s0] sm:$0xf]
  %v23 = vld [vmem:[%s1] sm:$0xf]
  %v24 = vld [vmem:[%s1 + $0x4] sm:$0xf]
  %v25 = vld [vmem:[%s1 + $0x8] sm:$0xf]
  %v26 = vld [vmem:[%s1 + $0xc] sm:$0xf]
  %v27 = vld [vmem:[%s1 + $0x10] sm:$0xf]
  %v28 = vld [vmem:[%s1 + $0x14] sm:$0xf]
  %v29 = vld [vmem:[%s1 + $0x18] sm:$0xf]
  %v30 = vld [vmem:[%s1 + $0x1c] sm:$0xf]
  %v31 = vld [vmem:[%s1 + $0x20] sm:$0xf]
  %v32 = vld [vmem:[%s1 + $0x24] sm:$0xf]
  %v33 = vld [vmem:[%s1 + $0x28] sm:$0xf]
  %v34 = vld [vmem:[%s1 + $0x2c] sm:$0xf]
  %v35 = vld [vmem:[%s1 + $0x30] sm:$0xf]
  %v36 = vld [vmem:[%s1 + $0x34] sm:$0xf]
  %v37 = vld [vmem:[%s1 + $0x38] sm:$0xf]
  %v38 = vld [vmem:[%s1 + $0x3c] sm:$0xf]
  %v39 = vld [vmem:[%s1 + $0x40] sm:$0xf]
  %v40 = vld [vmem:[%s1 + $0x44] sm:$0xf]
  %v41 = vld [vmem:[%s1 + $0x48] sm:$0xf]
  %v42 = vld [vmem:[%s1 + $0x4c] sm:$0xf]
  %v43 = vld [vmem:[%s1 + $0x50] sm:$0xf]
  %v44 = vld [vmem:[%s1 + $0x54] sm:$0xf]
  %v45 = vld [vmem:[%s1 + $0x58] sm:$0xf]
  %v46 = vld [vmem:[%s1 + $0x5c] sm:$0xf]
  %v49 = vunpack.c.l.s4 1983009808
  %v50 = vunpack.c.0.s8 %v49
  %v51 = vlaneseq
  %v52 = vshrl.u32 %v51, 7
  %v53 = vsub.s32 %v50, %v52
  %v54 = vrot.slane %v22, %v53
  %v55 = vcombine.high %v54, %v54
  %v81 = vunpack.c.l.b16 %v23
  %v82 = vunpack.c.l.b16 %v24
  %v83 = vunpack.c.l.b16 %v25
  %v84 = vunpack.c.l.b16 %v26
  %v85 = vunpack.c.l.b16 %v27
  %v86 = vunpack.c.l.b16 %v28
  %v87 = vunpack.c.l.b16 %v29
  %v88 = vunpack.c.l.b16 %v30
  %v89 = vunpack.c.l.b16 %v31
  %v90 = vunpack.c.l.b16 %v32
  %v91 = vunpack.c.l.b16 %v33
  %v92 = vunpack.c.l.b16 %v34
  %v93 = vunpack.c.l.b16 %v35
  %v94 = vunpack.c.l.b16 %v36
  %v95 = vunpack.c.l.b16 %v37
  %v96 = vunpack.c.l.b16 %v38
  %v97 = vunpack.c.l.b16 %v39
  %v98 = vunpack.c.l.b16 %v40
  %v99 = vunpack.c.l.b16 %v41
  %v100 = vunpack.c.l.b16 %v42
  %v101 = vunpack.c.l.b16 %v43
  %v102 = vunpack.c.l.b16 %v44
  %v103 = vunpack.c.l.b16 %v45
  %v104 = vunpack.c.l.b16 %v46
  %v105 = vpack.c.b16 %v82, %v81
  %v106 = vpack.c.b16 %v84, %v83
  %v107 = vpack.c.b16 %v86, %v85
  %v108 = vpack.c.b16 %v88, %v87
  %v109 = vpack.c.b16 %v90, %v89
  %v110 = vpack.c.b16 %v92, %v91
  %v111 = vpack.c.b16 %v94, %v93
  %v112 = vpack.c.b16 %v96, %v95
  %v113 = vpack.c.b16 %v98, %v97
  %v114 = vpack.c.b16 %v100, %v99
  %v115 = vpack.c.b16 %v102, %v101
  %v116 = vpack.c.b16 %v104, %v103
  %vm129 = vcmask 523264
  %v131 = vsel %vm129, %v55, 0
  %133 = vmatprep.subr.bf16.mxu0 0
  %134 = vmatpush1.bf16.msra.mxu0 %v105
  %135 = vmatprep.subr.bf16.mxu0 0
  %136 = vmatpush1.bf16.msra.mxu0 %v106
  %137 = vmatprep.subr.bf16.mxu0 0
  %138 = vmatpush1.bf16.msra.mxu0 %v107
  %139 = vmatprep.subr.bf16.mxu0 0
  %140 = vmatpush1.bf16.msra.mxu0 %v108
  %141 = vmatprep.subr.bf16.mxu0 0
  %142 = vmatpush1.bf16.msra.mxu0 %v109
  %143 = vmatprep.subr.bf16.mxu0 0
  %144 = vmatpush1.bf16.msra.mxu0 %v110
  %145 = vmatprep.subr.bf16.mxu0 0
  %146 = vmatpush1.bf16.msra.mxu0 %v111
  %147 = vmatprep.subr.bf16.mxu0 0
  %148 = vmatpush1.bf16.msra.mxu0 %v112
  %149 = vmatprep.subr.bf16.mxu0 0
  %150 = vmatpush1.bf16.msra.mxu0 %v113
  %151 = vmatprep.subr.bf16.mxu0 0
  %152 = vmatpush1.bf16.msra.mxu0 %v114
  %153 = vmatprep.subr.bf16.mxu0 0
  %154 = vmatpush1.bf16.msra.mxu0 %v115
  %155 = vmatprep.subr.bf16.mxu0 0
  %156 = vmatpush1.bf16.msra.mxu0 %v116
  %157 = vmatprep.subr.bf16.mxu0 0
  %158 = vmatpush1.bf16.msra.mxu0 0
  %159 = vmatprep.subr.bf16.mxu0 0
  %160 = vmatpush1.bf16.msra.mxu0 0
  %161 = vmatprep.subr.bf16.mxu0 0
  %162 = vmatpush1.bf16.msra.mxu0 0
  %163 = vmatprep.subr.bf16.mxu0 0
  %164 = vmatpush1.bf16.msra.mxu0 0
  %165 = vmatprep.mubr.bf16.mxu0 %v131
  %166 = vmatmul.mubr.bf16.gmra.mrb[0].mxu0 %v54
  %v167 = vpop.f32.mrb[0].mxu0
  %v168 = vadd.f32 0.0, %v167
  %v169 = vpop.f32.mrb[0].mxu0
  %v170 = vpop.f32.mrb[0].mxu0
  %v171 = vpop.f32.mrb[0].mxu0
  %172 = vdwg.mxu0
  %v173 = vadd.f32 %v21, %v168
  %vm174 = vcmask 257024
  %175 = vst.msk [vmem:[#allocation2] sm:$0xf] %vm174, %v173
  // Predicated region
  $region18: #{paligemma_forward.15} parent=0 // pred_check
    %p176 = pneg %p15
  $region19: #{paligemma_forward.15} parent=0 // pred_check_branch
    %178 = sbr.rel (%p176) target = $region21
  $region20: #{paligemma_forward.15} parent=0 // pred_region
    %v179 = vld [vmem:[#allocation2] sm:$0xf]
    %v180 = vld [vmem:[%s2] sm:$0x1]
    %v181 = vunpack.c.l.bf16 %v180
    %v182 = vlaneseq
    %v183 = vshrl.u32 %v182, 7
    %v184 = vsub.s32 0, %v183
    %v185 = vrot.slane %v181, %v184
    %v186 = vadd.f32 %v179, %v185
    %v187 = vpack.c.bf16 %v186, %v186
    %vm188 = vcmask 254976
    %189 = vst.msk [vmem:[%s3] sm:$0x3] %vm188, %v187
  $region21: #{paligemma_forward.15} parent=0 // pred_fallthru
    _
  // Predicated region
  $region22: #{paligemma_forward.15} parent=0 // pred_check
    _
  $region23: #{paligemma_forward.15} parent=0 // pred_check_branch
    %191 = sbr.rel (0) target = $region25
  $region24: #{paligemma_forward.15} parent=0 // pred_region
    _
  $region25: #{paligemma_forward.15} parent=0 // pred_fallthru
    _
  // Predicated region
  $region26: #{paligemma_forward.15} parent=0 // pred_check
    _
  $region27: #{paligemma_forward.15} parent=0 // pred_check_branch
    %193 = sbr.rel (0) target = $region29
  $region28: #{paligemma_forward.15} parent=0 // pred_region
    _
  $region29: #{paligemma_forward.15} parent=0 // pred_fallthru
    _

// kernel: paligemma_forward.16
$region0: #{paligemma_forward.16}
  #allocation0 [shape = 'u32[]', space=smem, size = 0x4, offset = 0x4, fixed_abs, tag = 'smem constant byte address 0x4 - core index']
  #allocation1 [shape = 'u32[144,128]{1,0:T(1,128)}', space=vmem, size = 0x12000, scoped, tag = 'internal scratch']
  #allocation2 [shape = 'bf16[4,32]{1,0:T(4,128)(2,1)}', space=vmem, size = 0x400, scoped, tag = 'scratch operand']
  %s0 = inlined_call_operand.vmem [shape: bf16[4,32], index: 0, kind: input, shape index: {}]
  %s1 = inlined_call_operand.vmem [shape: bf16[1,32], index: 1, kind: input, shape index: {}]
  %s2 = inlined_call_operand.vmem [shape: bf16[1,32], index: 2, kind: input, shape index: {}]
  %s3 = inlined_call_operand.vmem [shape: bf16[32,96], index: 3, kind: input, shape index: {}]
  %s4 = inlined_call_operand.vmem [shape: bf16[1,96], index: 4, kind: input, shape index: {}]
  %s5 = inlined_call_operand.vmem [shape: bf16[4,96], index: 5, kind: output, shape index: {}]
  %s6 = sld [smem:[#allocation0]]
  $region34: #{paligemma_forward.16} parent=0
    _
  %s8 = ssub.s32 1, %s6
  %s9 = scalar_select 0, %s8, %s6
  // Predicated region
  $region2: #{paligemma_forward.16} parent=0 // pred_check
    _
  $region3: #{paligemma_forward.16} parent=0 // pred_check_branch
    %11 = sbr.rel (0) target = $region5
  $region4: #{paligemma_forward.16} parent=0 // pred_region
    _
  $region5: #{paligemma_forward.16} parent=0 // pred_fallthru
    _
  // Predicated region
  $region6: #{paligemma_forward.16} parent=0 // pred_check
    _
  $region7: #{paligemma_forward.16} parent=0 // pred_check_branch
    %13 = sbr.rel (0) target = $region9
  $region8: #{paligemma_forward.16} parent=0 // pred_region
    _
  $region9: #{paligemma_forward.16} parent=0 // pred_fallthru
    _
  // Predicated region
  $region10: #{paligemma_forward.16} parent=0 // pred_check
    _
  $region11: #{paligemma_forward.16} parent=0 // pred_check_branch
    %15 = sbr.rel (0) target = $region13
  $region12: #{paligemma_forward.16} parent=0 // pred_region
    _
  $region13: #{paligemma_forward.16} parent=0 // pred_fallthru
    _
  // Predicated region
  $region14: #{paligemma_forward.16} parent=0 // pred_check
    _
  $region15: #{paligemma_forward.16} parent=0 // pred_check_branch
    %17 = sbr.rel (0) target = $region17
  $region16: #{paligemma_forward.16} parent=0 // pred_region
    _
  $region17: #{paligemma_forward.16} parent=0 // pred_fallthru
    _
  // Predicated region
  $region18: #{paligemma_forward.16} parent=0 // pred_check
    _
  $region19: #{paligemma_forward.16} parent=0 // pred_check_branch
    %19 = sbr.rel (0) target = $region21
  $region20: #{paligemma_forward.16} parent=0 // pred_region
    _
  $region21: #{paligemma_forward.16} parent=0 // pred_fallthru
    _
  %p21 = scmp.eq.s32.totalorder 0, 0
  // Predicated region
  $region22: #{paligemma_forward.16} parent=0 // pred_check
    %p22 = pneg %p21
  $region23: #{paligemma_forward.16} parent=0 // pred_check_branch
    %24 = sbr.rel (%p22) target = $region25
  $region24: #{paligemma_forward.16} parent=0 // pred_region
    %v25 = vld [vmem:[%s0] sm:$0x3]
    %v26 = vunpack.c.l.bf16 %v25
    %vm27 = vcmask 257024
    %v28 = vsel %vm27, %v26, 0.0
    %29 = vadd.xlane.f32.xlu0 %v28
    %v30 = vpop.xlane.xlu0 %29
    %v31 = vrcp.pop 32.0
    %v32 = vmul.f32 %v30, %v31
    %v33 = vsub.f32 %v26, %v32
    %v34 = vmul.f32 %v33, %v33
    %v35 = vsel %vm27, %v34, 0.0
    %36 = vadd.xlane.f32.xlu0 %v35
    %v37 = vpop.xlane.xlu0 %36
    %v38 = vmul.f32 %v37, %v31
    %v39 = vadd.f32 %v38, 1e-06
    %v40 = vrsqrt.pop %v39
    %v41 = vmul.f32 %v33, %v40
    %v42 = vld [vmem:[%s1] sm:$0x1]
    %v43 = vunpack.c.l.bf16 %v42
    %v44 = vlaneseq
    %v45 = vshrl.u32 %v44, 7
    %v46 = vsub.s32 0, %v45
    %v47 = vrot.slane %v43, %v46
    %v48 = vmul.f32 %v41, %v47
    %v49 = vld [vmem:[%s2] sm:$0x1]
    %v50 = vunpack.c.l.bf16 %v49
    %v51 = vlaneseq
    %v52 = vshrl.u32 %v51, 7
    %v53 = vsub.s32 0, %v52
    %v54 = vrot.slane %v50, %v53
    %v55 = vadd.f32 %v48, %v54
    %v56 = vpack.c.bf16 %v55, %v55
    %vm57 = vcmask 254976
    %58 = vst.msk [vmem:[#allocation2] sm:$0x3] %vm57, %v56
  $region25: #{paligemma_forward.16} parent=0 // pred_fallthru
    _
  %v59 = vld [vmem:[#allocation2] sm:$0x3]
  %v60 = vld [vmem:[%s3] sm:$0xf]
  %v61 = vld [vmem:[%s3 + $0x4] sm:$0xf]
  %v62 = vld [vmem:[%s3 + $0x8] sm:$0xf]
  %v63 = vld [vmem:[%s3 + $0xc] sm:$0xf]
  %v64 = vld [vmem:[%s4] sm:$0x1]
  %v65 = vunpack.c.l.bf16 %v64
  %v66 = vlaneseq
  %v67 = vshrl.u32 %v66, 7
  %v68 = vsub.s32 0, %v67
  %v69 = vrot.slane %v65, %v68
  %v74 = vunpack.c.l.b16 %v60
  %v75 = vunpack.c.l.b16 %v61
  %v76 = vunpack.c.l.b16 %v62
  %v77 = vunpack.c.l.b16 %v63
  %v78 = vpack.c.b16 %v75, %v74
  %v79 = vpack.c.b16 %v77, %v76
  %vm82 = vcmask 261120
  %v84 = vsel %vm82, %v59, 0
  %86 = vmatprep.subr.bf16.mxu0 0
  %87 = vmatpush1.bf16.msra.mxu0 %v78
  %88 = vmatprep.subr.bf16.mxu0 0
  %89 = vmatpush1.bf16.msra.mxu0 %v79
  %90 = vmatprep.subr.bf16.mxu0 0
  %91 = vmatpush1.bf16.msra.mxu0 0
  %92 = vmatprep.subr.bf16.mxu0 0
  %93 = vmatpush1.bf16.msra.mxu0 0
  %94 = vmatprep.subr.bf16.mxu0 0
  %95 = vmatpush1.bf16.msra.mxu0 0
  %96 = vmatprep.subr.bf16.mxu0 0
  %97 = vmatpush1.bf16.msra.mxu0 0
  %98 = vmatprep.subr.bf16.mxu0 0
  %99 = vmatpush1.bf16.msra.mxu0 0
  %100 = vmatprep.subr.bf16.mxu0 0
  %101 = vmatpush1.bf16.msra.mxu0 0
  %102 = vmatprep.subr.bf16.mxu0 0
  %103 = vmatpush1.bf16.msra.mxu0 0
  %104 = vmatprep.subr.bf16.mxu0 0
  %105 = vmatpush1.bf16.msra.mxu0 0
  %106 = vmatprep.subr.bf16.mxu0 0
  %107 = vmatpush1.bf16.msra.mxu0 0
  %108 = vmatprep.subr.bf16.mxu0 0
  %109 = vmatpush1.bf16.msra.mxu0 0
  %110 = vmatprep.subr.bf16.mxu0 0
  %111 = vmatpush1.bf16.msra.mxu0 0
  %112 = vmatprep.subr.bf16.mxu0 0
  %113 = vmatpush1.bf16.msra.mxu0 0
  %114 = vmatprep.subr.bf16.mxu0 0
  %115 = vmatpush1.bf16.msra.mxu0 0
  %116 = vmatprep.subr.bf16.mxu0 0
  %117 = vmatpush1.bf16.msra.mxu0 0
  %118 = vmatprep.mubr.bf16.mxu0 0
  %119 = vmatmul.mubr.bf16.gmra.mrb[0].mxu0 %v84
  %v120 = vpop.f32.mrb[0].mxu0
  %v121 = vadd.f32 %v69, %v120
  %v122 = vpop.f32.mrb[0].mxu0
  %v123 = vpop.f32.mrb[0].mxu0
  %v124 = vpop.f32.mrb[0].mxu0
  %125 = vdwg.mxu0
  %v126 = vpack.c.bf16 %v121, %v121
  %vm127 = vcmask 779264
  %128 = vst.msk [vmem:[%s5] sm:$0x3] %vm127, %v126
  // Predicated region
  $region26: #{paligemma_forward.16} parent=0 // pred_check
    _
  $region27: #{paligemma_forward.16} parent=0 // pred_check_branch
    %130 = sbr.rel (0) target = $region29
  $region28: #{paligemma_forward.16} parent=0 // pred_region
    _
  $region29: #{paligemma_forward.16} parent=0 // pred_fallthru
    _
  // Predicated region
  $region30: #{paligemma_forward.16} parent=0 // pred_check
    _
  $region31: #{paligemma_forward.16} parent=0 // pred_check_branch
    %132 = sbr.rel (0) target = $region33
  $region32: #{paligemma_forward.16} parent=0 // pred_region
    _
  $region33: #{paligemma_forward.16} parent=0 // pred_fallthru
    _

// kernel: paligemma_forward.17
$region0: #{paligemma_forward.17}
  #allocation0 [shape = 'u32[]', space=smem, size = 0x4, offset = 0x4, fixed_abs, tag = 'smem constant byte address 0x4 - core index']
  #allocation1 [shape = 'u32[144,128]{1,0:T(1,128)}', space=vmem, size = 0x12000, scoped, tag = 'internal scratch']
  #allocation2 [shape = 'f32[4,1]{1,0:T(4,128)}', space=vmem, size = 0x800, scoped, tag = 'scratch operand']
  #allocation3 [shape = 'f32[4,1]{1,0:T(4,128)}', space=vmem, size = 0x800, scoped, tag = 'scratch operand']
  #allocation4 [shape = 'f32[4,8]{1,0:T(4,128)}', space=vmem, size = 0x800, scoped, tag = 'scratch operand']
  %s0 = inlined_call_operand.vmem [shape: bf16[4,4,8], index: 0, kind: input, shape index: {}]
  %s1 = inlined_call_operand.vmem [shape: bf16[4,4,8], index: 1, kind: input, shape index: {}]
  %s2 = inlined_call_operand.vmem [shape: bf16[4,4,8], index: 2, kind: input, shape index: {}]
  %s3 = inlined_call_operand.vmem [shape: bf16[4,4,8], index: 3, kind: output, shape index: {}]
  %s4 = sld [smem:[#allocation0]]
  $region53: #{paligemma_forward.17} parent=0
    _
  %s6 = ssub.s32 1, %s4
  %s7 = scalar_select 0, %s6, %s4
  loop: start=0, step=1, limit=6
  $region2: #{paligemma_forward.17} parent=0 // loop_pre_header
    _
  $region3: #{paligemma_forward.17} parent=0 // loop_header
    %s9 = sphi 0, %s13
    %p10 = scmp.ge.s32.totalorder %s9, 6
    %s16 = sphi 0, %s35
    %s17 = sphi 0, %s31
    %s18 = sphi 0, %s27
    %s19 = sphi 0, %s16
    %s20 = sphi 0, %s17
    %s21 = sphi 0, %s18
    %s22 = sphi 0, %s19
    %s23 = sphi 0, %s20
    %s24 = sphi 0, %s21
    %s40 = sphi 0, %s42
    %s43 = sphi 0, %s40
    %s44 = sphi 0, %s43
    %s60 = sphi 0, %s44
    %s68 = sphi 0, %s70
    %s71 = sphi 0, %s68
    %s72 = sphi 0, %s71
    %s88 = sphi 0, %s72
    %s96 = sphi 0, %s98
    %s99 = sphi 0, %s96
    %s100 = sphi 0, %s99
    %s116 = sphi 0, %s100
    %s124 = sphi 0, %s126
    %s127 = sphi 0, %s124
    %s128 = sphi 0, %s127
    %s144 = sphi 0, %s128
  $region4: #{paligemma_forward.17} parent=0 // loop_header_branch
    %12 = sbr.rel (%p10) target = $region8
  $region5: #{paligemma_forward.17} parent=0 // loop_body
    %s14 = ssub.s32 %s9, 1
    %s15 = ssub.s32 %s9, 2
    %s25 = sadd.s32 1, %s18
    %p26 = scmp.ge.s32.totalorder %s25, 1
    %s27 = scalar_select %p26, 0, %s25
    %s28 = sadd.s32 1, %s17
    %s29 = scalar_select %p26, %s28, %s17
    %p30 = scmp.ge.s32.totalorder %s29, 1
    %s31 = scalar_select %p30, 0, %s29
    %s32 = sadd.s32 1, %s16
    %s33 = scalar_select %p30, %s32, %s16
    %p34 = scmp.ge.s32.totalorder %s33, 4
    %s35 = scalar_select %p34, 0, %s33
    %s36 = ssub.s32 %s16, %s35
    %s37 = ssub.s32 %s17, %s31
    %s38 = sor.u32 %s36, %s37
    %p39 = scmp.eq.s32.totalorder %s38, 0
    %s41 = sadd.s32 %s40, 1
    %s42 = scalar_select %p39, %s40, %s41
    %p45 = pneg %p39
    %p46 = scmp.eq.s32.totalorder %s9, 3
    %p47 = por %p45, %p46
    %p48 = scmp.ne.s32.totalorder %s40, %s43
    %p49 = scmp.eq.s32.totalorder %s9, 0
    %p50 = por %p48, %p49
    %p51 = scmp.ne.s32.totalorder %s40, %s43
    %p52 = scmp.eq.s32.totalorder %s14, 3
    %p53 = por %p51, %p52
    %p54 = scmp.ne.s32.totalorder %s43, %s44
    %p55 = scmp.eq.s32.totalorder %s14, 0
    %p56 = por %p54, %p55
    %p57 = scmp.ne.s32.totalorder %s43, %s44
    %p58 = scmp.eq.s32.totalorder %s15, 3
    %p59 = por %p57, %p58
    %p61 = scmp.ne.s32.totalorder %s44, %s60
    %p62 = scmp.eq.s32.totalorder %s15, 0
    %p63 = por %p61, %p62
    %s64 = ssub.s32 %s16, %s35
    %s65 = ssub.s32 %s18, %s27
    %s66 = sor.u32 %s64, %s65
    %p67 = scmp.eq.s32.totalorder %s66, 0
    %s69 = sadd.s32 %s68, 1
    %s70 = scalar_select %p67, %s68, %s69
    %p73 = pneg %p67
    %p74 = scmp.eq.s32.totalorder %s9, 3
    %p75 = por %p73, %p74
    %p76 = scmp.ne.s32.totalorder %s68, %s71
    %p77 = scmp.eq.s32.totalorder %s9, 0
    %p78 = por %p76, %p77
    %p79 = scmp.ne.s32.totalorder %s68, %s71
    %p80 = scmp.eq.s32.totalorder %s14, 3
    %p81 = por %p79, %p80
    %p82 = scmp.ne.s32.totalorder %s71, %s72
    %p83 = scmp.eq.s32.totalorder %s14, 0
    %p84 = por %p82, %p83
    %p85 = scmp.ne.s32.totalorder %s71, %s72
    %p86 = scmp.eq.s32.totalorder %s15, 3
    %p87 = por %p85, %p86
    %p89 = scmp.ne.s32.totalorder %s72, %s88
    %p90 = scmp.eq.s32.totalorder %s15, 0
    %p91 = por %p89, %p90
    %s92 = ssub.s32 %s16, %s35
    %s93 = ssub.s32 %s18, %s27
    %s94 = sor.u32 %s92, %s93
    %p95 = scmp.eq.s32.totalorder %s94, 0
    %s97 = sadd.s32 %s96, 1
    %s98 = scalar_select %p95, %s96, %s97
    %p101 = pneg %p95
    %p102 = scmp.eq.s32.totalorder %s9, 3
    %p103 = por %p101, %p102
    %p104 = scmp.ne.s32.totalorder %s96, %s99
    %p105 = scmp.eq.s32.totalorder %s9, 0
    %p106 = por %p104, %p105
    %p107 = scmp.ne.s32.totalorder %s96, %s99
    %p108 = scmp.eq.s32.totalorder %s14, 3
    %p109 = por %p107, %p108
    %p110 = scmp.ne.s32.totalorder %s99, %s100
    %p111 = scmp.eq.s32.totalorder %s14, 0
    %p112 = por %p110, %p111
    %p113 = scmp.ne.s32.totalorder %s99, %s100
    %p114 = scmp.eq.s32.totalorder %s15, 3
    %p115 = por %p113, %p114
    %p117 = scmp.ne.s32.totalorder %s100, %s116
    %p118 = scmp.eq.s32.totalorder %s15, 0
    %p119 = por %p117, %p118
    %s120 = ssub.s32 %s16, %s35
    %s121 = ssub.s32 %s17, %s31
    %s122 = sor.u32 %s120, %s121
    %p123 = scmp.eq.s32.totalorder %s122, 0
    %s125 = sadd.s32 %s124, 1
    %s126 = scalar_select %p123, %s124, %s125
    %p129 = pneg %p123
    %p130 = scmp.eq.s32.totalorder %s9, 3
    %p131 = por %p129, %p130
    %p132 = scmp.ne.s32.totalorder %s124, %s127
    %p133 = scmp.eq.s32.totalorder %s9, 0
    %p134 = por %p132, %p133
    %p135 = scmp.ne.s32.totalorder %s124, %s127
    %p136 = scmp.eq.s32.totalorder %s14, 3
    %p137 = por %p135, %p136
    %p138 = scmp.ne.s32.totalorder %s127, %s128
    %p139 = scmp.eq.s32.totalorder %s14, 0
    %p140 = por %p138, %p139
    %p141 = scmp.ne.s32.totalorder %s127, %s128
    %p142 = scmp.eq.s32.totalorder %s15, 3
    %p143 = por %p141, %p142
    %p145 = scmp.ne.s32.totalorder %s128, %s144
    %p146 = scmp.eq.s32.totalorder %s15, 0
    %p147 = por %p145, %p146
    %p148 = scmp.le.s32.totalorder 1, %s9
    %p149 = scmp.lt.s32.totalorder %s9, 5
    %p150 = pnand %p148, %p149
    %p151 = pneg %p150
    // Predicated region
    $region9: #{paligemma_forward.17} parent=5 // pred_check
      _
    $region10: #{paligemma_forward.17} parent=5 // pred_check_branch
      %153 = sbr.rel (%p150) target = $region12
    $region11: #{paligemma_forward.17} parent=5 // pred_region
      %s154 = ssub.s32 %s9, 1
    $region12: #{paligemma_forward.17} parent=5 // pred_fallthru
      _
    %p155 = scmp.lt.s32.totalorder %s9, 4
    // Predicated region
    $region13: #{paligemma_forward.17} parent=5 // pred_check
      %p156 = pneg %p155
    $region14: #{paligemma_forward.17} parent=5 // pred_check_branch
      %158 = sbr.rel (%p156) target = $region16
    $region15: #{paligemma_forward.17} parent=5 // pred_region
      // Predicated region
      $region17: #{paligemma_forward.17} parent=15 // pred_check
        %p159 = pneg %p50
      $region18: #{paligemma_forward.17} parent=15 // pred_check_branch
        %161 = sbr.rel (%p159) target = $region20
      $region19: #{paligemma_forward.17} parent=15 // pred_region
        %p162 = scmp.lt.s32.totalorder %s16, 3
        %s163 = scalar_select %p162, %s16, 3
        %p164 = scmp.lt.s32.totalorder %s17, 0
        %s165 = scalar_select %p164, %s17, 0
        %s166 = sadd.s32 %s165, %s163
        %s167 = smul.addr %s166, 2
        %s168 = scalar_lea.vmem %s0, %s167
      $region20: #{paligemma_forward.17} parent=15 // pred_fallthru
        _
      // Predicated region
      $region21: #{paligemma_forward.17} parent=15 // pred_check
        %p169 = pneg %p78
      $region22: #{paligemma_forward.17} parent=15 // pred_check_branch
        %171 = sbr.rel (%p169) target = $region24
      $region23: #{paligemma_forward.17} parent=15 // pred_region
        %p172 = scmp.lt.s32.totalorder %s16, 3
        %s173 = scalar_select %p172, %s16, 3
        %p174 = scmp.lt.s32.totalorder %s18, 0
        %s175 = scalar_select %p174, %s18, 0
        %s176 = sadd.s32 %s175, %s173
        %s177 = smul.addr %s176, 2
        %s178 = scalar_lea.vmem %s1, %s177
      $region24: #{paligemma_forward.17} parent=15 // pred_fallthru
        _
      // Predicated region
      $region25: #{paligemma_forward.17} parent=15 // pred_check
        %p179 = pneg %p106
      $region26: #{paligemma_forward.17} parent=15 // pred_check_branch
        %181 = sbr.rel (%p179) target = $region28
      $region27: #{paligemma_forward.17} parent=15 // pred_region
        %p182 = scmp.lt.s32.totalorder %s16, 3
        %s183 = scalar_select %p182, %s16, 3
        %p184 = scmp.lt.s32.totalorder %s18, 0
        %s185 = scalar_select %p184, %s18, 0
        %s186 = sadd.s32 %s185, %s183
        %s187 = smul.addr %s186, 2
        %s188 = scalar_lea.vmem %s2, %s187
      $region28: #{paligemma_forward.17} parent=15 // pred_fallthru
        _
    $region16: #{paligemma_forward.17} parent=5 // pred_fallthru
      _
    %p189 = scmp.le.s32.totalorder 1, %s9
    %p190 = scmp.lt.s32.totalorder %s9, 5
    %p191 = pnand %p189, %p190
    %p192 = pneg %p191
    // Predicated region
    $region29: #{paligemma_forward.17} parent=5 // pred_check
      _
    $region30: #{paligemma_forward.17} parent=5 // pred_check_branch
      %194 = sbr.rel (%p191) target = $region32
    $region31: #{paligemma_forward.17} parent=5 // pred_region
      %s195 = ssub.s32 %s9, 1
      %p196 = scmp.lt.s32.totalorder %s19, 3
      %s197 = scalar_select %p196, %s19, 3
      %p198 = scmp.lt.s32.totalorder %s20, 0
      %s199 = scalar_select %p198, %s20, 0
      %s200 = sadd.s32 %s199, %s197
      %s201 = smul.addr %s200, 2
      %s202 = scalar_lea.vmem %s0, %s201
      %p203 = pneg %p56
      %p204 = pneg %p53
      %p205 = scmp.lt.s32.totalorder %s19, 3
      %s206 = scalar_select %p205, %s19, 3
      %p207 = scmp.lt.s32.totalorder %s21, 0
      %s208 = scalar_select %p207, %s21, 0
      %s209 = sadd.s32 %s208, %s206
      %s210 = smul.addr %s209, 2
      %s211 = scalar_lea.vmem %s1, %s210
      %p212 = pneg %p84
      %p213 = pneg %p81
      %p214 = scmp.lt.s32.totalorder %s19, 3
      %s215 = scalar_select %p214, %s19, 3
      %p216 = scmp.lt.s32.totalorder %s21, 0
      %s217 = scalar_select %p216, %s21, 0
      %s218 = sadd.s32 %s217, %s215
      %s219 = smul.addr %s218, 2
      %s220 = scalar_lea.vmem %s2, %s219
      %p221 = pneg %p112
      %p222 = pneg %p109
      %p223 = pneg %p140
      %p224 = pneg %p137
      %p225 = scmp.lt.s32.totalorder %s19, 3
      %s226 = scalar_select %p225, %s19, 3
      %p227 = scmp.lt.s32.totalorder %s20, 0
      %s228 = scalar_select %p227, %s20, 0
      %s229 = sadd.s32 %s228, %s226
      %s230 = smul.addr %s229, 2
      %s231 = scalar_lea.vmem %s3, %s230
      %p232 = scmp.lt.s32.totalorder %s19, 3
      %s233 = scalar_select %p232, %s19, 3
      %p234 = scmp.lt.s32.totalorder %s20, 0
      %s235 = scalar_select %p234, %s20, 0
      %s236 = sadd.s32 %s235, %s233
      %s237 = smul.addr %s236, 2
      %s238 = scalar_lea.vmem %s0, %s237
      %p239 = scmp.lt.s32.totalorder %s19, 3
      %s240 = scalar_select %p239, %s19, 3
      %p241 = scmp.lt.s32.totalorder %s21, 0
      %s242 = scalar_select %p241, %s21, 0
      %s243 = sadd.s32 %s242, %s240
      %s244 = smul.addr %s243, 2
      %s245 = scalar_lea.vmem %s1, %s244
      %p246 = scmp.lt.s32.totalorder %s19, 3
      %s247 = scalar_select %p246, %s19, 3
      %p248 = scmp.lt.s32.totalorder %s21, 0
      %s249 = scalar_select %p248, %s21, 0
      %s250 = sadd.s32 %s249, %s247
      %s251 = smul.addr %s250, 2
      %s252 = scalar_lea.vmem %s2, %s251
      %p253 = scmp.lt.s32.totalorder %s19, 3
      %s254 = scalar_select %p253, %s19, 3
      %p255 = scmp.lt.s32.totalorder %s20, 0
      %s256 = scalar_select %p255, %s20, 0
      %s257 = sadd.s32 %s256, %s254
      %s258 = smul.addr %s257, 2
      %s259 = scalar_lea.vmem %s3, %s258
      %p261 = scmp.eq.s32.totalorder %s21, 0
      // Predicated region
      $region33: #{paligemma_forward.17} parent=31 // pred_check
        %p262 = pneg %p261
      $region34: #{paligemma_forward.17} parent=31 // pred_check_branch
        %264 = sbr.rel (%p262) target = $region36
      $region35: #{paligemma_forward.17} parent=31 // pred_region
        %vm265 = vcmask 3072
        %266 = vst.msk [vmem:[#allocation2] sm:$0xf] %vm265, -inf
        %267 = vst.msk [vmem:[#allocation3] sm:$0xf] %vm265, 0.0
        %vm268 = vcmask 60416
        %269 = vst.msk [vmem:[#allocation4] sm:$0xf] %vm268, 0.0
      $region36: #{paligemma_forward.17} parent=31 // pred_fallthru
        _
      %v270 = vld [vmem:[%s238] sm:$0x3]
      %v271 = vld [vmem:[%s245] sm:$0x3]
      %v272 = vld [vmem:[%s252] sm:$0x3]
      %vm273 = vcmask 64512
      %v275 = vsel %vm273, %v270, 0
      %v278 = vsel %vm273, %v271, 0
      %280 = vmatprep.subr.bf16.mxu0 0
      %281 = vmatpush1.bf16.xpose.msra.mxu0 %v278
      %282 = vmatprep.subr.bf16.mxu0 0
      %283 = vmatpush1.bf16.xpose.msra.mxu0 0
      %284 = vmatprep.subr.bf16.mxu0 0
      %285 = vmatpush1.bf16.xpose.msra.mxu0 0
      %286 = vmatprep.subr.bf16.mxu0 0
      %287 = vmatpush1.bf16.xpose.msra.mxu0 0
      %288 = vmatprep.subr.bf16.mxu0 0
      %289 = vmatpush1.bf16.xpose.msra.mxu0 0
      %290 = vmatprep.subr.bf16.mxu0 0
      %291 = vmatpush1.bf16.xpose.msra.mxu0 0
      %292 = vmatprep.subr.bf16.mxu0 0
      %293 = vmatpush1.bf16.xpose.msra.mxu0 0
      %294 = vmatprep.subr.bf16.mxu0 0
      %295 = vmatpush1.bf16.xpose.msra.mxu0 0
      %296 = vmatprep.subr.bf16.mxu0 0
      %297 = vmatpush1.bf16.xpose.msra.mxu0 0
      %298 = vmatprep.subr.bf16.mxu0 0
      %299 = vmatpush1.bf16.xpose.msra.mxu0 0
      %300 = vmatprep.subr.bf16.mxu0 0
      %301 = vmatpush1.bf16.xpose.msra.mxu0 0
      %302 = vmatprep.subr.bf16.mxu0 0
      %303 = vmatpush1.bf16.xpose.msra.mxu0 0
      %304 = vmatprep.subr.bf16.mxu0 0
      %305 = vmatpush1.bf16.xpose.msra.mxu0 0
      %306 = vmatprep.subr.bf16.mxu0 0
      %307 = vmatpush1.bf16.xpose.msra.mxu0 0
      %308 = vmatprep.subr.bf16.mxu0 0
      %309 = vmatpush1.bf16.xpose.msra.mxu0 0
      %310 = vmatprep.subr.bf16.mxu0 0
      %311 = vmatpush1.bf16.xpose.msra.mxu0 0
      %312 = vmatprep.mubr.bf16.mxu0 0
      %313 = vmatmul.mubr.bf16.gmra.mrb[0].mxu0 %v275
      %v314 = vpop.f32.mrb[0].mxu0
      %v315 = vadd.f32 0.0, %v314
      %v316 = vpop.f32.mrb[0].mxu0
      %v317 = vpop.f32.mrb[0].mxu0
      %v318 = vpop.f32.mrb[0].mxu0
      %319 = vdwg.mxu0
      %v320 = vmul.f32 %v315, 0.35355338
      %v321 = vld [vmem:[#allocation2] sm:$0xf]
      %vm322 = vcmask 27648
      %v323 = vsel %vm322, %v320, -inf
      %324 = vmax.xlane.f32.xlu0 %v323
      %v325 = vpop.xlane.xlu0 %324
      %v326 = vmax.f32 %v321, %v325
      %v327 = vsub.f32 %v321, %v326
      %v328 = vmul.f32 %v327, 1.442695
      %v329 = vpow.pop %v328
      %331 = vset.pattern.permute.xlu0 0
      %332 = vperm.xlu0 %331, %v326
      %v333 = vpop.permute.xlu0 %332
      %v335 = vsub.f32 %v320, %v333
      %v336 = vmul.f32 %v335, 1.442695
      %v337 = vpow.pop %v336
      %v338 = vld [vmem:[#allocation3] sm:$0xf]
      %v339 = vmul.f32 %v329, %v338
      %v340 = vsel %vm322, %v337, 0.0
      %341 = vadd.xlane.f32.xlu0 %v340
      %v342 = vpop.xlane.xlu0 %341
      %v343 = vadd.f32 %v339, %v342
      %vm344 = vcmask 3072
      %345 = vst.msk [vmem:[#allocation3] sm:$0xf] %vm344, %v343
      %v346 = vld [vmem:[#allocation4] sm:$0xf]
      %348 = vset.pattern.permute.xlu0 0
      %349 = vperm.xlu0 %348, %v329
      %v350 = vpop.permute.xlu0 %349
      %v352 = vmul.f32 %v350, %v346
      %v353 = vpack.c.bf16 %v337, %v337
      %vm354 = vcmask 31744
      %v356 = vsel %vm354, %v353, 0
      %vm358 = vcmask 1041408
      %v360 = vsel %vm358, %v272, 0
      %362 = vmatprep.subr.bf16.mxu0 0
      %363 = vmatpush1.bf16.msra.mxu0 %v360
      %364 = vmatprep.subr.bf16.mxu0 0
      %365 = vmatpush1.bf16.msra.mxu0 0
      %366 = vmatprep.subr.bf16.mxu0 0
      %367 = vmatpush1.bf16.msra.mxu0 0
      %368 = vmatprep.subr.bf16.mxu0 0
      %369 = vmatpush1.bf16.msra.mxu0 0
      %370 = vmatprep.subr.bf16.mxu0 0
      %371 = vmatpush1.bf16.msra.mxu0 0
      %372 = vmatprep.subr.bf16.mxu0 0
      %373 = vmatpush1.bf16.msra.mxu0 0
      %374 = vmatprep.subr.bf16.mxu0 0
      %375 = vmatpush1.bf16.msra.mxu0 0
      %376 = vmatprep.subr.bf16.mxu0 0
      %377 = vmatpush1.bf16.msra.mxu0 0
      %378 = vmatprep.subr.bf16.mxu0 0
      %379 = vmatpush1.bf16.msra.mxu0 0
      %380 = vmatprep.subr.bf16.mxu0 0
      %381 = vmatpush1.bf16.msra.mxu0 0
      %382 = vmatprep.subr.bf16.mxu0 0
      %383 = vmatpush1.bf16.msra.mxu0 0
      %384 = vmatprep.subr.bf16.mxu0 0
      %385 = vmatpush1.bf16.msra.mxu0 0
      %386 = vmatprep.subr.bf16.mxu0 0
      %387 = vmatpush1.bf16.msra.mxu0 0
      %388 = vmatprep.subr.bf16.mxu0 0
      %389 = vmatpush1.bf16.msra.mxu0 0
      %390 = vmatprep.subr.bf16.mxu0 0
      %391 = vmatpush1.bf16.msra.mxu0 0
      %392 = vmatprep.subr.bf16.mxu0 0
      %393 = vmatpush1.bf16.msra.mxu0 0
      %394 = vmatprep.mubr.bf16.mxu0 0
      %395 = vmatmul.mubr.bf16.gmra.mrb[0].mxu0 %v356
      %v396 = vpop.f32.mrb[0].mxu0
      %v397 = vadd.f32 0.0, %v396
      %v398 = vpop.f32.mrb[0].mxu0
      %v399 = vpop.f32.mrb[0].mxu0
      %v400 = vpop.f32.mrb[0].mxu0
      %401 = vdwg.mxu0
      %v402 = vadd.f32 %v352, %v397
      %vm403 = vcmask 60416
      %404 = vst.msk [vmem:[#allocation4] sm:$0xf] %vm403, %v402
      %405 = vst.msk [vmem:[#allocation2] sm:$0xf] %vm344, %v326
      // Predicated region
      $region37: #{paligemma_forward.17} parent=31 // pred_check
        %p406 = pneg %p261
      $region38: #{paligemma_forward.17} parent=31 // pred_check_branch
        %408 = sbr.rel (%p406) target = $region40
      $region39: #{paligemma_forward.17} parent=31 // pred_region
        %v409 = vld [vmem:[#allocation4] sm:$0xf]
        %v410 = vld [vmem:[#allocation3] sm:$0xf]
        %v411 = vrcp.pop %v410
        %413 = vset.pattern.permute.xlu0 0
        %414 = vperm.xlu0 %413, %v411
        %v415 = vpop.permute.xlu0 %414
        %v417 = vmul.f32 %v409, %v415
        %v418 = vpack.c.bf16 %v417, %v417
        %vm419 = vcmask 58368
        %420 = vst.msk [vmem:[%s259] sm:$0x3] %vm419, %v418
      $region40: #{paligemma_forward.17} parent=31 // pred_fallthru
        _
      %p421 = scmp.lt.s32.totalorder %s19, 3
      %s422 = scalar_select %p421, %s19, 3
      %p423 = scmp.lt.s32.totalorder %s20, 0
      %s424 = scalar_select %p423, %s20, 0
      %s425 = sadd.s32 %s424, %s422
      %s426 = smul.addr %s425, 2
      %s427 = scalar_lea.vmem %s3, %s426
      // Predicated region
      $region41: #{paligemma_forward.17} parent=31 // pred_check
        %p428 = pneg %p137
      $region42: #{paligemma_forward.17} parent=31 // pred_check_branch
        %430 = sbr.rel (%p428) target = $region44
      $region43: #{paligemma_forward.17} parent=31 // pred_region
        _
      $region44: #{paligemma_forward.17} parent=31 // pred_fallthru
        _
    $region32: #{paligemma_forward.17} parent=5 // pred_fallthru
      _
    %p431 = scmp.le.s32.totalorder 2, %s9
    // Predicated region
    $region45: #{paligemma_forward.17} parent=5 // pred_check
      %p432 = pneg %p431
    $region46: #{paligemma_forward.17} parent=5 // pred_check_branch
      %434 = sbr.rel (%p432) target = $region48
    $region47: #{paligemma_forward.17} parent=5 // pred_region
      %s435 = ssub.s32 %s9, 2
      // Predicated region
      $region49: #{paligemma_forward.17} parent=47 // pred_check
        %p436 = pneg %p143
      $region50: #{paligemma_forward.17} parent=47 // pred_check_branch
        %438 = sbr.rel (%p436) target = $region52
      $region51: #{paligemma_forward.17} parent=47 // pred_region
        %p439 = scmp.lt.s32.totalorder %s22, 3
        %s440 = scalar_select %p439, %s22, 3
        %p441 = scmp.lt.s32.totalorder %s23, 0
        %s442 = scalar_select %p441, %s23, 0
        %s443 = sadd.s32 %s442, %s440
        %s444 = smul.addr %s443, 2
        %s445 = scalar_lea.vmem %s3, %s444
      $region52: #{paligemma_forward.17} parent=47 // pred_fallthru
        _
    $region48: #{paligemma_forward.17} parent=5 // pred_fallthru
      _
  $region6: #{paligemma_forward.17} parent=0 // loop_footer
    %s13 = sadd.s32 1, %s9
  $region7: #{paligemma_forward.17} parent=0 // loop_footer_branch
    %8 = sbr.rel target = $region3
  $region8: #{paligemma_forward.17} parent=0 // loop_exit
    _

// kernel: paligemma_forward.18
$region0: #{paligemma_forward.18}
  #allocation0 [shape = 'u32[]', space=smem, size = 0x4, offset = 0x4, fixed_abs, tag = 'smem constant byte address 0x4 - core index']
  #allocation1 [shape = 'u32[144,128]{1,0:T(1,128)}', space=vmem, size = 0x12000, scoped, tag = 'internal scratch']
  #allocation2 [shape = 'f32[4,32]{1,0:T(4,128)}', space=vmem, size = 0x800, scoped, tag = 'scratch operand']
  %s0 = inlined_call_operand.vmem [shape: bf16[4,32], index: 0, kind: input, shape index: {}]
  %s1 = inlined_call_operand.vmem [shape: bf16[32,32], index: 1, kind: input, shape index: {}]
  %s2 = inlined_call_operand.vmem [shape: bf16[1,32], index: 2, kind: input, shape index: {}]
  %s3 = inlined_call_operand.vmem [shape: bf16[4,32], index: 3, kind: input, shape index: {}]
  %s4 = inlined_call_operand.vmem [shape: bf16[4,32], index: 4, kind: output, shape index: {}]
  %s5 = sld [smem:[#allocation0]]
  $region34: #{paligemma_forward.18} parent=0
    _
  %s7 = ssub.s32 1, %s5
  %s8 = scalar_select 0, %s7, %s5
  // Predicated region
  $region2: #{paligemma_forward.18} parent=0 // pred_check
    _
  $region3: #{paligemma_forward.18} parent=0 // pred_check_branch
    %10 = sbr.rel (0) target = $region5
  $region4: #{paligemma_forward.18} parent=0 // pred_region
    _
  $region5: #{paligemma_forward.18} parent=0 // pred_fallthru
    _
  // Predicated region
  $region6: #{paligemma_forward.18} parent=0 // pred_check
    _
  $region7: #{paligemma_forward.18} parent=0 // pred_check_branch
    %12 = sbr.rel (0) target = $region9
  $region8: #{paligemma_forward.18} parent=0 // pred_region
    _
  $region9: #{paligemma_forward.18} parent=0 // pred_fallthru
    _
  // Predicated region
  $region10: #{paligemma_forward.18} parent=0 // pred_check
    _
  $region11: #{paligemma_forward.18} parent=0 // pred_check_branch
    %14 = sbr.rel (0) target = $region13
  $region12: #{paligemma_forward.18} parent=0 // pred_region
    _
  $region13: #{paligemma_forward.18} parent=0 // pred_fallthru
    _
  // Predicated region
  $region14: #{paligemma_forward.18} parent=0 // pred_check
    _
  $region15: #{paligemma_forward.18} parent=0 // pred_check_branch
    %16 = sbr.rel (0) target = $region17
  $region16: #{paligemma_forward.18} parent=0 // pred_region
    _
  $region17: #{paligemma_forward.18} parent=0 // pred_fallthru
    _
  %p18 = scmp.eq.s32.totalorder 0, 0
  // Predicated region
  $region18: #{paligemma_forward.18} parent=0 // pred_check
    %p19 = pneg %p18
  $region19: #{paligemma_forward.18} parent=0 // pred_check_branch
    %21 = sbr.rel (%p19) target = $region21
  $region20: #{paligemma_forward.18} parent=0 // pred_region
    %vm22 = vcmask 257024
    %23 = vst.msk [vmem:[#allocation2] sm:$0xf] %vm22, 0.0
  $region21: #{paligemma_forward.18} parent=0 // pred_fallthru
    _
  %v24 = vld [vmem:[#allocation2] sm:$0xf]
  %v25 = vld [vmem:[%s0] sm:$0x3]
  %v26 = vld [vmem:[%s1] sm:$0xf]
  %v27 = vld [vmem:[%s1 + $0x4] sm:$0xf]
  %v28 = vld [vmem:[%s1 + $0x8] sm:$0xf]
  %v29 = vld [vmem:[%s1 + $0xc] sm:$0xf]
  %v34 = vunpack.c.l.b16 %v26
  %v35 = vunpack.c.l.b16 %v27
  %v36 = vunpack.c.l.b16 %v28
  %v37 = vunpack.c.l.b16 %v29
  %v38 = vpack.c.b16 %v35, %v34
  %v39 = vpack.c.b16 %v37, %v36
  %vm42 = vcmask 261120
  %v44 = vsel %vm42, %v25, 0
  %46 = vmatprep.subr.bf16.mxu0 0
  %47 = vmatpush1.bf16.msra.mxu0 %v38
  %48 = vmatprep.subr.bf16.mxu0 0
  %49 = vmatpush1.bf16.msra.mxu0 %v39
  %50 = vmatprep.subr.bf16.mxu0 0
  %51 = vmatpush1.bf16.msra.mxu0 0
  %52 = vmatprep.subr.bf16.mxu0 0
  %53 = vmatpush1.bf16.msra.mxu0 0
  %54 = vmatprep.subr.bf16.mxu0 0
  %55 = vmatpush1.bf16.msra.mxu0 0
  %56 = vmatprep.subr.bf16.mxu0 0
  %57 = vmatpush1.bf16.msra.mxu0 0
  %58 = vmatprep.subr.bf16.mxu0 0
  %59 = vmatpush1.bf16.msra.mxu0 0
  %60 = vmatprep.subr.bf16.mxu0 0
  %61 = vmatpush1.bf16.msra.mxu0 0
  %62 = vmatprep.subr.bf16.mxu0 0
  %63 = vmatpush1.bf16.msra.mxu0 0
  %64 = vmatprep.subr.bf16.mxu0 0
  %65 = vmatpush1.bf16.msra.mxu0 0
  %66 = vmatprep.subr.bf16.mxu0 0
  %67 = vmatpush1.bf16.msra.mxu0 0
  %68 = vmatprep.subr.bf16.mxu0 0
  %69 = vmatpush1.bf16.msra.mxu0 0
  %70 = vmatprep.subr.bf16.mxu0 0
  %71 = vmatpush1.bf16.msra.mxu0 0
  %72 = vmatprep.subr.bf16.mxu0 0
  %73 = vmatpush1.bf16.msra.mxu0 0
  %74 = vmatprep.subr.bf16.mxu0 0
  %75 = vmatpush1.bf16.msra.mxu0 0
  %76 = vmatprep.subr.bf16.mxu0 0
  %77 = vmatpush1.bf16.msra.mxu0 0
  %78 = vmatprep.mubr.bf16.mxu0 0
  %79 = vmatmul.mubr.bf16.gmra.mrb[0].mxu0 %v44
  %v80 = vpop.f32.mrb[0].mxu0
  %v81 = vadd.f32 0.0, %v80
  %v82 = vpop.f32.mrb[0].mxu0
  %v83 = vpop.f32.mrb[0].mxu0
  %v84 = vpop.f32.mrb[0].mxu0
  %85 = vdwg.mxu0
  %v86 = vadd.f32 %v24, %v81
  %vm87 = vcmask 257024
  %88 = vst.msk [vmem:[#allocation2] sm:$0xf] %vm87, %v86
  // Predicated region
  $region22: #{paligemma_forward.18} parent=0 // pred_check
    %p89 = pneg %p18
  $region23: #{paligemma_forward.18} parent=0 // pred_check_branch
    %91 = sbr.rel (%p89) target = $region25
  $region24: #{paligemma_forward.18} parent=0 // pred_region
    %v92 = vld [vmem:[#allocation2] sm:$0xf]
    %v93 = vld [vmem:[%s2] sm:$0x1]
    %v94 = vunpack.c.l.bf16 %v93
    %v95 = vlaneseq
    %v96 = vshrl.u32 %v95, 7
    %v97 = vsub.s32 0, %v96
    %v98 = vrot.slane %v94, %v97
    %v99 = vadd.f32 %v92, %v98
    %v100 = vld [vmem:[%s3] sm:$0x3]
    %v101 = vunpack.c.l.bf16 %v100
    %v102 = vadd.f32 %v99, %v101
    %v103 = vpack.c.bf16 %v102, %v102
    %vm104 = vcmask 254976
    %105 = vst.msk [vmem:[%s4] sm:$0x3] %vm104, %v103
  $region25: #{paligemma_forward.18} parent=0 // pred_fallthru
    _
  // Predicated region
  $region26: #{paligemma_forward.18} parent=0 // pred_check
    _
  $region27: #{paligemma_forward.18} parent=0 // pred_check_branch
    %107 = sbr.rel (0) target = $region29
  $region28: #{paligemma_forward.18} parent=0 // pred_region
    _
  $region29: #{paligemma_forward.18} parent=0 // pred_fallthru
    _
  // Predicated region
  $region30: #{paligemma_forward.18} parent=0 // pred_check
    _
  $region31: #{paligemma_forward.18} parent=0 // pred_check_branch
    %109 = sbr.rel (0) target = $region33
  $region32: #{paligemma_forward.18} parent=0 // pred_region
    _
  $region33: #{paligemma_forward.18} parent=0 // pred_fallthru
    _

// kernel: paligemma_forward.19
$region0: #{paligemma_forward.19}
  #allocation0 [shape = 'u32[]', space=smem, size = 0x4, offset = 0x4, fixed_abs, tag = 'smem constant byte address 0x4 - core index']
  #allocation1 [shape = 'u32[144,128]{1,0:T(1,128)}', space=vmem, size = 0x12000, scoped, tag = 'internal scratch']
  #allocation2 [shape = 'f32[4,32]{1,0:T(4,128)}', space=vmem, size = 0x800, scoped, tag = 'scratch operand']
  #allocation3 [shape = 'bf16[4,32]{1,0:T(4,128)(2,1)}', space=vmem, size = 0x400, scoped, tag = 'scratch operand']
  %s0 = inlined_call_operand.vmem [shape: bf16[4,32], index: 0, kind: input, shape index: {}]
  %s1 = inlined_call_operand.vmem [shape: bf16[1,32], index: 1, kind: input, shape index: {}]
  %s2 = inlined_call_operand.vmem [shape: bf16[1,32], index: 2, kind: input, shape index: {}]
  %s3 = inlined_call_operand.vmem [shape: bf16[32,64], index: 3, kind: input, shape index: {}]
  %s4 = inlined_call_operand.vmem [shape: bf16[1,64], index: 4, kind: input, shape index: {}]
  %s5 = inlined_call_operand.vmem [shape: bf16[64,32], index: 5, kind: input, shape index: {}]
  %s6 = inlined_call_operand.vmem [shape: bf16[1,32], index: 6, kind: input, shape index: {}]
  %s7 = inlined_call_operand.vmem [shape: bf16[4,32], index: 7, kind: output, shape index: {}]
  %s8 = sld [smem:[#allocation0]]
  $region46: #{paligemma_forward.19} parent=0
    _
  %s10 = ssub.s32 1, %s8
  %s11 = scalar_select 0, %s10, %s8
  // Predicated region
  $region2: #{paligemma_forward.19} parent=0 // pred_check
    _
  $region3: #{paligemma_forward.19} parent=0 // pred_check_branch
    %13 = sbr.rel (0) target = $region5
  $region4: #{paligemma_forward.19} parent=0 // pred_region
    _
  $region5: #{paligemma_forward.19} parent=0 // pred_fallthru
    _
  // Predicated region
  $region6: #{paligemma_forward.19} parent=0 // pred_check
    _
  $region7: #{paligemma_forward.19} parent=0 // pred_check_branch
    %15 = sbr.rel (0) target = $region9
  $region8: #{paligemma_forward.19} parent=0 // pred_region
    _
  $region9: #{paligemma_forward.19} parent=0 // pred_fallthru
    _
  // Predicated region
  $region10: #{paligemma_forward.19} parent=0 // pred_check
    _
  $region11: #{paligemma_forward.19} parent=0 // pred_check_branch
    %17 = sbr.rel (0) target = $region13
  $region12: #{paligemma_forward.19} parent=0 // pred_region
    _
  $region13: #{paligemma_forward.19} parent=0 // pred_fallthru
    _
  // Predicated region
  $region14: #{paligemma_forward.19} parent=0 // pred_check
    _
  $region15: #{paligemma_forward.19} parent=0 // pred_check_branch
    %19 = sbr.rel (0) target = $region17
  $region16: #{paligemma_forward.19} parent=0 // pred_region
    _
  $region17: #{paligemma_forward.19} parent=0 // pred_fallthru
    _
  // Predicated region
  $region18: #{paligemma_forward.19} parent=0 // pred_check
    _
  $region19: #{paligemma_forward.19} parent=0 // pred_check_branch
    %21 = sbr.rel (0) target = $region21
  $region20: #{paligemma_forward.19} parent=0 // pred_region
    _
  $region21: #{paligemma_forward.19} parent=0 // pred_fallthru
    _
  // Predicated region
  $region22: #{paligemma_forward.19} parent=0 // pred_check
    _
  $region23: #{paligemma_forward.19} parent=0 // pred_check_branch
    %23 = sbr.rel (0) target = $region25
  $region24: #{paligemma_forward.19} parent=0 // pred_region
    _
  $region25: #{paligemma_forward.19} parent=0 // pred_fallthru
    _
  // Predicated region
  $region26: #{paligemma_forward.19} parent=0 // pred_check
    _
  $region27: #{paligemma_forward.19} parent=0 // pred_check_branch
    %25 = sbr.rel (0) target = $region29
  $region28: #{paligemma_forward.19} parent=0 // pred_region
    _
  $region29: #{paligemma_forward.19} parent=0 // pred_fallthru
    _
  %p27 = scmp.eq.s32.totalorder 0, 0
  // Predicated region
  $region30: #{paligemma_forward.19} parent=0 // pred_check
    %p28 = pneg %p27
  $region31: #{paligemma_forward.19} parent=0 // pred_check_branch
    %30 = sbr.rel (%p28) target = $region33
  $region32: #{paligemma_forward.19} parent=0 // pred_region
    %vm31 = vcmask 257024
    %32 = vst.msk [vmem:[#allocation2] sm:$0xf] %vm31, 0.0
    %v33 = vld [vmem:[%s0] sm:$0x3]
    %v34 = vunpack.c.l.bf16 %v33
    %v35 = vsel %vm31, %v34, 0.0
    %36 = vadd.xlane.f32.xlu0 %v35
    %v37 = vpop.xlane.xlu0 %36
    %v38 = vrcp.pop 32.0
    %v39 = vmul.f32 %v37, %v38
    %v40 = vsub.f32 %v34, %v39
    %v41 = vmul.f32 %v40, %v40
    %v42 = vsel %vm31, %v41, 0.0
    %43 = vadd.xlane.f32.xlu0 %v42
    %v44 = vpop.xlane.xlu0 %43
    %v45 = vmul.f32 %v44, %v38
    %v46 = vadd.f32 %v45, 1e-06
    %v47 = vrsqrt.pop %v46
    %v48 = vmul.f32 %v40, %v47
    %v49 = vld [vmem:[%s1] sm:$0x1]
    %v50 = vunpack.c.l.bf16 %v49
    %v51 = vlaneseq
    %v52 = vshrl.u32 %v51, 7
    %v53 = vsub.s32 0, %v52
    %v54 = vrot.slane %v50, %v53
    %v55 = vmul.f32 %v48, %v54
    %v56 = vld [vmem:[%s2] sm:$0x1]
    %v57 = vunpack.c.l.bf16 %v56
    %v58 = vlaneseq
    %v59 = vshrl.u32 %v58, 7
    %v60 = vsub.s32 0, %v59
    %v61 = vrot.slane %v57, %v60
    %v62 = vadd.f32 %v55, %v61
    %v63 = vpack.c.bf16 %v62, %v62
    %vm64 = vcmask 254976
    %65 = vst.msk [vmem:[#allocation3] sm:$0x3] %vm64, %v63
  $region33: #{paligemma_forward.19} parent=0 // pred_fallthru
    _
  %v66 = vld [vmem:[#allocation3] sm:$0x3]
  %v67 = vld [vmem:[%s3] sm:$0xf]
  %v68 = vld [vmem:[%s3 + $0x4] sm:$0xf]
  %v69 = vld [vmem:[%s3 + $0x8] sm:$0xf]
  %v70 = vld [vmem:[%s3 + $0xc] sm:$0xf]
  %v71 = vld [vmem:[%s4] sm:$0x1]
  %v72 = vunpack.c.l.bf16 %v71
  %v73 = vlaneseq
  %v74 = vshrl.u32 %v73, 7
  %v75 = vsub.s32 0, %v74
  %v76 = vrot.slane %v72, %v75
  %v81 = vunpack.c.l.b16 %v67
  %v82 = vunpack.c.l.b16 %v68
  %v83 = vunpack.c.l.b16 %v69
  %v84 = vunpack.c.l.b16 %v70
  %v85 = vpack.c.b16 %v82, %v81
  %v86 = vpack.c.b16 %v84, %v83
  %vm89 = vcmask 261120
  %v91 = vsel %vm89, %v66, 0
  %93 = vmatprep.subr.bf16.mxu0 0
  %94 = vmatpush1.bf16.msra.mxu0 %v85
  %95 = vmatprep.subr.bf16.mxu0 0
  %96 = vmatpush1.bf16.msra.mxu0 %v86
  %97 = vmatprep.subr.bf16.mxu0 0
  %98 = vmatpush1.bf16.msra.mxu0 0
  %99 = vmatprep.subr.bf16.mxu0 0
  %100 = vmatpush1.bf16.msra.mxu0 0
  %101 = vmatprep.subr.bf16.mxu0 0
  %102 = vmatpush1.bf16.msra.mxu0 0
  %103 = vmatprep.subr.bf16.mxu0 0
  %104 = vmatpush1.bf16.msra.mxu0 0
  %105 = vmatprep.subr.bf16.mxu0 0
  %106 = vmatpush1.bf16.msra.mxu0 0
  %107 = vmatprep.subr.bf16.mxu0 0
  %108 = vmatpush1.bf16.msra.mxu0 0
  %109 = vmatprep.subr.bf16.mxu0 0
  %110 = vmatpush1.bf16.msra.mxu0 0
  %111 = vmatprep.subr.bf16.mxu0 0
  %112 = vmatpush1.bf16.msra.mxu0 0
  %113 = vmatprep.subr.bf16.mxu0 0
  %114 = vmatpush1.bf16.msra.mxu0 0
  %115 = vmatprep.subr.bf16.mxu0 0
  %116 = vmatpush1.bf16.msra.mxu0 0
  %117 = vmatprep.subr.bf16.mxu0 0
  %118 = vmatpush1.bf16.msra.mxu0 0
  %119 = vmatprep.subr.bf16.mxu0 0
  %120 = vmatpush1.bf16.msra.mxu0 0
  %121 = vmatprep.subr.bf16.mxu0 0
  %122 = vmatpush1.bf16.msra.mxu0 0
  %123 = vmatprep.subr.bf16.mxu0 0
  %124 = vmatpush1.bf16.msra.mxu0 0
  %125 = vmatprep.mubr.bf16.mxu0 0
  %126 = vmatmul.mubr.bf16.gmra.mrb[0].mxu0 %v91
  %v127 = vpop.f32.mrb[0].mxu0
  %v128 = vadd.f32 %v76, %v127
  %v129 = vpop.f32.mrb[0].mxu0
  %v130 = vpop.f32.mrb[0].mxu0
  %v131 = vpop.f32.mrb[0].mxu0
  %132 = vdwg.mxu0
  %v133 = vmul.f32 %v128, %v128
  %v134 = vmul.f32 %v128, %v133
  %v135 = vmul.f32 %v134, 0.044715
  %v136 = vadd.f32 %v128, %v135
  %v137 = vmul.f32 %v136, 0.7978846
  %v138 = vtanh.pop %v137
  %v139 = vadd.f32 %v138, 1.0
  %v140 = vmul.f32 %v139, 0.5
  %v141 = vmul.f32 %v128, %v140
  %v142 = vld [vmem:[#allocation2] sm:$0xf]
  %v143 = vpack.c.bf16 %v141, %v141
  %v144 = vld [vmem:[%s5] sm:$0xf]
  %v145 = vld [vmem:[%s5 + $0x4] sm:$0xf]
  %v146 = vld [vmem:[%s5 + $0x8] sm:$0xf]
  %v147 = vld [vmem:[%s5 + $0xc] sm:$0xf]
  %v148 = vld [vmem:[%s5 + $0x10] sm:$0xf]
  %v149 = vld [vmem:[%s5 + $0x14] sm:$0xf]
  %v150 = vld [vmem:[%s5 + $0x18] sm:$0xf]
  %v151 = vld [vmem:[%s5 + $0x1c] sm:$0xf]
  %v160 = vunpack.c.l.b16 %v144
  %v161 = vunpack.c.l.b16 %v145
  %v162 = vunpack.c.l.b16 %v146
  %v163 = vunpack.c.l.b16 %v147
  %v164 = vunpack.c.l.b16 %v148
  %v165 = vunpack.c.l.b16 %v149
  %v166 = vunpack.c.l.b16 %v150
  %v167 = vunpack.c.l.b16 %v151
  %v168 = vpack.c.b16 %v161, %v160
  %v169 = vpack.c.b16 %v163, %v162
  %v170 = vpack.c.b16 %v165, %v164
  %v171 = vpack.c.b16 %v167, %v166
  %vm176 = vcmask 523264
  %v178 = vsel %vm176, %v143, 0
  %180 = vmatprep.subr.bf16.mxu0 0
  %181 = vmatpush1.bf16.msra.mxu0 %v168
  %182 = vmatprep.subr.bf16.mxu0 0
  %183 = vmatpush1.bf16.msra.mxu0 %v169
  %184 = vmatprep.subr.bf16.mxu0 0
  %185 = vmatpush1.bf16.msra.mxu0 %v170
  %186 = vmatprep.subr.bf16.mxu0 0
  %187 = vmatpush1.bf16.msra.mxu0 %v171
  %188 = vmatprep.subr.bf16.mxu0 0
  %189 = vmatpush1.bf16.msra.mxu0 0
  %190 = vmatprep.subr.bf16.mxu0 0
  %191 = vmatpush1.bf16.msra.mxu0 0
  %192 = vmatprep.subr.bf16.mxu0 0
  %193 = vmatpush1.bf16.msra.mxu0 0
  %194 = vmatprep.subr.bf16.mxu0 0
  %195 = vmatpush1.bf16.msra.mxu0 0
  %196 = vmatprep.subr.bf16.mxu0 0
  %197 = vmatpush1.bf16.msra.mxu0 0
  %198 = vmatprep.subr.bf16.mxu0 0
  %199 = vmatpush1.bf16.msra.mxu0 0
  %200 = vmatprep.subr.bf16.mxu0 0
  %201 = vmatpush1.bf16.msra.mxu0 0
  %202 = vmatprep.subr.bf16.mxu0 0
  %203 = vmatpush1.bf16.msra.mxu0 0
  %204 = vmatprep.subr.bf16.mxu0 0
  %205 = vmatpush1.bf16.msra.mxu0 0
  %206 = vmatprep.subr.bf16.mxu0 0
  %207 = vmatpush1.bf16.msra.mxu0 0
  %208 = vmatprep.subr.bf16.mxu0 0
  %209 = vmatpush1.bf16.msra.mxu0 0
  %210 = vmatprep.subr.bf16.mxu0 0
  %211 = vmatpush1.bf16.msra.mxu0 0
  %212 = vmatprep.mubr.bf16.mxu0 0
  %213 = vmatmul.mubr.bf16.gmra.mrb[0].mxu0 %v178
  %v214 = vpop.f32.mrb[0].mxu0
  %v215 = vadd.f32 0.0, %v214
  %v216 = vpop.f32.mrb[0].mxu0
  %v217 = vpop.f32.mrb[0].mxu0
  %v218 = vpop.f32.mrb[0].mxu0
  %219 = vdwg.mxu0
  %v220 = vadd.f32 %v142, %v215
  %vm221 = vcmask 257024
  %222 = vst.msk [vmem:[#allocation2] sm:$0xf] %vm221, %v220
  // Predicated region
  $region34: #{paligemma_forward.19} parent=0 // pred_check
    %p223 = pneg %p27
  $region35: #{paligemma_forward.19} parent=0 // pred_check_branch
    %225 = sbr.rel (%p223) target = $region37
  $region36: #{paligemma_forward.19} parent=0 // pred_region
    %v226 = vld [vmem:[#allocation2] sm:$0xf]
    %v227 = vld [vmem:[%s6] sm:$0x1]
    %v228 = vunpack.c.l.bf16 %v227
    %v229 = vlaneseq
    %v230 = vshrl.u32 %v229, 7
    %v231 = vsub.s32 0, %v230
    %v232 = vrot.slane %v228, %v231
    %v233 = vadd.f32 %v226, %v232
    %v234 = vld [vmem:[%s0] sm:$0x3]
    %v235 = vunpack.c.l.bf16 %v234
    %v236 = vadd.f32 %v233, %v235
    %v237 = vpack.c.bf16 %v236, %v236
    %vm238 = vcmask 254976
    %239 = vst.msk [vmem:[%s7] sm:$0x3] %vm238, %v237
  $region37: #{paligemma_forward.19} parent=0 // pred_fallthru
    _
  // Predicated region
  $region38: #{paligemma_forward.19} parent=0 // pred_check
    _
  $region39: #{paligemma_forward.19} parent=0 // pred_check_branch
    %241 = sbr.rel (0) target = $region41
  $region40: #{paligemma_forward.19} parent=0 // pred_region
    _
  $region41: #{paligemma_forward.19} parent=0 // pred_fallthru
    _
  // Predicated region
  $region42: #{paligemma_forward.19} parent=0 // pred_check
    _
  $region43: #{paligemma_forward.19} parent=0 // pred_check_branch
    %243 = sbr.rel (0) target = $region45
  $region44: #{paligemma_forward.19} parent=0 // pred_region
    _
  $region45: #{paligemma_forward.19} parent=0 // pred_fallthru
    _

// kernel: paligemma_forward.20
$region0: #{paligemma_forward.20}
  #allocation0 [shape = 'u32[]', space=smem, size = 0x4, offset = 0x4, fixed_abs, tag = 'smem constant byte address 0x4 - core index']
  #allocation1 [shape = 'u32[144,128]{1,0:T(1,128)}', space=vmem, size = 0x12000, scoped, tag = 'internal scratch']
  #allocation2 [shape = 'bf16[4,32]{1,0:T(4,128)(2,1)}', space=vmem, size = 0x400, scoped, tag = 'scratch operand']
  %s0 = inlined_call_operand.vmem [shape: bf16[4,32], index: 0, kind: input, shape index: {}]
  %s1 = inlined_call_operand.vmem [shape: bf16[1,32], index: 1, kind: input, shape index: {}]
  %s2 = inlined_call_operand.vmem [shape: bf16[1,32], index: 2, kind: input, shape index: {}]
  %s3 = inlined_call_operand.vmem [shape: bf16[32,32], index: 3, kind: input, shape index: {}]
  %s4 = inlined_call_operand.vmem [shape: bf16[1,32], index: 4, kind: input, shape index: {}]
  %s5 = inlined_call_operand.vmem [shape: bf16[4,32], index: 5, kind: output, shape index: {}]
  %s6 = sld [smem:[#allocation0]]
  $region34: #{paligemma_forward.20} parent=0
    _
  %s8 = ssub.s32 1, %s6
  %s9 = scalar_select 0, %s8, %s6
  // Predicated region
  $region2: #{paligemma_forward.20} parent=0 // pred_check
    _
  $region3: #{paligemma_forward.20} parent=0 // pred_check_branch
    %11 = sbr.rel (0) target = $region5
  $region4: #{paligemma_forward.20} parent=0 // pred_region
    _
  $region5: #{paligemma_forward.20} parent=0 // pred_fallthru
    _
  // Predicated region
  $region6: #{paligemma_forward.20} parent=0 // pred_check
    _
  $region7: #{paligemma_forward.20} parent=0 // pred_check_branch
    %13 = sbr.rel (0) target = $region9
  $region8: #{paligemma_forward.20} parent=0 // pred_region
    _
  $region9: #{paligemma_forward.20} parent=0 // pred_fallthru
    _
  // Predicated region
  $region10: #{paligemma_forward.20} parent=0 // pred_check
    _
  $region11: #{paligemma_forward.20} parent=0 // pred_check_branch
    %15 = sbr.rel (0) target = $region13
  $region12: #{paligemma_forward.20} parent=0 // pred_region
    _
  $region13: #{paligemma_forward.20} parent=0 // pred_fallthru
    _
  // Predicated region
  $region14: #{paligemma_forward.20} parent=0 // pred_check
    _
  $region15: #{paligemma_forward.20} parent=0 // pred_check_branch
    %17 = sbr.rel (0) target = $region17
  $region16: #{paligemma_forward.20} parent=0 // pred_region
    _
  $region17: #{paligemma_forward.20} parent=0 // pred_fallthru
    _
  // Predicated region
  $region18: #{paligemma_forward.20} parent=0 // pred_check
    _
  $region19: #{paligemma_forward.20} parent=0 // pred_check_branch
    %19 = sbr.rel (0) target = $region21
  $region20: #{paligemma_forward.20} parent=0 // pred_region
    _
  $region21: #{paligemma_forward.20} parent=0 // pred_fallthru
    _
  %p21 = scmp.eq.s32.totalorder 0, 0
  // Predicated region
  $region22: #{paligemma_forward.20} parent=0 // pred_check
    %p22 = pneg %p21
  $region23: #{paligemma_forward.20} parent=0 // pred_check_branch
    %24 = sbr.rel (%p22) target = $region25
  $region24: #{paligemma_forward.20} parent=0 // pred_region
    %v25 = vld [vmem:[%s0] sm:$0x3]
    %v26 = vunpack.c.l.bf16 %v25
    %vm27 = vcmask 257024
    %v28 = vsel %vm27, %v26, 0.0
    %29 = vadd.xlane.f32.xlu0 %v28
    %v30 = vpop.xlane.xlu0 %29
    %v31 = vrcp.pop 32.0
    %v32 = vmul.f32 %v30, %v31
    %v33 = vsub.f32 %v26, %v32
    %v34 = vmul.f32 %v33, %v33
    %v35 = vsel %vm27, %v34, 0.0
    %36 = vadd.xlane.f32.xlu0 %v35
    %v37 = vpop.xlane.xlu0 %36
    %v38 = vmul.f32 %v37, %v31
    %v39 = vadd.f32 %v38, 1e-06
    %v40 = vrsqrt.pop %v39
    %v41 = vmul.f32 %v33, %v40
    %v42 = vld [vmem:[%s1] sm:$0x1]
    %v43 = vunpack.c.l.bf16 %v42
    %v44 = vlaneseq
    %v45 = vshrl.u32 %v44, 7
    %v46 = vsub.s32 0, %v45
    %v47 = vrot.slane %v43, %v46
    %v48 = vmul.f32 %v41, %v47
    %v49 = vld [vmem:[%s2] sm:$0x1]
    %v50 = vunpack.c.l.bf16 %v49
    %v51 = vlaneseq
    %v52 = vshrl.u32 %v51, 7
    %v53 = vsub.s32 0, %v52
    %v54 = vrot.slane %v50, %v53
    %v55 = vadd.f32 %v48, %v54
    %v56 = vpack.c.bf16 %v55, %v55
    %vm57 = vcmask 254976
    %58 = vst.msk [vmem:[#allocation2] sm:$0x3] %vm57, %v56
  $region25: #{paligemma_forward.20} parent=0 // pred_fallthru
    _
  %v59 = vld [vmem:[#allocation2] sm:$0x3]
  %v60 = vld [vmem:[%s3] sm:$0xf]
  %v61 = vld [vmem:[%s3 + $0x4] sm:$0xf]
  %v62 = vld [vmem:[%s3 + $0x8] sm:$0xf]
  %v63 = vld [vmem:[%s3 + $0xc] sm:$0xf]
  %v64 = vld [vmem:[%s4] sm:$0x1]
  %v65 = vunpack.c.l.bf16 %v64
  %v66 = vlaneseq
  %v67 = vshrl.u32 %v66, 7
  %v68 = vsub.s32 0, %v67
  %v69 = vrot.slane %v65, %v68
  %v74 = vunpack.c.l.b16 %v60
  %v75 = vunpack.c.l.b16 %v61
  %v76 = vunpack.c.l.b16 %v62
  %v77 = vunpack.c.l.b16 %v63
  %v78 = vpack.c.b16 %v75, %v74
  %v79 = vpack.c.b16 %v77, %v76
  %vm82 = vcmask 261120
  %v84 = vsel %vm82, %v59, 0
  %86 = vmatprep.subr.bf16.mxu0 0
  %87 = vmatpush1.bf16.msra.mxu0 %v78
  %88 = vmatprep.subr.bf16.mxu0 0
  %89 = vmatpush1.bf16.msra.mxu0 %v79
  %90 = vmatprep.subr.bf16.mxu0 0
  %91 = vmatpush1.bf16.msra.mxu0 0
  %92 = vmatprep.subr.bf16.mxu0 0
  %93 = vmatpush1.bf16.msra.mxu0 0
  %94 = vmatprep.subr.bf16.mxu0 0
  %95 = vmatpush1.bf16.msra.mxu0 0
  %96 = vmatprep.subr.bf16.mxu0 0
  %97 = vmatpush1.bf16.msra.mxu0 0
  %98 = vmatprep.subr.bf16.mxu0 0
  %99 = vmatpush1.bf16.msra.mxu0 0
  %100 = vmatprep.subr.bf16.mxu0 0
  %101 = vmatpush1.bf16.msra.mxu0 0
  %102 = vmatprep.subr.bf16.mxu0 0
  %103 = vmatpush1.bf16.msra.mxu0 0
  %104 = vmatprep.subr.bf16.mxu0 0
  %105 = vmatpush1.bf16.msra.mxu0 0
  %106 = vmatprep.subr.bf16.mxu0 0
  %107 = vmatpush1.bf16.msra.mxu0 0
  %108 = vmatprep.subr.bf16.mxu0 0
  %109 = vmatpush1.bf16.msra.mxu0 0
  %110 = vmatprep.subr.bf16.mxu0 0
  %111 = vmatpush1.bf16.msra.mxu0 0
  %112 = vmatprep.subr.bf16.mxu0 0
  %113 = vmatpush1.bf16.msra.mxu0 0
  %114 = vmatprep.subr.bf16.mxu0 0
  %115 = vmatpush1.bf16.msra.mxu0 0
  %116 = vmatprep.subr.bf16.mxu0 0
  %117 = vmatpush1.bf16.msra.mxu0 0
  %118 = vmatprep.mubr.bf16.mxu0 0
  %119 = vmatmul.mubr.bf16.gmra.mrb[0].mxu0 %v84
  %v120 = vpop.f32.mrb[0].mxu0
  %v121 = vadd.f32 %v69, %v120
  %v122 = vpop.f32.mrb[0].mxu0
  %v123 = vpop.f32.mrb[0].mxu0
  %v124 = vpop.f32.mrb[0].mxu0
  %125 = vdwg.mxu0
  %v126 = vpack.c.bf16 %v121, %v121
  %vm127 = vcmask 254976
  %128 = vst.msk [vmem:[%s5] sm:$0x3] %vm127, %v126
  // Predicated region
  $region26: #{paligemma_forward.20} parent=0 // pred_check
    _
  $region27: #{paligemma_forward.20} parent=0 // pred_check_branch
    %130 = sbr.rel (0) target = $region29
  $region28: #{paligemma_forward.20} parent=0 // pred_region
    _
  $region29: #{paligemma_forward.20} parent=0 // pred_fallthru
    _
  // Predicated region
  $region30: #{paligemma_forward.20} parent=0 // pred_check
    _
  $region31: #{paligemma_forward.20} parent=0 // pred_check_branch
    %132 = sbr.rel (0) target = $region33
  $region32: #{paligemma_forward.20} parent=0 // pred_region
    _
  $region33: #{paligemma_forward.20} parent=0 // pred_fallthru
    _

// kernel: paligemma_forward.21
$region0: #{paligemma_forward.21}
  #allocation0 [shape = 'u32[]', space=smem, size = 0x4, offset = 0x4, fixed_abs, tag = 'smem constant byte address 0x4 - core index']
  #allocation1 [shape = 'u32[144,128]{1,0:T(1,128)}', space=vmem, size = 0x12000, scoped, tag = 'internal scratch']
  #allocation2 [shape = 'bf16[8,32]{1,0:T(8,128)(2,1)}', space=vmem, size = 0x800, scoped, tag = 'scratch operand']
  %s0 = inlined_call_operand.vmem [shape: bf16[8,32], index: 0, kind: input, shape index: {}]
  %s1 = inlined_call_operand.vmem [shape: bf16[1,32], index: 1, kind: input, shape index: {}]
  %s2 = inlined_call_operand.vmem [shape: bf16[32,64], index: 2, kind: input, shape index: {}]
  %s3 = inlined_call_operand.vmem [shape: bf16[8,64], index: 3, kind: output, shape index: {}]
  %s4 = sld [smem:[#allocation0]]
  $region26: #{paligemma_forward.21} parent=0
    _
  %s6 = ssub.s32 1, %s4
  %s7 = scalar_select 0, %s6, %s4
  // Predicated region
  $region2: #{paligemma_forward.21} parent=0 // pred_check
    _
  $region3: #{paligemma_forward.21} parent=0 // pred_check_branch
    %9 = sbr.rel (0) target = $region5
  $region4: #{paligemma_forward.21} parent=0 // pred_region
    _
  $region5: #{paligemma_forward.21} parent=0 // pred_fallthru
    _
  // Predicated region
  $region6: #{paligemma_forward.21} parent=0 // pred_check
    _
  $region7: #{paligemma_forward.21} parent=0 // pred_check_branch
    %11 = sbr.rel (0) target = $region9
  $region8: #{paligemma_forward.21} parent=0 // pred_region
    _
  $region9: #{paligemma_forward.21} parent=0 // pred_fallthru
    _
  // Predicated region
  $region10: #{paligemma_forward.21} parent=0 // pred_check
    _
  $region11: #{paligemma_forward.21} parent=0 // pred_check_branch
    %13 = sbr.rel (0) target = $region13
  $region12: #{paligemma_forward.21} parent=0 // pred_region
    _
  $region13: #{paligemma_forward.21} parent=0 // pred_fallthru
    _
  %p15 = scmp.eq.s32.totalorder 0, 0
  // Predicated region
  $region14: #{paligemma_forward.21} parent=0 // pred_check
    %p16 = pneg %p15
  $region15: #{paligemma_forward.21} parent=0 // pred_check_branch
    %18 = sbr.rel (%p16) target = $region17
  $region16: #{paligemma_forward.21} parent=0 // pred_region
    %v19 = vld [vmem:[%s0] sm:$0xf]
    %v20 = vunpack.c.l.bf16 %v19
    %v21 = vmul.f32 %v20, %v20
    %vm22 = vcmask 261120
    %v23 = vsel %vm22, %v21, 0.0
    %24 = vadd.xlane.f32.xlu0 %v23
    %v25 = vpop.xlane.xlu0 %24
    %v26 = vrcp.pop 32.0
    %v27 = vmul.f32 %v25, %v26
    %v28 = vadd.f32 %v27, 1e-06
    %v29 = vrsqrt.pop %v28
    %v30 = vmul.f32 %v20, %v29
    %v31 = vld [vmem:[%s1] sm:$0x1]
    %v32 = vunpack.c.l.bf16 %v31
    %v33 = vadd.f32 %v32, 1.0
    %v34 = vlaneseq
    %v35 = vshrl.u32 %v34, 7
    %v36 = vsub.s32 0, %v35
    %v37 = vrot.slane %v33, %v36
    %v38 = vmul.f32 %v30, %v37
    %v39 = vpack.c.bf16 %v38, %v38
    %vm40 = vcmask 257024
    %41 = vst.msk [vmem:[#allocation2] sm:$0xf] %vm40, %v39
  $region17: #{paligemma_forward.21} parent=0 // pred_fallthru
    _
  %v42 = vld [vmem:[#allocation2] sm:$0xf]
  %v43 = vld [vmem:[%s2] sm:$0xf]
  %v44 = vld [vmem:[%s2 + $0x4] sm:$0xf]
  %v45 = vld [vmem:[%s2 + $0x8] sm:$0xf]
  %v46 = vld [vmem:[%s2 + $0xc] sm:$0xf]
  %v51 = vunpack.c.l.b16 %v43
  %v52 = vunpack.c.l.b16 %v44
  %v53 = vunpack.c.l.b16 %v45
  %v54 = vunpack.c.l.b16 %v46
  %v55 = vpack.c.b16 %v52, %v51
  %v56 = vpack.c.b16 %v54, %v53
  %vm59 = vcmask 261120
  %v61 = vsel %vm59, %v42, 0
  %63 = vmatprep.subr.bf16.mxu0 0
  %64 = vmatpush1.bf16.msra.mxu0 %v55
  %65 = vmatprep.subr.bf16.mxu0 0
  %66 = vmatpush1.bf16.msra.mxu0 %v56
  %67 = vmatprep.subr.bf16.mxu0 0
  %68 = vmatpush1.bf16.msra.mxu0 0
  %69 = vmatprep.subr.bf16.mxu0 0
  %70 = vmatpush1.bf16.msra.mxu0 0
  %71 = vmatprep.subr.bf16.mxu0 0
  %72 = vmatpush1.bf16.msra.mxu0 0
  %73 = vmatprep.subr.bf16.mxu0 0
  %74 = vmatpush1.bf16.msra.mxu0 0
  %75 = vmatprep.subr.bf16.mxu0 0
  %76 = vmatpush1.bf16.msra.mxu0 0
  %77 = vmatprep.subr.bf16.mxu0 0
  %78 = vmatpush1.bf16.msra.mxu0 0
  %79 = vmatprep.subr.bf16.mxu0 0
  %80 = vmatpush1.bf16.msra.mxu0 0
  %81 = vmatprep.subr.bf16.mxu0 0
  %82 = vmatpush1.bf16.msra.mxu0 0
  %83 = vmatprep.subr.bf16.mxu0 0
  %84 = vmatpush1.bf16.msra.mxu0 0
  %85 = vmatprep.subr.bf16.mxu0 0
  %86 = vmatpush1.bf16.msra.mxu0 0
  %87 = vmatprep.subr.bf16.mxu0 0
  %88 = vmatpush1.bf16.msra.mxu0 0
  %89 = vmatprep.subr.bf16.mxu0 0
  %90 = vmatpush1.bf16.msra.mxu0 0
  %91 = vmatprep.subr.bf16.mxu0 0
  %92 = vmatpush1.bf16.msra.mxu0 0
  %93 = vmatprep.subr.bf16.mxu0 0
  %94 = vmatpush1.bf16.msra.mxu0 0
  %95 = vmatprep.mubr.bf16.mxu0 0
  %96 = vmatmul.mubr.bf16.gmra.mrb[0].mxu0 %v61
  %v97 = vpop.f32.mrb[0].mxu0
  %v98 = vadd.f32 0.0, %v97
  %v99 = vpop.f32.mrb[0].mxu0
  %v100 = vpop.f32.mrb[0].mxu0
  %v101 = vpop.f32.mrb[0].mxu0
  %102 = vdwg.mxu0
  %v103 = vpack.c.bf16 %v98, %v98
  %vm104 = vcmask 519168
  %105 = vst.msk [vmem:[%s3] sm:$0xf] %vm104, %v103
  // Predicated region
  $region18: #{paligemma_forward.21} parent=0 // pred_check
    _
  $region19: #{paligemma_forward.21} parent=0 // pred_check_branch
    %107 = sbr.rel (0) target = $region21
  $region20: #{paligemma_forward.21} parent=0 // pred_region
    _
  $region21: #{paligemma_forward.21} parent=0 // pred_fallthru
    _
  // Predicated region
  $region22: #{paligemma_forward.21} parent=0 // pred_check
    _
  $region23: #{paligemma_forward.21} parent=0 // pred_check_branch
    %109 = sbr.rel (0) target = $region25
  $region24: #{paligemma_forward.21} parent=0 // pred_region
    _
  $region25: #{paligemma_forward.21} parent=0 // pred_fallthru
    _

// kernel: paligemma_forward.23
$region0: #{paligemma_forward.23}
  #allocation0 [shape = 'u32[]', space=smem, size = 0x4, offset = 0x4, fixed_abs, tag = 'smem constant byte address 0x4 - core index']
  #allocation1 [shape = 'u32[144,128]{1,0:T(1,128)}', space=vmem, size = 0x12000, scoped, tag = 'internal scratch']
  #allocation2 [shape = 'f32[8,32]{1,0:T(8,128)}', space=vmem, size = 0x1000, scoped, tag = 'scratch operand']
  %s0 = inlined_call_operand.vmem [shape: bf16[8,32], index: 0, kind: input, shape index: {}]
  %s1 = inlined_call_operand.vmem [shape: bf16[32,32], index: 1, kind: input, shape index: {}]
  %s2 = inlined_call_operand.vmem [shape: bf16[8,32], index: 2, kind: input, shape index: {}]
  %s3 = inlined_call_operand.vmem [shape: bf16[8,32], index: 3, kind: output, shape index: {}]
  %s4 = sld [smem:[#allocation0]]
  $region30: #{paligemma_forward.23} parent=0
    _
  %s6 = ssub.s32 1, %s4
  %s7 = scalar_select 0, %s6, %s4
  // Predicated region
  $region2: #{paligemma_forward.23} parent=0 // pred_check
    _
  $region3: #{paligemma_forward.23} parent=0 // pred_check_branch
    %9 = sbr.rel (0) target = $region5
  $region4: #{paligemma_forward.23} parent=0 // pred_region
    _
  $region5: #{paligemma_forward.23} parent=0 // pred_fallthru
    _
  // Predicated region
  $region6: #{paligemma_forward.23} parent=0 // pred_check
    _
  $region7: #{paligemma_forward.23} parent=0 // pred_check_branch
    %11 = sbr.rel (0) target = $region9
  $region8: #{paligemma_forward.23} parent=0 // pred_region
    _
  $region9: #{paligemma_forward.23} parent=0 // pred_fallthru
    _
  // Predicated region
  $region10: #{paligemma_forward.23} parent=0 // pred_check
    _
  $region11: #{paligemma_forward.23} parent=0 // pred_check_branch
    %13 = sbr.rel (0) target = $region13
  $region12: #{paligemma_forward.23} parent=0 // pred_region
    _
  $region13: #{paligemma_forward.23} parent=0 // pred_fallthru
    _
  %p15 = scmp.eq.s32.totalorder 0, 0
  // Predicated region
  $region14: #{paligemma_forward.23} parent=0 // pred_check
    %p16 = pneg %p15
  $region15: #{paligemma_forward.23} parent=0 // pred_check_branch
    %18 = sbr.rel (%p16) target = $region17
  $region16: #{paligemma_forward.23} parent=0 // pred_region
    %vm19 = vcmask 261120
    %20 = vst.msk [vmem:[#allocation2] sm:$0xff] %vm19, 0.0
  $region17: #{paligemma_forward.23} parent=0 // pred_fallthru
    _
  %v21 = vld [vmem:[#allocation2] sm:$0xff]
  %v22 = vld [vmem:[%s0] sm:$0xf]
  %v23 = vld [vmem:[%s1] sm:$0xf]
  %v24 = vld [vmem:[%s1 + $0x4] sm:$0xf]
  %v25 = vld [vmem:[%s1 + $0x8] sm:$0xf]
  %v26 = vld [vmem:[%s1 + $0xc] sm:$0xf]
  %v31 = vunpack.c.l.b16 %v23
  %v32 = vunpack.c.l.b16 %v24
  %v33 = vunpack.c.l.b16 %v25
  %v34 = vunpack.c.l.b16 %v26
  %v35 = vpack.c.b16 %v32, %v31
  %v36 = vpack.c.b16 %v34, %v33
  %vm39 = vcmask 261120
  %v41 = vsel %vm39, %v22, 0
  %43 = vmatprep.subr.bf16.mxu0 0
  %44 = vmatpush1.bf16.msra.mxu0 %v35
  %45 = vmatprep.subr.bf16.mxu0 0
  %46 = vmatpush1.bf16.msra.mxu0 %v36
  %47 = vmatprep.subr.bf16.mxu0 0
  %48 = vmatpush1.bf16.msra.mxu0 0
  %49 = vmatprep.subr.bf16.mxu0 0
  %50 = vmatpush1.bf16.msra.mxu0 0
  %51 = vmatprep.subr.bf16.mxu0 0
  %52 = vmatpush1.bf16.msra.mxu0 0
  %53 = vmatprep.subr.bf16.mxu0 0
  %54 = vmatpush1.bf16.msra.mxu0 0
  %55 = vmatprep.subr.bf16.mxu0 0
  %56 = vmatpush1.bf16.msra.mxu0 0
  %57 = vmatprep.subr.bf16.mxu0 0
  %58 = vmatpush1.bf16.msra.mxu0 0
  %59 = vmatprep.subr.bf16.mxu0 0
  %60 = vmatpush1.bf16.msra.mxu0 0
  %61 = vmatprep.subr.bf16.mxu0 0
  %62 = vmatpush1.bf16.msra.mxu0 0
  %63 = vmatprep.subr.bf16.mxu0 0
  %64 = vmatpush1.bf16.msra.mxu0 0
  %65 = vmatprep.subr.bf16.mxu0 0
  %66 = vmatpush1.bf16.msra.mxu0 0
  %67 = vmatprep.subr.bf16.mxu0 0
  %68 = vmatpush1.bf16.msra.mxu0 0
  %69 = vmatprep.subr.bf16.mxu0 0
  %70 = vmatpush1.bf16.msra.mxu0 0
  %71 = vmatprep.subr.bf16.mxu0 0
  %72 = vmatpush1.bf16.msra.mxu0 0
  %73 = vmatprep.subr.bf16.mxu0 0
  %74 = vmatpush1.bf16.msra.mxu0 0
  %75 = vmatprep.mubr.bf16.mxu0 0
  %76 = vmatmul.mubr.bf16.gmra.mrb[0].mxu0 %v41
  %v77 = vpop.f32.mrb[0].mxu0
  %v78 = vadd.f32 0.0, %v77
  %v79 = vpop.f32.mrb[0].mxu0
  %v80 = vpop.f32.mrb[0].mxu0
  %v81 = vpop.f32.mrb[0].mxu0
  %82 = vdwg.mxu0
  %v83 = vadd.f32 %v21, %v78
  %84 = vst.msk [vmem:[#allocation2] sm:$0xff] %vm39, %v83
  // Predicated region
  $region18: #{paligemma_forward.23} parent=0 // pred_check
    %p85 = pneg %p15
  $region19: #{paligemma_forward.23} parent=0 // pred_check_branch
    %87 = sbr.rel (%p85) target = $region21
  $region20: #{paligemma_forward.23} parent=0 // pred_region
    %v88 = vld [vmem:[#allocation2] sm:$0xff]
    %v89 = vld [vmem:[%s2] sm:$0xf]
    %v90 = vunpack.c.l.bf16 %v89
    %v91 = vadd.f32 %v88, %v90
    %v92 = vpack.c.bf16 %v91, %v91
    %vm93 = vcmask 257024
    %94 = vst.msk [vmem:[%s3] sm:$0xf] %vm93, %v92
  $region21: #{paligemma_forward.23} parent=0 // pred_fallthru
    _
  // Predicated region
  $region22: #{paligemma_forward.23} parent=0 // pred_check
    _
  $region23: #{paligemma_forward.23} parent=0 // pred_check_branch
    %96 = sbr.rel (0) target = $region25
  $region24: #{paligemma_forward.23} parent=0 // pred_region
    _
  $region25: #{paligemma_forward.23} parent=0 // pred_fallthru
    _
  // Predicated region
  $region26: #{paligemma_forward.23} parent=0 // pred_check
    _
  $region27: #{paligemma_forward.23} parent=0 // pred_check_branch
    %98 = sbr.rel (0) target = $region29
  $region28: #{paligemma_forward.23} parent=0 // pred_region
    _
  $region29: #{paligemma_forward.23} parent=0 // pred_fallthru
    _

// kernel: paligemma_forward.29
$region0: #{paligemma_forward.29}
  #allocation0 [shape = 'u32[]', space=smem, size = 0x4, offset = 0x4, fixed_abs, tag = 'smem constant byte address 0x4 - core index']
  #allocation1 [shape = 'u32[144,128]{1,0:T(1,128)}', space=vmem, size = 0x12000, scoped, tag = 'internal scratch']
  #allocation2 [shape = 'bf16[8,32]{1,0:T(8,128)(2,1)}', space=vmem, size = 0x800, scoped, tag = 'scratch operand']
  %s0 = inlined_call_operand.vmem [shape: bf16[8,32], index: 0, kind: input, shape index: {}]
  %s1 = inlined_call_operand.vmem [shape: bf16[1,32], index: 1, kind: input, shape index: {}]
  %s2 = inlined_call_operand.vmem [shape: bf16[32,128], index: 2, kind: input, shape index: {}]
  %s3 = inlined_call_operand.hbm [shape: f32[8,128], index: 3, kind: output, shape index: {}]
  %s4 = sld [smem:[#allocation0]]
  $region26: #{paligemma_forward.29} parent=0
    _
  %s6 = ssub.s32 1, %s4
  %s7 = scalar_select 0, %s6, %s4
  $region1: #{paligemma_forward.29} parent=0
    #allocation3 [shape = 'u8[4096]{0}', space=vmem, size = 0x1000, scoped, tag = 'output window, operand 0, single buffered']
    #allocation4 [shape = 's32[1]{0}', space=sflag, size = 0x4, scoped, tag = 'scoped memory for paligemma_forward.29']
    %8 = vsyncpa [#allocation4], 0
    // Predicated region
    $region2: #{paligemma_forward.29} parent=1 // pred_check
      _
    $region3: #{paligemma_forward.29} parent=1 // pred_check_branch
      %10 = sbr.rel (0) target = $region5
    $region4: #{paligemma_forward.29} parent=1 // pred_region
      _
    $region5: #{paligemma_forward.29} parent=1 // pred_fallthru
      _
    // Predicated region
    $region6: #{paligemma_forward.29} parent=1 // pred_check
      _
    $region7: #{paligemma_forward.29} parent=1 // pred_check_branch
      %12 = sbr.rel (0) target = $region9
    $region8: #{paligemma_forward.29} parent=1 // pred_region
      _
    $region9: #{paligemma_forward.29} parent=1 // pred_fallthru
      _
    // Predicated region
    $region10: #{paligemma_forward.29} parent=1 // pred_check
      _
    $region11: #{paligemma_forward.29} parent=1 // pred_check_branch
      %14 = sbr.rel (0) target = $region13
    $region12: #{paligemma_forward.29} parent=1 // pred_region
      _
    $region13: #{paligemma_forward.29} parent=1 // pred_fallthru
      _
    %p16 = scmp.eq.s32.totalorder 0, 0
    // Predicated region
    $region14: #{paligemma_forward.29} parent=1 // pred_check
      %p17 = pneg %p16
    $region15: #{paligemma_forward.29} parent=1 // pred_check_branch
      %19 = sbr.rel (%p17) target = $region17
    $region16: #{paligemma_forward.29} parent=1 // pred_region
      %v20 = vld [vmem:[%s0] sm:$0xf]
      %v21 = vunpack.c.l.bf16 %v20
      %v22 = vmul.f32 %v21, %v21
      %vm23 = vcmask 261120
      %v24 = vsel %vm23, %v22, 0.0
      %25 = vadd.xlane.f32.xlu0 %v24
      %v26 = vpop.xlane.xlu0 %25
      %v27 = vrcp.pop 32.0
      %v28 = vmul.f32 %v26, %v27
      %v29 = vadd.f32 %v28, 1e-06
      %v30 = vrsqrt.pop %v29
      %v31 = vmul.f32 %v21, %v30
      %v32 = vld [vmem:[%s1] sm:$0x1]
      %v33 = vunpack.c.l.bf16 %v32
      %v34 = vadd.f32 %v33, 1.0
      %v35 = vlaneseq
      %v36 = vshrl.u32 %v35, 7
      %v37 = vsub.s32 0, %v36
      %v38 = vrot.slane %v34, %v37
      %v39 = vmul.f32 %v31, %v38
      %v40 = vpack.c.bf16 %v39, %v39
      %vm41 = vcmask 257024
      %42 = vst.msk [vmem:[#allocation2] sm:$0xf] %vm41, %v40
    $region17: #{paligemma_forward.29} parent=1 // pred_fallthru
      _
    %v43 = vld [vmem:[#allocation2] sm:$0xf]
    %v44 = vld [vmem:[%s2] sm:$0xf]
    %v45 = vld [vmem:[%s2 + $0x4] sm:$0xf]
    %v46 = vld [vmem:[%s2 + $0x8] sm:$0xf]
    %v47 = vld [vmem:[%s2 + $0xc] sm:$0xf]
    %v52 = vunpack.c.l.b16 %v44
    %v53 = vunpack.c.l.b16 %v45
    %v54 = vunpack.c.l.b16 %v46
    %v55 = vunpack.c.l.b16 %v47
    %v56 = vpack.c.b16 %v53, %v52
    %v57 = vpack.c.b16 %v55, %v54
    %vm60 = vcmask 261120
    %v62 = vsel %vm60, %v43, 0
    %64 = vmatprep.subr.bf16.mxu0 0
    %65 = vmatpush1.bf16.msra.mxu0 %v56
    %66 = vmatprep.subr.bf16.mxu0 0
    %67 = vmatpush1.bf16.msra.mxu0 %v57
    %68 = vmatprep.subr.bf16.mxu0 0
    %69 = vmatpush1.bf16.msra.mxu0 0
    %70 = vmatprep.subr.bf16.mxu0 0
    %71 = vmatpush1.bf16.msra.mxu0 0
    %72 = vmatprep.subr.bf16.mxu0 0
    %73 = vmatpush1.bf16.msra.mxu0 0
    %74 = vmatprep.subr.bf16.mxu0 0
    %75 = vmatpush1.bf16.msra.mxu0 0
    %76 = vmatprep.subr.bf16.mxu0 0
    %77 = vmatpush1.bf16.msra.mxu0 0
    %78 = vmatprep.subr.bf16.mxu0 0
    %79 = vmatpush1.bf16.msra.mxu0 0
    %80 = vmatprep.subr.bf16.mxu0 0
    %81 = vmatpush1.bf16.msra.mxu0 0
    %82 = vmatprep.subr.bf16.mxu0 0
    %83 = vmatpush1.bf16.msra.mxu0 0
    %84 = vmatprep.subr.bf16.mxu0 0
    %85 = vmatpush1.bf16.msra.mxu0 0
    %86 = vmatprep.subr.bf16.mxu0 0
    %87 = vmatpush1.bf16.msra.mxu0 0
    %88 = vmatprep.subr.bf16.mxu0 0
    %89 = vmatpush1.bf16.msra.mxu0 0
    %90 = vmatprep.subr.bf16.mxu0 0
    %91 = vmatpush1.bf16.msra.mxu0 0
    %92 = vmatprep.subr.bf16.mxu0 0
    %93 = vmatpush1.bf16.msra.mxu0 0
    %94 = vmatprep.subr.bf16.mxu0 0
    %95 = vmatpush1.bf16.msra.mxu0 0
    %96 = vmatprep.mubr.bf16.mxu0 0
    %97 = vmatmul.mubr.bf16.gmra.mrb[0].mxu0 %v62
    %v98 = vpop.f32.mrb[0].mxu0
    %v99 = vadd.f32 0.0, %v98
    %v100 = vpop.f32.mrb[0].mxu0
    %v101 = vpop.f32.mrb[0].mxu0
    %v102 = vpop.f32.mrb[0].mxu0
    %103 = vdwg.mxu0
    %104 = vst [vmem:[#allocation3] sm:$0xff] %v99
    // Predicated region
    $region18: #{paligemma_forward.29} parent=1 // pred_check
      _
    $region19: #{paligemma_forward.29} parent=1 // pred_check_branch
      %106 = sbr.rel (0) target = $region21
    $region20: #{paligemma_forward.29} parent=1 // pred_region
      %s108 = ssub.s32 128, 128
      %109 = vsyncadd [#allocation4], %s108
      %s111 = sshll.u32 [#allocation3], 4
      %s112 = int_to_ptr.vmem [resolvable:$true] %s111
      %114 = dma.vmem_to_hbm [thread:$0]  %s112, 128, %s3, [#allocation4]
    $region21: #{paligemma_forward.29} parent=1 // pred_fallthru
      _
    // Predicated region
    $region22: #{paligemma_forward.29} parent=1 // pred_check
      _
    $region23: #{paligemma_forward.29} parent=1 // pred_check_branch
      %116 = sbr.rel (0) target = $region25
    $region24: #{paligemma_forward.29} parent=1 // pred_region
      %117 = dma.done [#allocation4], 128
    $region25: #{paligemma_forward.29} parent=1 // pred_fallthru
      _
    %118 = vsyncpa [#allocation4], 1

// kernel: paligemma_forward.22
$region0: #{paligemma_forward.22}
  #allocation0 [shape = 'u32[]', space=smem, size = 0x4, offset = 0x4, fixed_abs, tag = 'smem constant byte address 0x4 - core index']
  #allocation1 [shape = 'u32[144,128]{1,0:T(1,128)}', space=vmem, size = 0x12000, scoped, tag = 'internal scratch']
  #allocation2 [shape = 'f32[16,1]{1,0:T(8,128)}', space=vmem, size = 0x2000, scoped, tag = 'scratch operand']
  #allocation3 [shape = 'f32[16,1]{1,0:T(8,128)}', space=vmem, size = 0x2000, scoped, tag = 'scratch operand']
  #allocation4 [shape = 'f32[16,8]{1,0:T(8,128)}', space=vmem, size = 0x2000, scoped, tag = 'scratch operand']
  %s0 = inlined_call_operand.vmem [shape: bf16[2,16,8], index: 0, kind: input, shape index: {}]
  %s1 = inlined_call_operand.vmem [shape: bf16[2,8,8], index: 1, kind: input, shape index: {}]
  %s2 = inlined_call_operand.vmem [shape: bf16[2,8,8], index: 2, kind: input, shape index: {}]
  %s3 = inlined_call_operand.vmem [shape: bf16[2,16,8], index: 3, kind: output, shape index: {}]
  %s4 = sld [smem:[#allocation0]]
  $region53: #{paligemma_forward.22} parent=0
    _
  %s6 = ssub.s32 1, %s4
  %s7 = scalar_select 0, %s6, %s4
  loop: start=0, step=1, limit=4
  $region2: #{paligemma_forward.22} parent=0 // loop_pre_header
    _
  $region3: #{paligemma_forward.22} parent=0 // loop_header
    %s9 = sphi 0, %s13
    %p10 = scmp.ge.s32.totalorder %s9, 4
    %s16 = sphi 0, %s35
    %s17 = sphi 0, %s31
    %s18 = sphi 0, %s27
    %s19 = sphi 0, %s16
    %s20 = sphi 0, %s17
    %s21 = sphi 0, %s18
    %s22 = sphi 0, %s19
    %s23 = sphi 0, %s20
    %s24 = sphi 0, %s21
    %s40 = sphi 0, %s42
    %s43 = sphi 0, %s40
    %s44 = sphi 0, %s43
    %s60 = sphi 0, %s44
    %s68 = sphi 0, %s70
    %s71 = sphi 0, %s68
    %s72 = sphi 0, %s71
    %s88 = sphi 0, %s72
    %s96 = sphi 0, %s98
    %s99 = sphi 0, %s96
    %s100 = sphi 0, %s99
    %s116 = sphi 0, %s100
    %s124 = sphi 0, %s126
    %s127 = sphi 0, %s124
    %s128 = sphi 0, %s127
    %s144 = sphi 0, %s128
  $region4: #{paligemma_forward.22} parent=0 // loop_header_branch
    %12 = sbr.rel (%p10) target = $region8
  $region5: #{paligemma_forward.22} parent=0 // loop_body
    %s14 = ssub.s32 %s9, 1
    %s15 = ssub.s32 %s9, 2
    %s25 = sadd.s32 1, %s18
    %p26 = scmp.ge.s32.totalorder %s25, 1
    %s27 = scalar_select %p26, 0, %s25
    %s28 = sadd.s32 1, %s17
    %s29 = scalar_select %p26, %s28, %s17
    %p30 = scmp.ge.s32.totalorder %s29, 1
    %s31 = scalar_select %p30, 0, %s29
    %s32 = sadd.s32 1, %s16
    %s33 = scalar_select %p30, %s32, %s16
    %p34 = scmp.ge.s32.totalorder %s33, 2
    %s35 = scalar_select %p34, 0, %s33
    %s36 = ssub.s32 %s16, %s35
    %s37 = ssub.s32 %s17, %s31
    %s38 = sor.u32 %s36, %s37
    %p39 = scmp.eq.s32.totalorder %s38, 0
    %s41 = sadd.s32 %s40, 1
    %s42 = scalar_select %p39, %s40, %s41
    %p45 = pneg %p39
    %p46 = scmp.eq.s32.totalorder %s9, 1
    %p47 = por %p45, %p46
    %p48 = scmp.ne.s32.totalorder %s40, %s43
    %p49 = scmp.eq.s32.totalorder %s9, 0
    %p50 = por %p48, %p49
    %p51 = scmp.ne.s32.totalorder %s40, %s43
    %p52 = scmp.eq.s32.totalorder %s14, 1
    %p53 = por %p51, %p52
    %p54 = scmp.ne.s32.totalorder %s43, %s44
    %p55 = scmp.eq.s32.totalorder %s14, 0
    %p56 = por %p54, %p55
    %p57 = scmp.ne.s32.totalorder %s43, %s44
    %p58 = scmp.eq.s32.totalorder %s15, 1
    %p59 = por %p57, %p58
    %p61 = scmp.ne.s32.totalorder %s44, %s60
    %p62 = scmp.eq.s32.totalorder %s15, 0
    %p63 = por %p61, %p62
    %s64 = ssub.s32 %s16, %s35
    %s65 = ssub.s32 %s18, %s27
    %s66 = sor.u32 %s64, %s65
    %p67 = scmp.eq.s32.totalorder %s66, 0
    %s69 = sadd.s32 %s68, 1
    %s70 = scalar_select %p67, %s68, %s69
    %p73 = pneg %p67
    %p74 = scmp.eq.s32.totalorder %s9, 1
    %p75 = por %p73, %p74
    %p76 = scmp.ne.s32.totalorder %s68, %s71
    %p77 = scmp.eq.s32.totalorder %s9, 0
    %p78 = por %p76, %p77
    %p79 = scmp.ne.s32.totalorder %s68, %s71
    %p80 = scmp.eq.s32.totalorder %s14, 1
    %p81 = por %p79, %p80
    %p82 = scmp.ne.s32.totalorder %s71, %s72
    %p83 = scmp.eq.s32.totalorder %s14, 0
    %p84 = por %p82, %p83
    %p85 = scmp.ne.s32.totalorder %s71, %s72
    %p86 = scmp.eq.s32.totalorder %s15, 1
    %p87 = por %p85, %p86
    %p89 = scmp.ne.s32.totalorder %s72, %s88
    %p90 = scmp.eq.s32.totalorder %s15, 0
    %p91 = por %p89, %p90
    %s92 = ssub.s32 %s16, %s35
    %s93 = ssub.s32 %s18, %s27
    %s94 = sor.u32 %s92, %s93
    %p95 = scmp.eq.s32.totalorder %s94, 0
    %s97 = sadd.s32 %s96, 1
    %s98 = scalar_select %p95, %s96, %s97
    %p101 = pneg %p95
    %p102 = scmp.eq.s32.totalorder %s9, 1
    %p103 = por %p101, %p102
    %p104 = scmp.ne.s32.totalorder %s96, %s99
    %p105 = scmp.eq.s32.totalorder %s9, 0
    %p106 = por %p104, %p105
    %p107 = scmp.ne.s32.totalorder %s96, %s99
    %p108 = scmp.eq.s32.totalorder %s14, 1
    %p109 = por %p107, %p108
    %p110 = scmp.ne.s32.totalorder %s99, %s100
    %p111 = scmp.eq.s32.totalorder %s14, 0
    %p112 = por %p110, %p111
    %p113 = scmp.ne.s32.totalorder %s99, %s100
    %p114 = scmp.eq.s32.totalorder %s15, 1
    %p115 = por %p113, %p114
    %p117 = scmp.ne.s32.totalorder %s100, %s116
    %p118 = scmp.eq.s32.totalorder %s15, 0
    %p119 = por %p117, %p118
    %s120 = ssub.s32 %s16, %s35
    %s121 = ssub.s32 %s17, %s31
    %s122 = sor.u32 %s120, %s121
    %p123 = scmp.eq.s32.totalorder %s122, 0
    %s125 = sadd.s32 %s124, 1
    %s126 = scalar_select %p123, %s124, %s125
    %p129 = pneg %p123
    %p130 = scmp.eq.s32.totalorder %s9, 1
    %p131 = por %p129, %p130
    %p132 = scmp.ne.s32.totalorder %s124, %s127
    %p133 = scmp.eq.s32.totalorder %s9, 0
    %p134 = por %p132, %p133
    %p135 = scmp.ne.s32.totalorder %s124, %s127
    %p136 = scmp.eq.s32.totalorder %s14, 1
    %p137 = por %p135, %p136
    %p138 = scmp.ne.s32.totalorder %s127, %s128
    %p139 = scmp.eq.s32.totalorder %s14, 0
    %p140 = por %p138, %p139
    %p141 = scmp.ne.s32.totalorder %s127, %s128
    %p142 = scmp.eq.s32.totalorder %s15, 1
    %p143 = por %p141, %p142
    %p145 = scmp.ne.s32.totalorder %s128, %s144
    %p146 = scmp.eq.s32.totalorder %s15, 0
    %p147 = por %p145, %p146
    %p148 = scmp.le.s32.totalorder 1, %s9
    %p149 = scmp.lt.s32.totalorder %s9, 3
    %p150 = pnand %p148, %p149
    %p151 = pneg %p150
    // Predicated region
    $region9: #{paligemma_forward.22} parent=5 // pred_check
      _
    $region10: #{paligemma_forward.22} parent=5 // pred_check_branch
      %153 = sbr.rel (%p150) target = $region12
    $region11: #{paligemma_forward.22} parent=5 // pred_region
      %s154 = ssub.s32 %s9, 1
    $region12: #{paligemma_forward.22} parent=5 // pred_fallthru
      _
    %p155 = scmp.lt.s32.totalorder %s9, 2
    // Predicated region
    $region13: #{paligemma_forward.22} parent=5 // pred_check
      %p156 = pneg %p155
    $region14: #{paligemma_forward.22} parent=5 // pred_check_branch
      %158 = sbr.rel (%p156) target = $region16
    $region15: #{paligemma_forward.22} parent=5 // pred_region
      // Predicated region
      $region17: #{paligemma_forward.22} parent=15 // pred_check
        %p159 = pneg %p50
      $region18: #{paligemma_forward.22} parent=15 // pred_check_branch
        %161 = sbr.rel (%p159) target = $region20
      $region19: #{paligemma_forward.22} parent=15 // pred_region
        %s162 = smul.u32 2, %s17
        %p163 = scmp.lt.s32.totalorder %s16, 1
        %s164 = scalar_select %p163, %s16, 1
        %p165 = scmp.lt.s32.totalorder %s162, 1
        %s166 = scalar_select %p165, %s162, 1
        %s167 = smul.addr %s164, 2
        %s168 = sadd.s32 %s166, %s167
        %s169 = smul.addr %s168, 4
        %s170 = scalar_lea.vmem %s0, %s169
        %s171 = smul.u32 2, %s17
      $region20: #{paligemma_forward.22} parent=15 // pred_fallthru
        _
      // Predicated region
      $region21: #{paligemma_forward.22} parent=15 // pred_check
        %p172 = pneg %p78
      $region22: #{paligemma_forward.22} parent=15 // pred_check_branch
        %174 = sbr.rel (%p172) target = $region24
      $region23: #{paligemma_forward.22} parent=15 // pred_region
        %p175 = scmp.lt.s32.totalorder %s16, 1
        %s176 = scalar_select %p175, %s16, 1
        %p177 = scmp.lt.s32.totalorder %s18, 0
        %s178 = scalar_select %p177, %s18, 0
        %s179 = sadd.s32 %s178, %s176
        %s180 = smul.addr %s179, 4
        %s181 = scalar_lea.vmem %s1, %s180
      $region24: #{paligemma_forward.22} parent=15 // pred_fallthru
        _
      // Predicated region
      $region25: #{paligemma_forward.22} parent=15 // pred_check
        %p182 = pneg %p106
      $region26: #{paligemma_forward.22} parent=15 // pred_check_branch
        %184 = sbr.rel (%p182) target = $region28
      $region27: #{paligemma_forward.22} parent=15 // pred_region
        %p185 = scmp.lt.s32.totalorder %s16, 1
        %s186 = scalar_select %p185, %s16, 1
        %p187 = scmp.lt.s32.totalorder %s18, 0
        %s188 = scalar_select %p187, %s18, 0
        %s189 = sadd.s32 %s188, %s186
        %s190 = smul.addr %s189, 4
        %s191 = scalar_lea.vmem %s2, %s190
      $region28: #{paligemma_forward.22} parent=15 // pred_fallthru
        _
    $region16: #{paligemma_forward.22} parent=5 // pred_fallthru
      _
    %p192 = scmp.le.s32.totalorder 1, %s9
    %p193 = scmp.lt.s32.totalorder %s9, 3
    %p194 = pnand %p192, %p193
    %p195 = pneg %p194
    // Predicated region
    $region29: #{paligemma_forward.22} parent=5 // pred_check
      _
    $region30: #{paligemma_forward.22} parent=5 // pred_check_branch
      %197 = sbr.rel (%p194) target = $region32
    $region31: #{paligemma_forward.22} parent=5 // pred_region
      %s198 = ssub.s32 %s9, 1
      %s199 = smul.u32 2, %s20
      %p200 = scmp.lt.s32.totalorder %s19, 1
      %s201 = scalar_select %p200, %s19, 1
      %p202 = scmp.lt.s32.totalorder %s199, 1
      %s203 = scalar_select %p202, %s199, 1
      %s204 = smul.addr %s201, 2
      %s205 = sadd.s32 %s203, %s204
      %s206 = smul.addr %s205, 4
      %s207 = scalar_lea.vmem %s0, %s206
      %p208 = pneg %p56
      %p209 = pneg %p53
      %p210 = scmp.lt.s32.totalorder %s19, 1
      %s211 = scalar_select %p210, %s19, 1
      %p212 = scmp.lt.s32.totalorder %s21, 0
      %s213 = scalar_select %p212, %s21, 0
      %s214 = sadd.s32 %s213, %s211
      %s215 = smul.addr %s214, 4
      %s216 = scalar_lea.vmem %s1, %s215
      %p217 = pneg %p84
      %p218 = pneg %p81
      %p219 = scmp.lt.s32.totalorder %s19, 1
      %s220 = scalar_select %p219, %s19, 1
      %p221 = scmp.lt.s32.totalorder %s21, 0
      %s222 = scalar_select %p221, %s21, 0
      %s223 = sadd.s32 %s222, %s220
      %s224 = smul.addr %s223, 4
      %s225 = scalar_lea.vmem %s2, %s224
      %p226 = pneg %p112
      %p227 = pneg %p109
      %p228 = pneg %p140
      %p229 = pneg %p137
      %s230 = smul.u32 2, %s20
      %p231 = scmp.lt.s32.totalorder %s19, 1
      %s232 = scalar_select %p231, %s19, 1
      %p233 = scmp.lt.s32.totalorder %s230, 1
      %s234 = scalar_select %p233, %s230, 1
      %s235 = smul.addr %s232, 2
      %s236 = sadd.s32 %s234, %s235
      %s237 = smul.addr %s236, 4
      %s238 = scalar_lea.vmem %s3, %s237
      %s239 = smul.u32 2, %s20
      %p240 = scmp.lt.s32.totalorder %s19, 1
      %s241 = scalar_select %p240, %s19, 1
      %p242 = scmp.lt.s32.totalorder %s239, 1
      %s243 = scalar_select %p242, %s239, 1
      %s244 = smul.addr %s241, 2
      %s245 = sadd.s32 %s243, %s244
      %s246 = smul.addr %s245, 4
      %s247 = scalar_lea.vmem %s0, %s246
      %s248 = smul.u32 2, %s20
      %p249 = scmp.lt.s32.totalorder %s19, 1
      %s250 = scalar_select %p249, %s19, 1
      %p251 = scmp.lt.s32.totalorder %s21, 0
      %s252 = scalar_select %p251, %s21, 0
      %s253 = sadd.s32 %s252, %s250
      %s254 = smul.addr %s253, 4
      %s255 = scalar_lea.vmem %s1, %s254
      %p256 = scmp.lt.s32.totalorder %s19, 1
      %s257 = scalar_select %p256, %s19, 1
      %p258 = scmp.lt.s32.totalorder %s21, 0
      %s259 = scalar_select %p258, %s21, 0
      %s260 = sadd.s32 %s259, %s257
      %s261 = smul.addr %s260, 4
      %s262 = scalar_lea.vmem %s2, %s261
      %s263 = smul.u32 2, %s20
      %p264 = scmp.lt.s32.totalorder %s19, 1
      %s265 = scalar_select %p264, %s19, 1
      %p266 = scmp.lt.s32.totalorder %s263, 1
      %s267 = scalar_select %p266, %s263, 1
      %s268 = smul.addr %s265, 2
      %s269 = sadd.s32 %s267, %s268
      %s270 = smul.addr %s269, 4
      %s271 = scalar_lea.vmem %s3, %s270
      %s272 = smul.u32 2, %s20
      %p274 = scmp.eq.s32.totalorder %s21, 0
      // Predicated region
      $region33: #{paligemma_forward.22} parent=31 // pred_check
        %p275 = pneg %p274
      $region34: #{paligemma_forward.22} parent=31 // pred_check_branch
        %277 = sbr.rel (%p275) target = $region36
      $region35: #{paligemma_forward.22} parent=31 // pred_region
        %vm278 = vcmask 7168
        %279 = vst.msk [vmem:[#allocation2] sm:$0xff] %vm278, -inf
        %280 = vst.msk [vmem:[#allocation2 + $0x8] sm:$0xff] %vm278, -inf
        %281 = vst.msk [vmem:[#allocation3] sm:$0xff] %vm278, 0.0
        %282 = vst.msk [vmem:[#allocation3 + $0x8] sm:$0xff] %vm278, 0.0
        %vm283 = vcmask 64512
        %284 = vst.msk [vmem:[#allocation4] sm:$0xff] %vm283, 0.0
        %285 = vst.msk [vmem:[#allocation4 + $0x8] sm:$0xff] %vm283, 0.0
      $region36: #{paligemma_forward.22} parent=31 // pred_fallthru
        _
      %v286 = vld [vmem:[%s247] sm:$0xf]
      %v287 = vld [vmem:[%s247 + $0x4] sm:$0xf]
      %v288 = vld [vmem:[%s255] sm:$0xf]
      %v289 = vld [vmem:[%s262] sm:$0xf]
      %v292 = vunpack.c.l.b16 %v286
      %v293 = vunpack.c.l.b16 %v287
      %v294 = vpack.c.b16 %v293, %v292
      %vm295 = vcmask 64512
      %v297 = vsel %vm295, %v294, 0
      %v300 = vsel %vm295, %v288, 0
      %302 = vmatprep.subr.bf16.mxu0 0
      %303 = vmatpush1.bf16.xpose.msra.mxu0 %v300
      %304 = vmatprep.subr.bf16.mxu0 0
      %305 = vmatpush1.bf16.xpose.msra.mxu0 0
      %306 = vmatprep.subr.bf16.mxu0 0
      %307 = vmatpush1.bf16.xpose.msra.mxu0 0
      %308 = vmatprep.subr.bf16.mxu0 0
      %309 = vmatpush1.bf16.xpose.msra.mxu0 0
      %310 = vmatprep.subr.bf16.mxu0 0
      %311 = vmatpush1.bf16.xpose.msra.mxu0 0
      %312 = vmatprep.subr.bf16.mxu0 0
      %313 = vmatpush1.bf16.xpose.msra.mxu0 0
      %314 = vmatprep.subr.bf16.mxu0 0
      %315 = vmatpush1.bf16.xpose.msra.mxu0 0
      %316 = vmatprep.subr.bf16.mxu0 0
      %317 = vmatpush1.bf16.xpose.msra.mxu0 0
      %318 = vmatprep.subr.bf16.mxu0 0
      %319 = vmatpush1.bf16.xpose.msra.mxu0 0
      %320 = vmatprep.subr.bf16.mxu0 0
      %321 = vmatpush1.bf16.xpose.msra.mxu0 0
      %322 = vmatprep.subr.bf16.mxu0 0
      %323 = vmatpush1.bf16.xpose.msra.mxu0 0
      %324 = vmatprep.subr.bf16.mxu0 0
      %325 = vmatpush1.bf16.xpose.msra.mxu0 0
      %326 = vmatprep.subr.bf16.mxu0 0
      %327 = vmatpush1.bf16.xpose.msra.mxu0 0
      %328 = vmatprep.subr.bf16.mxu0 0
      %329 = vmatpush1.bf16.xpose.msra.mxu0 0
      %330 = vmatprep.subr.bf16.mxu0 0
      %331 = vmatpush1.bf16.xpose.msra.mxu0 0
      %332 = vmatprep.subr.bf16.mxu0 0
      %333 = vmatpush1.bf16.xpose.msra.mxu0 0
      %334 = vmatprep.mubr.bf16.mxu0 0
      %335 = vmatmul.mubr.bf16.gmra.mrb[0].mxu0 %v297
      %v336 = vpop.f32.mrb[0].mxu0
      %v337 = vadd.f32 0.0, %v336
      %v338 = vpop.f32.mrb[0].mxu0
      %v339 = vpop.f32.mrb[0].mxu0
      %v340 = vadd.f32 0.0, %v339
      %v341 = vpop.f32.mrb[0].mxu0
      %342 = vdwg.mxu0
      %v343 = vmul.f32 %v337, 0.35355338
      %v344 = vmul.f32 %v340, 0.35355338
      %v345 = vld [vmem:[#allocation2] sm:$0xff]
      %v346 = vld [vmem:[#allocation2 + $0x8] sm:$0xff]
      %v347 = vsel %vm295, %v343, -inf
      %348 = vmax.xlane.f32.xlu0 %v347
      %v349 = vpop.xlane.xlu0 %348
      %v350 = vsel %vm295, %v344, -inf
      %351 = vmax.xlane.f32.xlu0 %v350
      %v352 = vpop.xlane.xlu0 %351
      %v353 = vmax.f32 %v345, %v349
      %v354 = vmax.f32 %v346, %v352
      %v355 = vsub.f32 %v345, %v353
      %v356 = vsub.f32 %v346, %v354
      %v357 = vmul.f32 %v355, 1.442695
      %v358 = vpow.pop %v357
      %v359 = vmul.f32 %v356, 1.442695
      %v360 = vpow.pop %v359
      %362 = vset.pattern.permute.xlu0 0
      %363 = vperm.xlu0 %362, %v353
      %v364 = vpop.permute.xlu0 %363
      %367 = vset.pattern.permute.xlu0 0
      %368 = vperm.xlu0 %367, %v354
      %v369 = vpop.permute.xlu0 %368
      %v371 = vsub.f32 %v343, %v364
      %v372 = vsub.f32 %v344, %v369
      %v373 = vmul.f32 %v371, 1.442695
      %v374 = vpow.pop %v373
      %v375 = vmul.f32 %v372, 1.442695
      %v376 = vpow.pop %v375
      %v377 = vld [vmem:[#allocation3] sm:$0xff]
      %v378 = vld [vmem:[#allocation3 + $0x8] sm:$0xff]
      %v379 = vmul.f32 %v358, %v377
      %v380 = vmul.f32 %v360, %v378
      %v381 = vsel %vm295, %v374, 0.0
      %382 = vadd.xlane.f32.xlu0 %v381
      %v383 = vpop.xlane.xlu0 %382
      %v384 = vsel %vm295, %v376, 0.0
      %385 = vadd.xlane.f32.xlu0 %v384
      %v386 = vpop.xlane.xlu0 %385
      %v387 = vadd.f32 %v379, %v383
      %v388 = vadd.f32 %v380, %v386
      %vm389 = vcmask 7168
      %390 = vst.msk [vmem:[#allocation3] sm:$0xff] %vm389, %v387
      %391 = vst.msk [vmem:[#allocation3 + $0x8] sm:$0xff] %vm389, %v388
      %v392 = vld [vmem:[#allocation4] sm:$0xff]
      %v393 = vld [vmem:[#allocation4 + $0x8] sm:$0xff]
      %395 = vset.pattern.permute.xlu0 0
      %396 = vperm.xlu0 %395, %v358
      %v397 = vpop.permute.xlu0 %396
      %400 = vset.pattern.permute.xlu0 0
      %401 = vperm.xlu0 %400, %v360
      %v402 = vpop.permute.xlu0 %401
      %v404 = vmul.f32 %v397, %v392
      %v405 = vmul.f32 %v402, %v393
      %v406 = vpack.c.bf16 %v376, %v374
      %v408 = vsel %vm295, %v406, 0
      %vm410 = vcmask 1043456
      %v412 = vsel %vm410, %v289, 0
      %414 = vmatprep.subr.bf16.mxu0 0
      %415 = vmatpush1.bf16.msra.mxu0 %v412
      %416 = vmatprep.subr.bf16.mxu0 0
      %417 = vmatpush1.bf16.msra.mxu0 0
      %418 = vmatprep.subr.bf16.mxu0 0
      %419 = vmatpush1.bf16.msra.mxu0 0
      %420 = vmatprep.subr.bf16.mxu0 0
      %421 = vmatpush1.bf16.msra.mxu0 0
      %422 = vmatprep.subr.bf16.mxu0 0
      %423 = vmatpush1.bf16.msra.mxu0 0
      %424 = vmatprep.subr.bf16.mxu0 0
      %425 = vmatpush1.bf16.msra.mxu0 0
      %426 = vmatprep.subr.bf16.mxu0 0
      %427 = vmatpush1.bf16.msra.mxu0 0
      %428 = vmatprep.subr.bf16.mxu0 0
      %429 = vmatpush1.bf16.msra.mxu0 0
      %430 = vmatprep.subr.bf16.mxu0 0
      %431 = vmatpush1.bf16.msra.mxu0 0
      %432 = vmatprep.subr.bf16.mxu0 0
      %433 = vmatpush1.bf16.msra.mxu0 0
      %434 = vmatprep.subr.bf16.mxu0 0
      %435 = vmatpush1.bf16.msra.mxu0 0
      %436 = vmatprep.subr.bf16.mxu0 0
      %437 = vmatpush1.bf16.msra.mxu0 0
      %438 = vmatprep.subr.bf16.mxu0 0
      %439 = vmatpush1.bf16.msra.mxu0 0
      %440 = vmatprep.subr.bf16.mxu0 0
      %441 = vmatpush1.bf16.msra.mxu0 0
      %442 = vmatprep.subr.bf16.mxu0 0
      %443 = vmatpush1.bf16.msra.mxu0 0
      %444 = vmatprep.subr.bf16.mxu0 0
      %445 = vmatpush1.bf16.msra.mxu0 0
      %446 = vmatprep.mubr.bf16.mxu0 0
      %447 = vmatmul.mubr.bf16.gmra.mrb[0].mxu0 %v408
      %v448 = vpop.f32.mrb[0].mxu0
      %v449 = vadd.f32 0.0, %v448
      %v450 = vpop.f32.mrb[0].mxu0
      %v451 = vpop.f32.mrb[0].mxu0
      %v452 = vadd.f32 0.0, %v451
      %v453 = vpop.f32.mrb[0].mxu0
      %454 = vdwg.mxu0
      %v455 = vadd.f32 %v404, %v449
      %v456 = vadd.f32 %v405, %v452
      %457 = vst.msk [vmem:[#allocation4] sm:$0xff] %vm295, %v455
      %458 = vst.msk [vmem:[#allocation4 + $0x8] sm:$0xff] %vm295, %v456
      %459 = vst.msk [vmem:[#allocation2] sm:$0xff] %vm389, %v353
      %460 = vst.msk [vmem:[#allocation2 + $0x8] sm:$0xff] %vm389, %v354
      // Predicated region
      $region37: #{paligemma_forward.22} parent=31 // pred_check
        %p461 = pneg %p274
      $region38: #{paligemma_forward.22} parent=31 // pred_check_branch
        %463 = sbr.rel (%p461) target = $region40
      $region39: #{paligemma_forward.22} parent=31 // pred_region
        %v464 = vld [vmem:[#allocation4] sm:$0xff]
        %v465 = vld [vmem:[#allocation4 + $0x8] sm:$0xff]
        %v466 = vld [vmem:[#allocation3] sm:$0xff]
        %v467 = vld [vmem:[#allocation3 + $0x8] sm:$0xff]
        %v468 = vrcp.pop %v466
        %v469 = vrcp.pop %v467
        %471 = vset.pattern.permute.xlu0 0
        %472 = vperm.xlu0 %471, %v468
        %v473 = vpop.permute.xlu0 %472
        %476 = vset.pattern.permute.xlu0 0
        %477 = vperm.xlu0 %476, %v469
        %v478 = vpop.permute.xlu0 %477
        %v480 = vmul.f32 %v464, %v473
        %v481 = vmul.f32 %v465, %v478
        %v482 = vpack.c.bf16 %v481, %v480
        %v484 = vunpack.c.l.b16 %v482
        %v485 = vunpack.c.h.b16 %v482
        %v486 = vpack.c.b16 %v484, %v484
        %v487 = vpack.c.b16 %v485, %v485
        %vm490 = vcmask 60416
        %491 = vst.msk [vmem:[%s271] sm:$0xf] %vm490, %v486
        %492 = vst.msk [vmem:[%s271 + $0x4] sm:$0xf] %vm490, %v487
      $region40: #{paligemma_forward.22} parent=31 // pred_fallthru
        _
      %s493 = smul.u32 2, %s20
      %p494 = scmp.lt.s32.totalorder %s19, 1
      %s495 = scalar_select %p494, %s19, 1
      %p496 = scmp.lt.s32.totalorder %s493, 1
      %s497 = scalar_select %p496, %s493, 1
      %s498 = smul.addr %s495, 2
      %s499 = sadd.s32 %s497, %s498
      %s500 = smul.addr %s499, 4
      %s501 = scalar_lea.vmem %s3, %s500
      // Predicated region
      $region41: #{paligemma_forward.22} parent=31 // pred_check
        %p502 = pneg %p137
      $region42: #{paligemma_forward.22} parent=31 // pred_check_branch
        %504 = sbr.rel (%p502) target = $region44
      $region43: #{paligemma_forward.22} parent=31 // pred_region
        %s505 = smul.u32 2, %s20
      $region44: #{paligemma_forward.22} parent=31 // pred_fallthru
        _
    $region32: #{paligemma_forward.22} parent=5 // pred_fallthru
      _
    %p506 = scmp.le.s32.totalorder 2, %s9
    // Predicated region
    $region45: #{paligemma_forward.22} parent=5 // pred_check
      %p507 = pneg %p506
    $region46: #{paligemma_forward.22} parent=5 // pred_check_branch
      %509 = sbr.rel (%p507) target = $region48
    $region47: #{paligemma_forward.22} parent=5 // pred_region
      %s510 = ssub.s32 %s9, 2
      // Predicated region
      $region49: #{paligemma_forward.22} parent=47 // pred_check
        %p511 = pneg %p143
      $region50: #{paligemma_forward.22} parent=47 // pred_check_branch
        %513 = sbr.rel (%p511) target = $region52
      $region51: #{paligemma_forward.22} parent=47 // pred_region
        %s514 = smul.u32 2, %s23
        %p515 = scmp.lt.s32.totalorder %s22, 1
        %s516 = scalar_select %p515, %s22, 1
        %p517 = scmp.lt.s32.totalorder %s514, 1
        %s518 = scalar_select %p517, %s514, 1
        %s519 = smul.addr %s516, 2
        %s520 = sadd.s32 %s518, %s519
        %s521 = smul.addr %s520, 4
        %s522 = scalar_lea.vmem %s3, %s521
      $region52: #{paligemma_forward.22} parent=47 // pred_fallthru
        _
    $region48: #{paligemma_forward.22} parent=5 // pred_fallthru
      _
  $region6: #{paligemma_forward.22} parent=0 // loop_footer
    %s13 = sadd.s32 1, %s9
  $region7: #{paligemma_forward.22} parent=0 // loop_footer_branch
    %8 = sbr.rel target = $region3
  $region8: #{paligemma_forward.22} parent=0 // loop_exit
    _

// kernel: paligemma_forward.24
$region0: #{paligemma_forward.24}
  #allocation0 [shape = 'u32[]', space=smem, size = 0x4, offset = 0x4, fixed_abs, tag = 'smem constant byte address 0x4 - core index']
  #allocation1 [shape = 'u32[144,128]{1,0:T(1,128)}', space=vmem, size = 0x12000, scoped, tag = 'internal scratch']
  #allocation2 [shape = 'f32[8,32]{1,0:T(8,128)}', space=vmem, size = 0x1000, scoped, tag = 'scratch operand']
  #allocation3 [shape = 'bf16[8,32]{1,0:T(8,128)(2,1)}', space=vmem, size = 0x800, scoped, tag = 'scratch operand']
  %s0 = inlined_call_operand.vmem [shape: bf16[8,32], index: 0, kind: input, shape index: {}]
  %s1 = inlined_call_operand.vmem [shape: bf16[1,32], index: 1, kind: input, shape index: {}]
  %s2 = inlined_call_operand.vmem [shape: bf16[32,64], index: 2, kind: input, shape index: {}]
  %s3 = inlined_call_operand.vmem [shape: bf16[1,64], index: 3, kind: input, shape index: {}]
  %s4 = inlined_call_operand.vmem [shape: bf16[32,64], index: 4, kind: input, shape index: {}]
  %s5 = inlined_call_operand.vmem [shape: bf16[1,64], index: 5, kind: input, shape index: {}]
  %s6 = inlined_call_operand.vmem [shape: bf16[64,32], index: 6, kind: input, shape index: {}]
  %s7 = inlined_call_operand.vmem [shape: bf16[1,32], index: 7, kind: input, shape index: {}]
  %s8 = inlined_call_operand.vmem [shape: bf16[8,32], index: 8, kind: output, shape index: {}]
  %s9 = sld [smem:[#allocation0]]
  $region50: #{paligemma_forward.24} parent=0
    _
  %s11 = ssub.s32 1, %s9
  %s12 = scalar_select 0, %s11, %s9
  // Predicated region
  $region2: #{paligemma_forward.24} parent=0 // pred_check
    _
  $region3: #{paligemma_forward.24} parent=0 // pred_check_branch
    %14 = sbr.rel (0) target = $region5
  $region4: #{paligemma_forward.24} parent=0 // pred_region
    _
  $region5: #{paligemma_forward.24} parent=0 // pred_fallthru
    _
  // Predicated region
  $region6: #{paligemma_forward.24} parent=0 // pred_check
    _
  $region7: #{paligemma_forward.24} parent=0 // pred_check_branch
    %16 = sbr.rel (0) target = $region9
  $region8: #{paligemma_forward.24} parent=0 // pred_region
    _
  $region9: #{paligemma_forward.24} parent=0 // pred_fallthru
    _
  // Predicated region
  $region10: #{paligemma_forward.24} parent=0 // pred_check
    _
  $region11: #{paligemma_forward.24} parent=0 // pred_check_branch
    %18 = sbr.rel (0) target = $region13
  $region12: #{paligemma_forward.24} parent=0 // pred_region
    _
  $region13: #{paligemma_forward.24} parent=0 // pred_fallthru
    _
  // Predicated region
  $region14: #{paligemma_forward.24} parent=0 // pred_check
    _
  $region15: #{paligemma_forward.24} parent=0 // pred_check_branch
    %20 = sbr.rel (0) target = $region17
  $region16: #{paligemma_forward.24} parent=0 // pred_region
    _
  $region17: #{paligemma_forward.24} parent=0 // pred_fallthru
    _
  // Predicated region
  $region18: #{paligemma_forward.24} parent=0 // pred_check
    _
  $region19: #{paligemma_forward.24} parent=0 // pred_check_branch
    %22 = sbr.rel (0) target = $region21
  $region20: #{paligemma_forward.24} parent=0 // pred_region
    _
  $region21: #{paligemma_forward.24} parent=0 // pred_fallthru
    _
  // Predicated region
  $region22: #{paligemma_forward.24} parent=0 // pred_check
    _
  $region23: #{paligemma_forward.24} parent=0 // pred_check_branch
    %24 = sbr.rel (0) target = $region25
  $region24: #{paligemma_forward.24} parent=0 // pred_region
    _
  $region25: #{paligemma_forward.24} parent=0 // pred_fallthru
    _
  // Predicated region
  $region26: #{paligemma_forward.24} parent=0 // pred_check
    _
  $region27: #{paligemma_forward.24} parent=0 // pred_check_branch
    %26 = sbr.rel (0) target = $region29
  $region28: #{paligemma_forward.24} parent=0 // pred_region
    _
  $region29: #{paligemma_forward.24} parent=0 // pred_fallthru
    _
  // Predicated region
  $region30: #{paligemma_forward.24} parent=0 // pred_check
    _
  $region31: #{paligemma_forward.24} parent=0 // pred_check_branch
    %28 = sbr.rel (0) target = $region33
  $region32: #{paligemma_forward.24} parent=0 // pred_region
    _
  $region33: #{paligemma_forward.24} parent=0 // pred_fallthru
    _
  %p30 = scmp.eq.s32.totalorder 0, 0
  // Predicated region
  $region34: #{paligemma_forward.24} parent=0 // pred_check
    %p31 = pneg %p30
  $region35: #{paligemma_forward.24} parent=0 // pred_check_branch
    %33 = sbr.rel (%p31) target = $region37
  $region36: #{paligemma_forward.24} parent=0 // pred_region
    %vm34 = vcmask 261120
    %35 = vst.msk [vmem:[#allocation2] sm:$0xff] %vm34, 0.0
    %v36 = vld [vmem:[%s0] sm:$0xf]
    %v37 = vunpack.c.l.bf16 %v36
    %v38 = vmul.f32 %v37, %v37
    %v39 = vsel %vm34, %v38, 0.0
    %40 = vadd.xlane.f32.xlu0 %v39
    %v41 = vpop.xlane.xlu0 %40
    %v42 = vrcp.pop 32.0
    %v43 = vmul.f32 %v41, %v42
    %v44 = vadd.f32 %v43, 1e-06
    %v45 = vrsqrt.pop %v44
    %v46 = vmul.f32 %v37, %v45
    %v47 = vld [vmem:[%s1] sm:$0x1]
    %v48 = vunpack.c.l.bf16 %v47
    %v49 = vadd.f32 %v48, 1.0
    %v50 = vlaneseq
    %v51 = vshrl.u32 %v50, 7
    %v52 = vsub.s32 0, %v51
    %v53 = vrot.slane %v49, %v52
    %v54 = vmul.f32 %v46, %v53
    %v55 = vpack.c.bf16 %v54, %v54
    %vm56 = vcmask 257024
    %57 = vst.msk [vmem:[#allocation3] sm:$0xf] %vm56, %v55
  $region37: #{paligemma_forward.24} parent=0 // pred_fallthru
    _
  %v58 = vld [vmem:[#allocation3] sm:$0xf]
  %v59 = vld [vmem:[%s2] sm:$0xf]
  %v60 = vld [vmem:[%s2 + $0x4] sm:$0xf]
  %v61 = vld [vmem:[%s2 + $0x8] sm:$0xf]
  %v62 = vld [vmem:[%s2 + $0xc] sm:$0xf]
  %v63 = vld [vmem:[%s3] sm:$0x1]
  %v64 = vunpack.c.l.bf16 %v63
  %v65 = vlaneseq
  %v66 = vshrl.u32 %v65, 7
  %v67 = vsub.s32 0, %v66
  %v68 = vrot.slane %v64, %v67
  %v73 = vunpack.c.l.b16 %v59
  %v74 = vunpack.c.l.b16 %v60
  %v75 = vunpack.c.l.b16 %v61
  %v76 = vunpack.c.l.b16 %v62
  %v77 = vpack.c.b16 %v74, %v73
  %v78 = vpack.c.b16 %v76, %v75
  %vm81 = vcmask 261120
  %v83 = vsel %vm81, %v58, 0
  %85 = vmatprep.subr.bf16.mxu0 0
  %86 = vmatpush1.bf16.msra.mxu0 %v77
  %87 = vmatprep.subr.bf16.mxu0 0
  %88 = vmatpush1.bf16.msra.mxu0 %v78
  %89 = vmatprep.subr.bf16.mxu0 0
  %90 = vmatpush1.bf16.msra.mxu0 0
  %91 = vmatprep.subr.bf16.mxu0 0
  %92 = vmatpush1.bf16.msra.mxu0 0
  %93 = vmatprep.subr.bf16.mxu0 0
  %94 = vmatpush1.bf16.msra.mxu0 0
  %95 = vmatprep.subr.bf16.mxu0 0
  %96 = vmatpush1.bf16.msra.mxu0 0
  %97 = vmatprep.subr.bf16.mxu0 0
  %98 = vmatpush1.bf16.msra.mxu0 0
  %99 = vmatprep.subr.bf16.mxu0 0
  %100 = vmatpush1.bf16.msra.mxu0 0
  %101 = vmatprep.subr.bf16.mxu0 0
  %102 = vmatpush1.bf16.msra.mxu0 0
  %103 = vmatprep.subr.bf16.mxu0 0
  %104 = vmatpush1.bf16.msra.mxu0 0
  %105 = vmatprep.subr.bf16.mxu0 0
  %106 = vmatpush1.bf16.msra.mxu0 0
  %107 = vmatprep.subr.bf16.mxu0 0
  %108 = vmatpush1.bf16.msra.mxu0 0
  %109 = vmatprep.subr.bf16.mxu0 0
  %110 = vmatpush1.bf16.msra.mxu0 0
  %111 = vmatprep.subr.bf16.mxu0 0
  %112 = vmatpush1.bf16.msra.mxu0 0
  %113 = vmatprep.subr.bf16.mxu0 0
  %114 = vmatpush1.bf16.msra.mxu0 0
  %115 = vmatprep.subr.bf16.mxu0 0
  %116 = vmatpush1.bf16.msra.mxu0 0
  %117 = vmatprep.mubr.bf16.mxu0 0
  %118 = vmatmul.mubr.bf16.gmra.mrb[0].mxu0 %v83
  %v119 = vpop.f32.mrb[0].mxu0
  %v120 = vadd.f32 %v68, %v119
  %v121 = vpop.f32.mrb[0].mxu0
  %v122 = vpop.f32.mrb[0].mxu0
  %v123 = vpop.f32.mrb[0].mxu0
  %124 = vdwg.mxu0
  %v125 = vld [vmem:[%s4] sm:$0xf]
  %v126 = vld [vmem:[%s4 + $0x4] sm:$0xf]
  %v127 = vld [vmem:[%s4 + $0x8] sm:$0xf]
  %v128 = vld [vmem:[%s4 + $0xc] sm:$0xf]
  %v129 = vld [vmem:[%s5] sm:$0x1]
  %v130 = vunpack.c.l.bf16 %v129
  %v131 = vlaneseq
  %v132 = vshrl.u32 %v131, 7
  %v133 = vsub.s32 0, %v132
  %v134 = vrot.slane %v130, %v133
  %v139 = vunpack.c.l.b16 %v125
  %v140 = vunpack.c.l.b16 %v126
  %v141 = vunpack.c.l.b16 %v127
  %v142 = vunpack.c.l.b16 %v128
  %v143 = vpack.c.b16 %v140, %v139
  %v144 = vpack.c.b16 %v142, %v141
  %147 = vmatprep.subr.bf16.mxu0 0
  %148 = vmatpush1.bf16.msra.mxu0 %v143
  %149 = vmatprep.subr.bf16.mxu0 0
  %150 = vmatpush1.bf16.msra.mxu0 %v144
  %151 = vmatprep.subr.bf16.mxu0 0
  %152 = vmatpush1.bf16.msra.mxu0 0
  %153 = vmatprep.subr.bf16.mxu0 0
  %154 = vmatpush1.bf16.msra.mxu0 0
  %155 = vmatprep.subr.bf16.mxu0 0
  %156 = vmatpush1.bf16.msra.mxu0 0
  %157 = vmatprep.subr.bf16.mxu0 0
  %158 = vmatpush1.bf16.msra.mxu0 0
  %159 = vmatprep.subr.bf16.mxu0 0
  %160 = vmatpush1.bf16.msra.mxu0 0
  %161 = vmatprep.subr.bf16.mxu0 0
  %162 = vmatpush1.bf16.msra.mxu0 0
  %163 = vmatprep.subr.bf16.mxu0 0
  %164 = vmatpush1.bf16.msra.mxu0 0
  %165 = vmatprep.subr.bf16.mxu0 0
  %166 = vmatpush1.bf16.msra.mxu0 0
  %167 = vmatprep.subr.bf16.mxu0 0
  %168 = vmatpush1.bf16.msra.mxu0 0
  %169 = vmatprep.subr.bf16.mxu0 0
  %170 = vmatpush1.bf16.msra.mxu0 0
  %171 = vmatprep.subr.bf16.mxu0 0
  %172 = vmatpush1.bf16.msra.mxu0 0
  %173 = vmatprep.subr.bf16.mxu0 0
  %174 = vmatpush1.bf16.msra.mxu0 0
  %175 = vmatprep.subr.bf16.mxu0 0
  %176 = vmatpush1.bf16.msra.mxu0 0
  %177 = vmatprep.subr.bf16.mxu0 0
  %178 = vmatpush1.bf16.msra.mxu0 0
  %179 = vmatprep.mubr.bf16.mxu0 0
  %180 = vmatmul.mubr.bf16.gmra.mrb[0].mxu0 %v83
  %v181 = vpop.f32.mrb[0].mxu0
  %v182 = vadd.f32 %v134, %v181
  %v183 = vpop.f32.mrb[0].mxu0
  %v184 = vpop.f32.mrb[0].mxu0
  %v185 = vpop.f32.mrb[0].mxu0
  %186 = vdwg.mxu0
  %v187 = vmul.f32 %v120, %v120
  %v188 = vmul.f32 %v120, %v187
  %v189 = vmul.f32 %v188, 0.044715
  %v190 = vadd.f32 %v120, %v189
  %v191 = vmul.f32 %v190, 0.7978846
  %v192 = vtanh.pop %v191
  %v193 = vadd.f32 %v192, 1.0
  %v194 = vmul.f32 %v193, 0.5
  %v195 = vmul.f32 %v120, %v194
  %v196 = vmul.f32 %v195, %v182
  %v197 = vld [vmem:[#allocation2] sm:$0xff]
  %v198 = vpack.c.bf16 %v196, %v196
  %v199 = vld [vmem:[%s6] sm:$0xf]
  %v200 = vld [vmem:[%s6 + $0x4] sm:$0xf]
  %v201 = vld [vmem:[%s6 + $0x8] sm:$0xf]
  %v202 = vld [vmem:[%s6 + $0xc] sm:$0xf]
  %v203 = vld [vmem:[%s6 + $0x10] sm:$0xf]
  %v204 = vld [vmem:[%s6 + $0x14] sm:$0xf]
  %v205 = vld [vmem:[%s6 + $0x18] sm:$0xf]
  %v206 = vld [vmem:[%s6 + $0x1c] sm:$0xf]
  %v215 = vunpack.c.l.b16 %v199
  %v216 = vunpack.c.l.b16 %v200
  %v217 = vunpack.c.l.b16 %v201
  %v218 = vunpack.c.l.b16 %v202
  %v219 = vunpack.c.l.b16 %v203
  %v220 = vunpack.c.l.b16 %v204
  %v221 = vunpack.c.l.b16 %v205
  %v222 = vunpack.c.l.b16 %v206
  %v223 = vpack.c.b16 %v216, %v215
  %v224 = vpack.c.b16 %v218, %v217
  %v225 = vpack.c.b16 %v220, %v219
  %v226 = vpack.c.b16 %v222, %v221
  %vm231 = vcmask 523264
  %v233 = vsel %vm231, %v198, 0
  %235 = vmatprep.subr.bf16.mxu0 0
  %236 = vmatpush1.bf16.msra.mxu0 %v223
  %237 = vmatprep.subr.bf16.mxu0 0
  %238 = vmatpush1.bf16.msra.mxu0 %v224
  %239 = vmatprep.subr.bf16.mxu0 0
  %240 = vmatpush1.bf16.msra.mxu0 %v225
  %241 = vmatprep.subr.bf16.mxu0 0
  %242 = vmatpush1.bf16.msra.mxu0 %v226
  %243 = vmatprep.subr.bf16.mxu0 0
  %244 = vmatpush1.bf16.msra.mxu0 0
  %245 = vmatprep.subr.bf16.mxu0 0
  %246 = vmatpush1.bf16.msra.mxu0 0
  %247 = vmatprep.subr.bf16.mxu0 0
  %248 = vmatpush1.bf16.msra.mxu0 0
  %249 = vmatprep.subr.bf16.mxu0 0
  %250 = vmatpush1.bf16.msra.mxu0 0
  %251 = vmatprep.subr.bf16.mxu0 0
  %252 = vmatpush1.bf16.msra.mxu0 0
  %253 = vmatprep.subr.bf16.mxu0 0
  %254 = vmatpush1.bf16.msra.mxu0 0
  %255 = vmatprep.subr.bf16.mxu0 0
  %256 = vmatpush1.bf16.msra.mxu0 0
  %257 = vmatprep.subr.bf16.mxu0 0
  %258 = vmatpush1.bf16.msra.mxu0 0
  %259 = vmatprep.subr.bf16.mxu0 0
  %260 = vmatpush1.bf16.msra.mxu0 0
  %261 = vmatprep.subr.bf16.mxu0 0
  %262 = vmatpush1.bf16.msra.mxu0 0
  %263 = vmatprep.subr.bf16.mxu0 0
  %264 = vmatpush1.bf16.msra.mxu0 0
  %265 = vmatprep.subr.bf16.mxu0 0
  %266 = vmatpush1.bf16.msra.mxu0 0
  %267 = vmatprep.mubr.bf16.mxu0 0
  %268 = vmatmul.mubr.bf16.gmra.mrb[0].mxu0 %v233
  %v269 = vpop.f32.mrb[0].mxu0
  %v270 = vadd.f32 0.0, %v269
  %v271 = vpop.f32.mrb[0].mxu0
  %v272 = vpop.f32.mrb[0].mxu0
  %v273 = vpop.f32.mrb[0].mxu0
  %274 = vdwg.mxu0
  %v275 = vadd.f32 %v197, %v270
  %276 = vst.msk [vmem:[#allocation2] sm:$0xff] %vm81, %v275
  // Predicated region
  $region38: #{paligemma_forward.24} parent=0 // pred_check
    %p277 = pneg %p30
  $region39: #{paligemma_forward.24} parent=0 // pred_check_branch
    %279 = sbr.rel (%p277) target = $region41
  $region40: #{paligemma_forward.24} parent=0 // pred_region
    %v280 = vld [vmem:[#allocation2] sm:$0xff]
    %v281 = vld [vmem:[%s7] sm:$0x1]
    %v282 = vunpack.c.l.bf16 %v281
    %v283 = vlaneseq
    %v284 = vshrl.u32 %v283, 7
    %v285 = vsub.s32 0, %v284
    %v286 = vrot.slane %v282, %v285
    %v287 = vadd.f32 %v280, %v286
    %v288 = vld [vmem:[%s0] sm:$0xf]
    %v289 = vunpack.c.l.bf16 %v288
    %v290 = vadd.f32 %v287, %v289
    %v291 = vpack.c.bf16 %v290, %v290
    %vm292 = vcmask 257024
    %293 = vst.msk [vmem:[%s8] sm:$0xf] %vm292, %v291
  $region41: #{paligemma_forward.24} parent=0 // pred_fallthru
    _
  // Predicated region
  $region42: #{paligemma_forward.24} parent=0 // pred_check
    _
  $region43: #{paligemma_forward.24} parent=0 // pred_check_branch
    %295 = sbr.rel (0) target = $region45
  $region44: #{paligemma_forward.24} parent=0 // pred_region
    _
  $region45: #{paligemma_forward.24} parent=0 // pred_fallthru
    _
  // Predicated region
  $region46: #{paligemma_forward.24} parent=0 // pred_check
    _
  $region47: #{paligemma_forward.24} parent=0 // pred_check_branch
    %297 = sbr.rel (0) target = $region49
  $region48: #{paligemma_forward.24} parent=0 // pred_region
    _
  $region49: #{paligemma_forward.24} parent=0 // pred_fallthru
    _

</llo_original>
